<compile_context>
chip_gen: v5e
topology: v5e:2x2
jax: 0.10.0
libtpu: 0.0.40
codegen_flags: <defaults>
</compile_context>

<pallas_src>
import functools

import jax
import jax.numpy as jnp
from jax.experimental import pallas as pl
from jax.experimental.pallas import tpu as pltpu


def decoder_kernel(
    att1_ref, feat_ref, emb_ref, h0_ref, c0_ref,
    w_dec_ref, w_full_ref, w_ih_e_ref, w_ih_a_ref, w_hh_ref, b_gates_ref,
    hs_ref, alphas_ref,
    h_ref, c_ref,
    *, n_valid, approx_recip,
):
    t = pl.program_id(1)
    f32 = jnp.float32

    # Recurrent state lives in VMEM scratch; (re)initialise at the first
    # timestep of every batch tile from the precomputed h0/c0.
    @pl.when(t == 0)
    def _init():
        h_ref[...] = h0_ref[...]
        c_ref[...] = c0_ref[...]

    h = h_ref[...]                                   # (Bt, D)  f32
    c = c_ref[...]                                   # (Bt, D)  f32
    w_dec = w_dec_ref[...]
    cdt = w_dec.dtype                                # matmul / elementwise dtype
    D = h.shape[-1]

    # ---------------- Attention (encoder projection att1 is precomputed) ------
    att2 = jnp.dot(h.astype(cdt), w_dec, preferred_element_type=f32)   # (Bt, A)
    # Elementwise attention path stays in the compute dtype: bf16 halves the
    # dominant EUP tanh / VPU multiply on v6e/v7x (pass compute_dtype=f32 on
    # v5e).  Softmax max/sum/exp and alpha are f32.
    comb = jnp.tanh(att1_ref[...] + att2.astype(cdt)[:, None, :])      # (Bt, Np, A)
    scores = jnp.sum(comb * w_full_ref[...], axis=-1, dtype=f32)       # (Bt, Np)
    if n_valid < scores.shape[-1]:
        lane = jax.lax.broadcasted_iota(jnp.int32, scores.shape, 1)
        scores = jnp.where(lane < n_valid, scores, jnp.float32(-jnp.inf))
    scores = scores - jnp.max(scores, axis=-1, keepdims=True)
    e = jnp.exp(scores)
    denom = jnp.sum(e, axis=-1, keepdims=True)
    alpha = e * pl.reciprocal(denom, approx=approx_recip)              # (Bt, Np) f32
    # Context reduction kept on VPU/XLU (MXU output width would be 1).
    weighted = jnp.sum(feat_ref[...] * alpha.astype(cdt)[:, :, None],
                       axis=1, dtype=f32)                              # (Bt, E)

    # ---------------- LSTM cell: K-split gate matmuls (no lane-dim concat) ----
    gates = b_gates_ref[...]                                           # (1, 4D) f32
    gates = gates + jnp.dot(emb_ref[0], w_ih_e_ref[...],
                            preferred_element_type=f32)
    gates = gates + jnp.dot(weighted.astype(cdt), w_ih_a_ref[...],
                            preferred_element_type=f32)
    gates = gates + jnp.dot(h.astype(cdt), w_hh_ref[...],
                            preferred_element_type=f32)                # (Bt, 4D)
    i_g = jax.nn.sigmoid(gates[:, 0:D])
    f_g = jax.nn.sigmoid(gates[:, D:2 * D])
    g_g = jnp.tanh(gates[:, 2 * D:3 * D])
    o_g = jax.nn.sigmoid(gates[:, 3 * D:4 * D])
    c_new = f_g * c + i_g * g_g
    h_new = o_g * jnp.tanh(c_new)
    h_ref[...] = h_new
    c_ref[...] = c_new

    # Only h_t and alpha_t leave the recurrence; the vocab projection is
    # batched over T*B outside.
    # TODO(synk): training-mode dropout on h would use pltpu.prng_seed /
    # pltpu.prng_random_bits here (eval mode => identity).
    hs_ref[0] = h_new.astype(hs_ref.dtype)
    alphas_ref[0] = alpha


def _vmem_capacity_bytes():
    try:
        info = pltpu.get_tpu_info()
        cap = int(getattr(info, "vmem_capacity_bytes", 0))
        if cap > 0:
            return cap
    except Exception:
        pass
    return 64 * 1024 * 1024      # conservative default: v7x per-TensorCore VMEM


def decoder_forward(params, features, captions, *, compute_dtype=jnp.bfloat16,
                    batch_tile=None):
    f32 = jnp.float32
    B, N, E = features.shape
    T = captions.shape[1] - 1                        # cap_len
    emb_table = params['embedding']
    embed_sz = emb_table.shape[1]
    D = params['w_hh'].shape[0]
    A = params['w_enc'].shape[1]
    V = params['w_fcn'].shape[1]

    feats = features.astype(f32)

    # ---- loop-invariant precompute (hoisted out of the recurrence, plain XLA) -
    att1 = (jnp.einsum('bne,ea->bna', feats, params['w_enc'].astype(f32))
            + params['b_enc'].astype(f32)
            + params['b_dec'].astype(f32))                   # (B, N, A)
    mean_f = feats.mean(axis=1)                              # (B, E)
    h0 = mean_f @ params['w_init_h'].astype(f32) + params['b_init_h'].astype(f32)
    c0 = mean_f @ params['w_init_c'].astype(f32) + params['b_init_c'].astype(f32)
    embeds = jnp.transpose(emb_table[captions[:, :T]], (1, 0, 2)).astype(f32)  # (T,B,emb)
    b_gates = (params['b_ih'] + params['b_hh']).astype(f32)            # (1, 4D)
    # b_full is dropped entirely: softmax(scores + c) == softmax(scores).

    c_sz = jnp.dtype(compute_dtype).itemsize
    row_align = 8 if c_sz >= 4 else 16               # sublane fill (packed for bf16)

    # ---- pad batch to full (packed) sublanes and N to full lanes --------------
    B_pad = ((B + row_align - 1) // row_align) * row_align
    N_pad = ((N + 127) // 128) * 128
    pad_b, pad_n = B_pad - B, N_pad - N
    if pad_b or pad_n:
        att1 = jnp.pad(att1, ((0, pad_b), (0, pad_n), (0, 0)))
        feats = jnp.pad(feats, ((0, pad_b), (0, pad_n), (0, 0)))
    if pad_b:
        embeds = jnp.pad(embeds, ((0, 0), (0, pad_b), (0, 0)))
        h0 = jnp.pad(h0, ((0, pad_b), (0, 0)))
        c0 = jnp.pad(c0, ((0, pad_b), (0, 0)))

    # matmul / big-activation operand dtype (f32 accumulation everywhere).
    att1_c = att1.astype(compute_dtype)
    feats_c = feats.astype(compute_dtype)
    embeds_c = embeds.astype(compute_dtype)
    w_dec = params['w_dec'].astype(compute_dtype)
    w_full = params['w_full'].astype(compute_dtype)          # (1, A)
    w_ih_e = params['w_ih_e'].astype(compute_dtype)
    w_ih_a = params['w_ih_a'].astype(compute_dtype)
    w_hh = params['w_hh'].astype(compute_dtype)

    single_buffer = hasattr(pl, "Buffered")

    # ---- VMEM-budget-aware batch tile ----------------------------------------
    vmem_cap = _vmem_capacity_bytes()
    vmem_budget = int(0.80 * vmem_cap)
    if batch_tile is None:
        big_bufs = 1 if single_buffer else 2
        per_row = (
            big_bufs * (N_pad * A + N_pad * E) * c_sz        # att1 + feats blocks
            + N_pad * A * c_sz                               # `comb` working set
            + 2 * embed_sz * c_sz                            # embeds (double-buffered)
            + 4 * D * 4                                      # h0 / c0
            + 2 * (D * c_sz + N_pad * 4)                     # hs / alpha out blocks
            + 2 * D * 4                                      # h / c scratch
            + 4 * N_pad * 4 + 8 * D * 4                      # softmax / gate temporaries
        )
        weight_bufs = 1 if single_buffer else 2
        fixed = (weight_bufs * c_sz * (D * A + A + (embed_sz + E + D) * 4 * D)
                 + 2 * 4 * (4 * D))
        cands = sorted({bt for bt in range(row_align, B_pad + 1, row_align)
                        if B_pad % bt == 0}, reverse=True)

        def _fits(bt):
            return fixed + bt * per_row <= vmem_budget

        # Prefer >= 2 batch tiles: the 'parallel' batch axis feeds the second
        # TensorCore on v7x.
        multi = [bt for bt in cands if B_pad // bt >= 2 and _fits(bt)]
        fitting = [bt for bt in cands if _fits(bt)]
        batch_tile = (multi or fitting or [cands[-1]])[0]
    assert B_pad % batch_tile == 0 and (batch_tile % row_align == 0
                                        or batch_tile == B_pad)
    nb = B_pad // batch_tile

    kern = functools.partial(
        decoder_kernel, n_valid=N,
        approx_recip=(jnp.dtype(compute_dtype) != jnp.dtype(jnp.float32)))

    def _call(use_single_buffer):
        def tile_spec(shape, index_map):
            # Blocks whose index changes at most once per batch tile: single
            # buffer (halves VMEM on the two big attention blocks; the lost
            # prefetch is one stall amortised over T timesteps).
            if use_single_buffer:
                return pl.BlockSpec(shape, index_map, pipeline_mode=pl.Buffered(1))
            return pl.BlockSpec(shape, index_map)

        def wspec(shape):
            zeros = (0,) * len(shape)
            return tile_spec(shape, lambda b, t, z=zeros: z)

        in_specs = [
            tile_spec((batch_tile, N_pad, A), lambda b, t: (b, 0, 0)),        # att1
            tile_spec((batch_tile, N_pad, E), lambda b, t: (b, 0, 0)),        # feats
            pl.BlockSpec((1, batch_tile, embed_sz), lambda b, t: (t, b, 0)),  # embeds[t]
            pl.BlockSpec((batch_tile, D), lambda b, t: (b, 0)),               # h0
            pl.BlockSpec((batch_tile, D), lambda b, t: (b, 0)),               # c0
            wspec((D, A)),                                                    # w_dec
            wspec((1, A)),                                                    # w_full
            wspec((embed_sz, 4 * D)),                                         # w_ih_e
            wspec((E, 4 * D)),                                                # w_ih_a
            wspec((D, 4 * D)),                                                # w_hh
            wspec((1, 4 * D)),                                                # b_gates
        ]
        out_specs = [
            pl.BlockSpec((1, batch_tile, D), lambda b, t: (t, b, 0)),         # h_t
            pl.BlockSpec((1, batch_tile, N_pad), lambda b, t: (t, b, 0)),     # alpha_t
        ]
        return pl.pallas_call(
            kern,
            out_shape=[jax.ShapeDtypeStruct((T, B_pad, D), compute_dtype),
                       jax.ShapeDtypeStruct((T, B_pad, N_pad), f32)],
            grid_spec=pltpu.PrefetchScalarGridSpec(
                num_scalar_prefetch=0,
                grid=(nb, T),                                # batch tiles, time
                in_specs=in_specs,
                out_specs=out_specs,
                scratch_shapes=[pltpu.VMEM((batch_tile, D), f32),   # h state
                                pltpu.VMEM((batch_tile, D), f32)],  # c state
            ),
            # Batch axis parallel (2nd TC on v7x); time axis is the recurrence.
            compiler_params=pltpu.CompilerParams(
                dimension_semantics=("parallel", "arbitrary"),
                vmem_limit_bytes=min(int(0.9 * vmem_cap), 128 * 1024 * 1024)),
        )(att1_c, feats_c, embeds_c, h0, c0,
          w_dec, w_full, w_ih_e, w_ih_a, w_hh, b_gates)

    fallback_errors = (TypeError, NotImplementedError, ValueError)
    if hasattr(pltpu, "LoweringException"):
        fallback_errors = fallback_errors + (pltpu.LoweringException,)
    if single_buffer:
        try:
            hs, alphas_t = _call(True)
        except fallback_errors:
            # pl.Buffered(1) unsupported for this layout/version -> default
            # double buffering.  A genuine error re-raises from this call.
            hs, alphas_t = _call(False)
    else:
        hs, alphas_t = _call(False)

    # ---- vocab projection batched over T*B outside the recurrence (MXU-dense) -
    w_fcn = params['w_fcn'].astype(compute_dtype)
    preds_flat = (jnp.dot(hs.reshape(T * B_pad, D), w_fcn,
                          preferred_element_type=f32)
                  + params['b_fcn'].astype(f32))
    preds = jnp.transpose(preds_flat.reshape(T, B_pad, V)[:, :B], (1, 0, 2))   # (B,T,V)
    alphas = jnp.transpose(alphas_t[:, :B, :N], (1, 0, 2))                     # (B,T,N)
    return preds, alphas


def decoder_reference(params, features, captions):
    """Pure-JAX reference mirroring the PyTorch forward (dropout = identity)."""
    B, N, E = features.shape
    T = captions.shape[1] - 1
    embeds = params['embedding'][captions]
    mean_f = features.mean(axis=1)
    h = mean_f @ params['w_init_h'] + params['b_init_h']
    c = mean_f @ params['w_init_c'] + params['b_init_c']
    D = h.shape[-1]
    preds, alphas = [], []
    for i in range(T):
        att1 = jnp.einsum('bne,ea->bna', features, params['w_enc']) + params['b_enc']
        att2 = h @ params['w_dec'] + params['b_dec']
        comb = jnp.tanh(att1 + att2[:, None, :])
        scores = jnp.sum(comb * params['w_full'], axis=-1) + params['b_full']
        alpha = jax.nn.softmax(scores, axis=1)
        weighted = jnp.sum(features * alpha[:, :, None], axis=1)
        gates = (embeds[:, i] @ params['w_ih_e'] + weighted @ params['w_ih_a']
                 + params['b_ih'] + h @ params['w_hh'] + params['b_hh'])
        i_g = jax.nn.sigmoid(gates[:, :D])
        f_g = jax.nn.sigmoid(gates[:, D:2 * D])
        g_g = jnp.tanh(gates[:, 2 * D:3 * D])
        o_g = jax.nn.sigmoid(gates[:, 3 * D:])
        c = f_g * c + i_g * g_g
        h = o_g * jnp.tanh(c)
        preds.append(h @ params['w_fcn'] + params['b_fcn'])
        alphas.append(alpha)
    return jnp.stack(preds, axis=1), jnp.stack(alphas, axis=1)


if __name__ == "__main__":
    key = jax.random.PRNGKey(0)
    B, N = 2, 8                                    # batch, num encoder features
    embed_sz, vocab_sz, att_dim, enc_dim, dec_dim = 32, 64, 32, 32, 32
    T_plus1 = 9                                    # caption length (cap_len = 8)

    keys = jax.random.split(key, 24)

    def w(k, shape, scale=0.1):
        return (scale * jax.random.normal(k, shape)).astype(jnp.float32)

    # Weights stored pre-transposed to (in, out); LSTM W_ih split into embed/att halves.
    params = {
        'embedding': w(keys[0], (vocab_sz, embed_sz)),
        'w_enc': w(keys[1], (enc_dim, att_dim)),   'b_enc': w(keys[2], (1, att_dim)),
        'w_dec': w(keys[3], (dec_dim, att_dim)),   'b_dec': w(keys[4], (1, att_dim)),
        'w_full': w(keys[5], (1, att_dim)),        'b_full': w(keys[6], (1, 1)),
        'w_ih_e': w(keys[7], (embed_sz, 4 * dec_dim)),
        'w_ih_a': w(keys[8], (enc_dim, 4 * dec_dim)),
        'w_hh': w(keys[9], (dec_dim, 4 * dec_dim)),
        'b_ih': w(keys[10], (1, 4 * dec_dim)),     'b_hh': w(keys[11], (1, 4 * dec_dim)),
        'w_init_h': w(keys[12], (enc_dim, dec_dim)), 'b_init_h': w(keys[13], (1, dec_dim)),
        'w_init_c': w(keys[14], (enc_dim, dec_dim)), 'b_init_c': w(keys[15], (1, dec_dim)),
        'w_fcn': w(keys[16], (dec_dim, vocab_sz)), 'b_fcn': w(keys[17], (1, vocab_sz)),
    }
    features = w(keys[18], (B, N, enc_dim), scale=1.0)
    captions = jax.random.randint(keys[19], (B, T_plus1), 0, vocab_sz, dtype=jnp.int32)

    preds_ref, alphas_ref = decoder_reference(params, features, captions)

    # ---- f32 compute config: bit-tight check against the pure-JAX reference --
    preds32, alphas32 = decoder_forward(params, features, captions,
                                        compute_dtype=jnp.float32)
    jax.block_until_ready((preds32, alphas32))
    assert preds32.shape == (B, T_plus1 - 1, vocab_sz)
    assert alphas32.shape == (B, T_plus1 - 1, N)
    assert jnp.allclose(preds32, preds_ref, atol=5e-4, rtol=5e-4)
    assert jnp.allclose(alphas32, alphas_ref, atol=1e-4, rtol=1e-3)

    # ---- default perf config (bf16 operands + approx reciprocal): loose check -
    preds_bf, alphas_bf = decoder_forward(params, features, captions)
    jax.block_until_ready((preds_bf, alphas_bf))
    assert preds_bf.shape == (B, T_plus1 - 1, vocab_sz)
    assert alphas_bf.shape == (B, T_plus1 - 1, N)
    assert jnp.allclose(preds_bf, preds_ref, atol=3e-2, rtol=5e-2)
    assert jnp.allclose(alphas_bf, alphas_ref, atol=1e-2, rtol=5e-2)

    print("KERNEL_OK")
</pallas_src>

<mosaic_0001>
module attributes {stable_mosaic.version = 11 : i64} {
  func.func @decoder_kernel(%arg0: i32, %arg1: i32, %arg2: memref<8x128x32xf32, #tpu.memory_space<vmem>>, %arg3: memref<8x128x32xf32, #tpu.memory_space<vmem>>, %arg4: memref<1x8x32xf32, #tpu.memory_space<vmem>>, %arg5: memref<8x32xf32, #tpu.memory_space<vmem>>, %arg6: memref<8x32xf32, #tpu.memory_space<vmem>>, %arg7: memref<32x32xf32, #tpu.memory_space<vmem>>, %arg8: memref<1x32xf32, #tpu.memory_space<vmem>>, %arg9: memref<32x128xf32, #tpu.memory_space<vmem>>, %arg10: memref<32x128xf32, #tpu.memory_space<vmem>>, %arg11: memref<32x128xf32, #tpu.memory_space<vmem>>, %arg12: memref<1x128xf32, #tpu.memory_space<vmem>>, %arg13: memref<1x8x32xf32, #tpu.memory_space<vmem>>, %arg14: memref<1x8x128xf32, #tpu.memory_space<vmem>>, %arg15: memref<8x32xf32, #tpu.memory_space<vmem>>, %arg16: memref<8x32xf32, #tpu.memory_space<vmem>>) attributes {dimension_semantics = [#tpu.dimension_semantics<parallel>, #tpu.dimension_semantics<arbitrary>], iteration_bounds = array<i64: 1, 8>, scalar_prefetch = 0 : i64, scratch_operands = 2 : i64, tpu.core_type = #tpu.core_type<tc>, window_params = [{pipeline_mode = #tpu.pipeline_mode<synchronous>, transform_indices = @transform_0, window_bounds = array<i64: 8, 128, 32>}, {pipeline_mode = #tpu.pipeline_mode<synchronous>, transform_indices = @transform_1, window_bounds = array<i64: 8, 128, 32>}, {transform_indices = @transform_2, window_bounds = array<i64: 1, 8, 32>}, {transform_indices = @transform_3, window_bounds = array<i64: 8, 32>}, {transform_indices = @transform_4, window_bounds = array<i64: 8, 32>}, {pipeline_mode = #tpu.pipeline_mode<synchronous>, transform_indices = @transform_5, window_bounds = array<i64: 32, 32>}, {pipeline_mode = #tpu.pipeline_mode<synchronous>, transform_indices = @transform_6, window_bounds = array<i64: 1, 32>}, {pipeline_mode = #tpu.pipeline_mode<synchronous>, transform_indices = @transform_7, window_bounds = array<i64: 32, 128>}, {pipeline_mode = #tpu.pipeline_mode<synchronous>, transform_indices = @transform_8, window_bounds = array<i64: 32, 128>}, {pipeline_mode = #tpu.pipeline_mode<synchronous>, transform_indices = @transform_9, window_bounds = array<i64: 32, 128>}, {pipeline_mode = #tpu.pipeline_mode<synchronous>, transform_indices = @transform_10, window_bounds = array<i64: 1, 128>}, {transform_indices = @transform_11, window_bounds = array<i64: 1, 8, 32>}, {transform_indices = @transform_12, window_bounds = array<i64: 1, 8, 128>}]} {
    %c0_i32 = arith.constant 0 : i32
    %0 = arith.cmpi eq, %arg1, %c0_i32 : i32
    %1 = arith.extui %0 : i1 to i32
    %c0_i32_0 = arith.constant 0 : i32
    %2 = arith.cmpi ne, %1, %c0_i32_0 : i32
    scf.if %2 {
      %c0_46 = arith.constant 0 : index
      %c0_47 = arith.constant 0 : index
      %83 = vector.load %arg5[%c0_46, %c0_47] : memref<8x32xf32, #tpu.memory_space<vmem>>, vector<8x32xf32>
      %c0_48 = arith.constant 0 : index
      %c0_49 = arith.constant 0 : index
      %84 = vector.load %arg15[%c0_48, %c0_49] : memref<8x32xf32, #tpu.memory_space<vmem>>, vector<8x32xf32>
      tpu.vector_store %arg15[%c0_48, %c0_49], %83 {strides = array<i32>} : memref<8x32xf32, #tpu.memory_space<vmem>>, vector<8x32xf32>,
      %c0_50 = arith.constant 0 : index
      %c0_51 = arith.constant 0 : index
      %85 = vector.load %arg6[%c0_50, %c0_51] : memref<8x32xf32, #tpu.memory_space<vmem>>, vector<8x32xf32>
      %c0_52 = arith.constant 0 : index
      %c0_53 = arith.constant 0 : index
      %86 = vector.load %arg16[%c0_52, %c0_53] : memref<8x32xf32, #tpu.memory_space<vmem>>, vector<8x32xf32>
      tpu.vector_store %arg16[%c0_52, %c0_53], %85 {strides = array<i32>} : memref<8x32xf32, #tpu.memory_space<vmem>>, vector<8x32xf32>,
    } else {
    }
    %c0 = arith.constant 0 : index
    %c0_1 = arith.constant 0 : index
    %3 = vector.load %arg15[%c0, %c0_1] : memref<8x32xf32, #tpu.memory_space<vmem>>, vector<8x32xf32>
    %c0_2 = arith.constant 0 : index
    %c0_3 = arith.constant 0 : index
    %4 = vector.load %arg16[%c0_2, %c0_3] : memref<8x32xf32, #tpu.memory_space<vmem>>, vector<8x32xf32>
    %c0_4 = arith.constant 0 : index
    %c0_5 = arith.constant 0 : index
    %5 = vector.load %arg7[%c0_4, %c0_5] : memref<32x32xf32, #tpu.memory_space<vmem>>, vector<32x32xf32>
    %cst = arith.constant dense<0.000000e+00> : vector<8x32xf32>
    %6 = tpu.matmul %3, %5, %cst {dimension_numbers = #tpu.dot_dimension_numbers<[1], [0], [0], [1], [0, 0, 1, 1], [], []>} : vector<8x32xf32>, vector<32x32xf32>, vector<8x32xf32> -> vector<8x32xf32>
    %c0_6 = arith.constant 0 : index
    %c0_7 = arith.constant 0 : index
    %c0_8 = arith.constant 0 : index
    %7 = vector.load %arg2[%c0_6, %c0_7, %c0_8] : memref<8x128x32xf32, #tpu.memory_space<vmem>>, vector<8x128x32xf32>
    %8 = vector.shape_cast %6 : vector<8x32xf32> to vector<8x1x32xf32>
    %9 = vector.broadcast %8 : vector<8x1x32xf32> to vector<8x128x32xf32>
    %10 = arith.addf %7, %9 : vector<8x128x32xf32>
    %11 = math.tanh %10 : vector<8x128x32xf32>
    %c0_9 = arith.constant 0 : index
    %c0_10 = arith.constant 0 : index
    %12 = vector.load %arg8[%c0_9, %c0_10] : memref<1x32xf32, #tpu.memory_space<vmem>>, vector<1x32xf32>
    %13 = vector.shape_cast %12 : vector<1x32xf32> to vector<1x1x32xf32>
    %14 = vector.broadcast %13 : vector<1x1x32xf32> to vector<8x128x32xf32>
    %15 = arith.mulf %11, %14 : vector<8x128x32xf32>
    %cst_11 = arith.constant dense<0.000000e+00> : vector<8x128xf32>
    %16 = vector.multi_reduction <add>, %15, %cst_11 [2] : vector<8x128x32xf32> to vector<8x128xf32>
    %17 = tpu.iota {dimensions = array<i32: 1>} : vector<8x128xi32>
    %c8_i32 = arith.constant 8 : i32
    %18 = vector.broadcast %c8_i32 : i32 to vector<8x128xi32>
    %19 = arith.cmpi slt, %17, %18 : vector<8x128xi32>
    %cst_12 = arith.constant 0xFF800000 : f32
    %20 = vector.broadcast %cst_12 : f32 to vector<8x128xf32>
    %21 = arith.select %19, %16, %20 : vector<8x128xi1>, vector<8x128xf32>
    %cst_13 = arith.constant dense<0xFF800000> : vector<8xf32>
    %22 = vector.multi_reduction <maximumf>, %21, %cst_13 [1] : vector<8x128xf32> to vector<8xf32>
    %23 = vector.shape_cast %22 : vector<8xf32> to vector<8x1xf32>
    %24 = vector.broadcast %23 : vector<8x1xf32> to vector<8x128xf32>
    %25 = arith.subf %21, %24 : vector<8x128xf32>
    %26 = math.exp %25 : vector<8x128xf32>
    %cst_14 = arith.constant dense<0.000000e+00> : vector<8xf32>
    %27 = vector.multi_reduction <add>, %26, %cst_14 [1] : vector<8x128xf32> to vector<8xf32>
    %28 = vector.shape_cast %27 : vector<8xf32> to vector<8x1xf32>
    %29 = tpu.reciprocal %28 : vector<8x1xf32> -> vector<8x1xf32>
    %30 = vector.broadcast %29 : vector<8x1xf32> to vector<8x128xf32>
    %31 = arith.mulf %26, %30 : vector<8x128xf32>
    %c0_15 = arith.constant 0 : index
    %c0_16 = arith.constant 0 : index
    %c0_17 = arith.constant 0 : index
    %32 = vector.load %arg3[%c0_15, %c0_16, %c0_17] : memref<8x128x32xf32, #tpu.memory_space<vmem>>, vector<8x128x32xf32>
    %33 = vector.shape_cast %31 : vector<8x128xf32> to vector<8x128x1xf32>
    %34 = vector.broadcast %33 : vector<8x128x1xf32> to vector<8x128x32xf32>
    %35 = arith.mulf %32, %34 : vector<8x128x32xf32>
    %cst_18 = arith.constant dense<0.000000e+00> : vector<8x32xf32>
    %36 = vector.multi_reduction <add>, %35, %cst_18 [1] : vector<8x128x32xf32> to vector<8x32xf32>
    %c0_19 = arith.constant 0 : index
    %c0_20 = arith.constant 0 : index
    %37 = vector.load %arg12[%c0_19, %c0_20] : memref<1x128xf32, #tpu.memory_space<vmem>>, vector<1x128xf32>
    %c0_21 = arith.constant 0 : index
    %c0_22 = arith.constant 0 : index
    %c0_23 = arith.constant 0 : index
    %38 = vector.load %arg4[%c0_21, %c0_22, %c0_23] : memref<1x8x32xf32, #tpu.memory_space<vmem>>, vector<1x8x32xf32>
    %39 = vector.shape_cast %38 : vector<1x8x32xf32> to vector<8x32xf32>
    %c0_24 = arith.constant 0 : index
    %c0_25 = arith.constant 0 : index
    %40 = vector.load %arg9[%c0_24, %c0_25] : memref<32x128xf32, #tpu.memory_space<vmem>>, vector<32x128xf32>
    %cst_26 = arith.constant dense<0.000000e+00> : vector<8x128xf32>
    %41 = tpu.matmul %39, %40, %cst_26 {dimension_numbers = #tpu.dot_dimension_numbers<[1], [0], [0], [1], [0, 0, 1, 1], [], []>} : vector<8x32xf32>, vector<32x128xf32>, vector<8x128xf32> -> vector<8x128xf32>
    %42 = vector.broadcast %37 : vector<1x128xf32> to vector<8x128xf32>
    %43 = arith.addf %42, %41 : vector<8x128xf32>
    %c0_27 = arith.constant 0 : index
    %c0_28 = arith.constant 0 : index
    %44 = vector.load %arg10[%c0_27, %c0_28] : memref<32x128xf32, #tpu.memory_space<vmem>>, vector<32x128xf32>
    %cst_29 = arith.constant dense<0.000000e+00> : vector<8x128xf32>
    %45 = tpu.matmul %36, %44, %cst_29 {dimension_numbers = #tpu.dot_dimension_numbers<[1], [0], [0], [1], [0, 0, 1, 1], [], []>} : vector<8x32xf32>, vector<32x128xf32>, vector<8x128xf32> -> vector<8x128xf32>
    %46 = arith.addf %43, %45 : vector<8x128xf32>
    %c0_30 = arith.constant 0 : index
    %c0_31 = arith.constant 0 : index
    %47 = vector.load %arg11[%c0_30, %c0_31] : memref<32x128xf32, #tpu.memory_space<vmem>>, vector<32x128xf32>
    %cst_32 = arith.constant dense<0.000000e+00> : vector<8x128xf32>
    %48 = tpu.matmul %3, %47, %cst_32 {dimension_numbers = #tpu.dot_dimension_numbers<[1], [0], [0], [1], [0, 0, 1, 1], [], []>} : vector<8x32xf32>, vector<32x128xf32>, vector<8x128xf32> -> vector<8x128xf32>
    %49 = arith.addf %46, %48 : vector<8x128xf32>
    %50 = vector.extract_strided_slice %49 {offsets = [0, 0], sizes = [8, 32], strides = [1, 1]} : vector<8x128xf32> to vector<8x32xf32>
    %51 = arith.negf %50 : vector<8x32xf32>
    %52 = math.exp %51 : vector<8x32xf32>
    %cst_33 = arith.constant 1.000000e+00 : f32
    %53 = vector.broadcast %cst_33 : f32 to vector<8x32xf32>
    %54 = arith.addf %53, %52 : vector<8x32xf32>
    %55 = arith.divf %53, %54 : vector<8x32xf32>
    %56 = vector.extract_strided_slice %49 {offsets = [0, 32], sizes = [8, 32], strides = [1, 1]} : vector<8x128xf32> to vector<8x32xf32>
    %57 = arith.negf %56 : vector<8x32xf32>
    %58 = math.exp %57 : vector<8x32xf32>
    %cst_34 = arith.constant 1.000000e+00 : f32
    %59 = vector.broadcast %cst_34 : f32 to vector<8x32xf32>
    %60 = arith.addf %59, %58 : vector<8x32xf32>
    %61 = arith.divf %59, %60 : vector<8x32xf32>
    %62 = vector.extract_strided_slice %49 {offsets = [0, 64], sizes = [8, 32], strides = [1, 1]} : vector<8x128xf32> to vector<8x32xf32>
    %63 = math.tanh %62 : vector<8x32xf32>
    %64 = vector.extract_strided_slice %49 {offsets = [0, 96], sizes = [8, 32], strides = [1, 1]} : vector<8x128xf32> to vector<8x32xf32>
    %65 = arith.negf %64 : vector<8x32xf32>
    %66 = math.exp %65 : vector<8x32xf32>
    %cst_35 = arith.constant 1.000000e+00 : f32
    %67 = vector.broadcast %cst_35 : f32 to vector<8x32xf32>
    %68 = arith.addf %67, %66 : vector<8x32xf32>
    %69 = arith.divf %67, %68 : vector<8x32xf32>
    %70 = arith.mulf %61, %4 : vector<8x32xf32>
    %71 = arith.mulf %55, %63 : vector<8x32xf32>
    %72 = arith.addf %70, %71 : vector<8x32xf32>
    %73 = math.tanh %72 : vector<8x32xf32>
    %74 = arith.mulf %69, %73 : vector<8x32xf32>
    %c0_36 = arith.constant 0 : index
    %c0_37 = arith.constant 0 : index
    %75 = vector.load %arg15[%c0_36, %c0_37] : memref<8x32xf32, #tpu.memory_space<vmem>>, vector<8x32xf32>
    tpu.vector_store %arg15[%c0_36, %c0_37], %74 {strides = array<i32>} : memref<8x32xf32, #tpu.memory_space<vmem>>, vector<8x32xf32>,
    %c0_38 = arith.constant 0 : index
    %c0_39 = arith.constant 0 : index
    %76 = vector.load %arg16[%c0_38, %c0_39] : memref<8x32xf32, #tpu.memory_space<vmem>>, vector<8x32xf32>
    tpu.vector_store %arg16[%c0_38, %c0_39], %72 {strides = array<i32>} : memref<8x32xf32, #tpu.memory_space<vmem>>, vector<8x32xf32>,
    %c0_40 = arith.constant 0 : index
    %c0_41 = arith.constant 0 : index
    %c0_42 = arith.constant 0 : index
    %77 = vector.load %arg13[%c0_40, %c0_41, %c0_42] : memref<1x8x32xf32, #tpu.memory_space<vmem>>, vector<1x8x32xf32>
    %78 = vector.shape_cast %77 : vector<1x8x32xf32> to vector<8x32xf32>
    %79 = vector.shape_cast %74 : vector<8x32xf32> to vector<1x8x32xf32>
    tpu.vector_store %arg13[%c0_40, %c0_41, %c0_42], %79 {strides = array<i32>} : memref<1x8x32xf32, #tpu.memory_space<vmem>>, vector<1x8x32xf32>,
    %c0_43 = arith.constant 0 : index
    %c0_44 = arith.constant 0 : index
    %c0_45 = arith.constant 0 : index
    %80 = vector.load %arg14[%c0_43, %c0_44, %c0_45] : memref<1x8x128xf32, #tpu.memory_space<vmem>>, vector<1x8x128xf32>
    %81 = vector.shape_cast %80 : vector<1x8x128xf32> to vector<8x128xf32>
    %82 = vector.shape_cast %31 : vector<8x128xf32> to vector<1x8x128xf32>
    tpu.vector_store %arg14[%c0_43, %c0_44, %c0_45], %82 {strides = array<i32>} : memref<1x8x128xf32, #tpu.memory_space<vmem>>, vector<1x8x128xf32>,
    return
  }
  func.func @transform_0(%arg0: i32, %arg1: i32) -> (i32, i32, i32) {
    %c0_i32 = arith.constant 0 : i32
    %c0_i32_0 = arith.constant 0 : i32
    %c0_i32_1 = arith.constant 0 : i32
    return %arg0, %c0_i32, %c0_i32_0 : i32, i32, i32
  }
  func.func @transform_1(%arg0: i32, %arg1: i32) -> (i32, i32, i32) {
    %c0_i32 = arith.constant 0 : i32
    %c0_i32_0 = arith.constant 0 : i32
    %c0_i32_1 = arith.constant 0 : i32
    return %arg0, %c0_i32, %c0_i32_0 : i32, i32, i32
  }
  func.func @transform_2(%arg0: i32, %arg1: i32) -> (i32, i32, i32) {
    %c0_i32 = arith.constant 0 : i32
    %c0_i32_0 = arith.constant 0 : i32
    return %arg1, %arg0, %c0_i32 : i32, i32, i32
  }
  func.func @transform_3(%arg0: i32, %arg1: i32) -> (i32, i32) {
    %c0_i32 = arith.constant 0 : i32
    %c0_i32_0 = arith.constant 0 : i32
    return %arg0, %c0_i32 : i32, i32
  }
  func.func @transform_4(%arg0: i32, %arg1: i32) -> (i32, i32) {
    %c0_i32 = arith.constant 0 : i32
    %c0_i32_0 = arith.constant 0 : i32
    return %arg0, %c0_i32 : i32, i32
  }
  func.func @transform_5(%arg0: i32, %arg1: i32) -> (i32, i32) {
    %c0_i32 = arith.constant 0 : i32
    %c0_i32_0 = arith.constant 0 : i32
    %c0_i32_1 = arith.constant 0 : i32
    return %c0_i32, %c0_i32_0 : i32, i32
  }
  func.func @transform_6(%arg0: i32, %arg1: i32) -> (i32, i32) {
    %c0_i32 = arith.constant 0 : i32
    %c0_i32_0 = arith.constant 0 : i32
    %c0_i32_1 = arith.constant 0 : i32
    return %c0_i32, %c0_i32_0 : i32, i32
  }
  func.func @transform_7(%arg0: i32, %arg1: i32) -> (i32, i32) {
    %c0_i32 = arith.constant 0 : i32
    %c0_i32_0 = arith.constant 0 : i32
    %c0_i32_1 = arith.constant 0 : i32
    return %c0_i32, %c0_i32_0 : i32, i32
  }
  func.func @transform_8(%arg0: i32, %arg1: i32) -> (i32, i32) {
    %c0_i32 = arith.constant 0 : i32
    %c0_i32_0 = arith.constant 0 : i32
    %c0_i32_1 = arith.constant 0 : i32
    return %c0_i32, %c0_i32_0 : i32, i32
  }
  func.func @transform_9(%arg0: i32, %arg1: i32) -> (i32, i32) {
    %c0_i32 = arith.constant 0 : i32
    %c0_i32_0 = arith.constant 0 : i32
    %c0_i32_1 = arith.constant 0 : i32
    return %c0_i32, %c0_i32_0 : i32, i32
  }
  func.func @transform_10(%arg0: i32, %arg1: i32) -> (i32, i32) {
    %c0_i32 = arith.constant 0 : i32
    %c0_i32_0 = arith.constant 0 : i32
    %c0_i32_1 = arith.constant 0 : i32
    return %c0_i32, %c0_i32_0 : i32, i32
  }
  func.func @transform_11(%arg0: i32, %arg1: i32) -> (i32, i32, i32) {
    %c0_i32 = arith.constant 0 : i32
    %c0_i32_0 = arith.constant 0 : i32
    return %arg1, %arg0, %c0_i32 : i32, i32, i32
  }
  func.func @transform_12(%arg0: i32, %arg1: i32) -> (i32, i32, i32) {
    %c0_i32 = arith.constant 0 : i32
    %c0_i32_0 = arith.constant 0 : i32
    return %arg1, %arg0, %c0_i32 : i32, i32, i32
  }
}

</mosaic_0001>

<llo_original>
// kernel: tpu_custom_call.1
$region0: #{tpu_custom_call.1}
  #allocation0 [shape = 'u32[]', space=smem, size = 0x4, offset = 0x4, fixed_abs, tag = 'smem constant byte address 0x4 - core index']
  #allocation1 [shape = 'u32[72,128]{1,0:T(1,128)}', space=vmem, size = 0x9000, scoped, tag = 'internal scratch']
  #allocation2 [shape = 'f32[8,32]{1,0:T(8,128)}', space=vmem, size = 0x1000, scoped, tag = 'scratch operand']
  #allocation3 [shape = 'f32[8,32]{1,0:T(8,128)}', space=vmem, size = 0x1000, scoped, tag = 'scratch operand']
  %s0 = inlined_call_operand.vmem [shape: f32[8,128,32], index: 0, kind: input, shape index: {}]
  %s1 = inlined_call_operand.vmem [shape: f32[8,128,32], index: 1, kind: input, shape index: {}]
  %s2 = inlined_call_operand.vmem [shape: f32[8,8,32], index: 2, kind: input, shape index: {}]
  %s3 = inlined_call_operand.vmem [shape: f32[8,32], index: 3, kind: input, shape index: {}]
  %s4 = inlined_call_operand.vmem [shape: f32[8,32], index: 4, kind: input, shape index: {}]
  %s5 = inlined_call_operand.vmem [shape: f32[32,32], index: 5, kind: input, shape index: {}]
  %s6 = inlined_call_operand.vmem [shape: f32[1,32], index: 6, kind: input, shape index: {}]
  %s7 = inlined_call_operand.vmem [shape: f32[32,128], index: 7, kind: input, shape index: {}]
  %s8 = inlined_call_operand.vmem [shape: f32[32,128], index: 8, kind: input, shape index: {}]
  %s9 = inlined_call_operand.vmem [shape: f32[32,128], index: 9, kind: input, shape index: {}]
  %s10 = inlined_call_operand.vmem [shape: f32[1,128], index: 10, kind: input, shape index: {}]
  %s11 = inlined_call_operand.hbm [shape: f32[8,8,32], index: 11, kind: output, shape index: {0}]
  %s12 = inlined_call_operand.hbm [shape: f32[8,8,128], index: 12, kind: output, shape index: {1}]
  %13 = xla_tuple %s11, %s12
  %s14 = sld [smem:[#allocation0]]
  $region89: #{tpu_custom_call.1} parent=0
    _
  %s16 = ssub.s32 1, %s14
  %s17 = scalar_select 0, %s16, %s14
  $region1: #{tpu_custom_call.1} parent=0
    #allocation4 [shape = 'u8[8192]{0}', space=vmem, size = 0x2000, scoped, tag = 'output window, operand 0']
    #allocation5 [shape = 's32[2]{0}', space=sflag, size = 0x8, scoped, tag = 'scoped memory for tpu_custom_call.1']
    #allocation6 [shape = 'u8[8192]{0}', space=vmem, size = 0x2000, scoped, tag = 'output window, operand 1']
    #allocation7 [shape = 's32[2]{0}', space=sflag, size = 0x8, scoped, tag = 'scoped memory for tpu_custom_call.1']
    %18 = vsyncpa [#allocation5], 0
    %s19 = scalar_lea.sflag [#allocation5], 1
    %20 = vsyncpa %s19, 0
    %21 = vsyncpa [#allocation7], 0
    %s22 = scalar_lea.sflag [#allocation7], 1
    %23 = vsyncpa %s22, 0
    loop: start=0, step=1, limit=10
    $region2: #{tpu_custom_call.1} parent=1 // loop_pre_header
      _
    $region3: #{tpu_custom_call.1} parent=1 // loop_header
      %s25 = sphi 0, %s29
      %p26 = scmp.ge.s32.totalorder %s25, 10
      %s32 = sphi 0, %s44
      %s33 = sphi 0, %s40
      %s34 = sphi 0, %s32
      %s35 = sphi 0, %s33
      %s36 = sphi 0, %s34
      %s37 = sphi 0, %s35
      %s47 = sphi 0, %s49
      %s50 = sphi 0, %s47
      %s51 = sphi 0, %s50
      %s67 = sphi 0, %s51
      %s73 = sphi 0, %s75
      %s76 = sphi 0, %s73
      %s77 = sphi 0, %s76
      %s93 = sphi 0, %s77
      %s101 = sphi 0, %s103
      %s104 = sphi 0, %s101
      %s105 = sphi 0, %s104
      %s121 = sphi 0, %s105
      %s127 = sphi 0, %s129
      %s130 = sphi 0, %s127
      %s131 = sphi 0, %s130
      %s147 = sphi 0, %s131
      %s153 = sphi 0, %s155
      %s156 = sphi 0, %s153
      %s157 = sphi 0, %s156
      %s173 = sphi 0, %s157
      %s177 = sphi 0, %s177
      %s179 = sphi 0, %s177
      %s180 = sphi 0, %s179
      %s194 = sphi 0, %s180
      %s198 = sphi 0, %s198
      %s200 = sphi 0, %s198
      %s201 = sphi 0, %s200
      %s215 = sphi 0, %s201
      %s219 = sphi 0, %s219
      %s221 = sphi 0, %s219
      %s222 = sphi 0, %s221
      %s236 = sphi 0, %s222
      %s240 = sphi 0, %s240
      %s242 = sphi 0, %s240
      %s243 = sphi 0, %s242
      %s257 = sphi 0, %s243
      %s261 = sphi 0, %s261
      %s263 = sphi 0, %s261
      %s264 = sphi 0, %s263
      %s278 = sphi 0, %s264
      %s282 = sphi 0, %s282
      %s284 = sphi 0, %s282
      %s285 = sphi 0, %s284
      %s299 = sphi 0, %s285
      %s307 = sphi 0, %s309
      %s310 = sphi 0, %s307
      %s311 = sphi 0, %s310
      %s327 = sphi 0, %s311
      %s335 = sphi 0, %s337
      %s338 = sphi 0, %s335
      %s339 = sphi 0, %s338
      %s355 = sphi 0, %s339
    $region4: #{tpu_custom_call.1} parent=1 // loop_header_branch
      %28 = sbr.rel (%p26) target = $region8
    $region5: #{tpu_custom_call.1} parent=1 // loop_body
      %s30 = ssub.s32 %s25, 1
      %s31 = ssub.s32 %s25, 2
      %s38 = sadd.s32 1, %s33
      %p39 = scmp.ge.s32.totalorder %s38, 8
      %s40 = scalar_select %p39, 0, %s38
      %s41 = sadd.s32 1, %s32
      %s42 = scalar_select %p39, %s41, %s32
      %p43 = scmp.ge.s32.totalorder %s42, 1
      %s44 = scalar_select %p43, 0, %s42
      %s45 = ssub.s32 %s32, %s44
      %p46 = scmp.eq.s32.totalorder %s45, 0
      %s48 = sadd.s32 %s47, 1
      %s49 = scalar_select %p46, %s47, %s48
      %p52 = pneg %p46
      %p53 = scmp.eq.s32.totalorder %s25, 7
      %p54 = por %p52, %p53
      %p55 = scmp.ne.s32.totalorder %s47, %s50
      %p56 = scmp.eq.s32.totalorder %s25, 0
      %p57 = por %p55, %p56
      %p58 = scmp.ne.s32.totalorder %s47, %s50
      %p59 = scmp.eq.s32.totalorder %s30, 7
      %p60 = por %p58, %p59
      %p61 = scmp.ne.s32.totalorder %s50, %s51
      %p62 = scmp.eq.s32.totalorder %s30, 0
      %p63 = por %p61, %p62
      %p64 = scmp.ne.s32.totalorder %s50, %s51
      %p65 = scmp.eq.s32.totalorder %s31, 7
      %p66 = por %p64, %p65
      %p68 = scmp.ne.s32.totalorder %s51, %s67
      %p69 = scmp.eq.s32.totalorder %s31, 0
      %p70 = por %p68, %p69
      %s71 = ssub.s32 %s32, %s44
      %p72 = scmp.eq.s32.totalorder %s71, 0
      %s74 = sadd.s32 %s73, 1
      %s75 = scalar_select %p72, %s73, %s74
      %p78 = pneg %p72
      %p79 = scmp.eq.s32.totalorder %s25, 7
      %p80 = por %p78, %p79
      %p81 = scmp.ne.s32.totalorder %s73, %s76
      %p82 = scmp.eq.s32.totalorder %s25, 0
      %p83 = por %p81, %p82
      %p84 = scmp.ne.s32.totalorder %s73, %s76
      %p85 = scmp.eq.s32.totalorder %s30, 7
      %p86 = por %p84, %p85
      %p87 = scmp.ne.s32.totalorder %s76, %s77
      %p88 = scmp.eq.s32.totalorder %s30, 0
      %p89 = por %p87, %p88
      %p90 = scmp.ne.s32.totalorder %s76, %s77
      %p91 = scmp.eq.s32.totalorder %s31, 7
      %p92 = por %p90, %p91
      %p94 = scmp.ne.s32.totalorder %s77, %s93
      %p95 = scmp.eq.s32.totalorder %s31, 0
      %p96 = por %p94, %p95
      %s97 = ssub.s32 %s33, %s40
      %s98 = ssub.s32 %s32, %s44
      %s99 = sor.u32 %s97, %s98
      %p100 = scmp.eq.s32.totalorder %s99, 0
      %s102 = sadd.s32 %s101, 1
      %s103 = scalar_select %p100, %s101, %s102
      %p106 = pneg %p100
      %p107 = scmp.eq.s32.totalorder %s25, 7
      %p108 = por %p106, %p107
      %p109 = scmp.ne.s32.totalorder %s101, %s104
      %p110 = scmp.eq.s32.totalorder %s25, 0
      %p111 = por %p109, %p110
      %p112 = scmp.ne.s32.totalorder %s101, %s104
      %p113 = scmp.eq.s32.totalorder %s30, 7
      %p114 = por %p112, %p113
      %p115 = scmp.ne.s32.totalorder %s104, %s105
      %p116 = scmp.eq.s32.totalorder %s30, 0
      %p117 = por %p115, %p116
      %p118 = scmp.ne.s32.totalorder %s104, %s105
      %p119 = scmp.eq.s32.totalorder %s31, 7
      %p120 = por %p118, %p119
      %p122 = scmp.ne.s32.totalorder %s105, %s121
      %p123 = scmp.eq.s32.totalorder %s31, 0
      %p124 = por %p122, %p123
      %s125 = ssub.s32 %s32, %s44
      %p126 = scmp.eq.s32.totalorder %s125, 0
      %s128 = sadd.s32 %s127, 1
      %s129 = scalar_select %p126, %s127, %s128
      %p132 = pneg %p126
      %p133 = scmp.eq.s32.totalorder %s25, 7
      %p134 = por %p132, %p133
      %p135 = scmp.ne.s32.totalorder %s127, %s130
      %p136 = scmp.eq.s32.totalorder %s25, 0
      %p137 = por %p135, %p136
      %p138 = scmp.ne.s32.totalorder %s127, %s130
      %p139 = scmp.eq.s32.totalorder %s30, 7
      %p140 = por %p138, %p139
      %p141 = scmp.ne.s32.totalorder %s130, %s131
      %p142 = scmp.eq.s32.totalorder %s30, 0
      %p143 = por %p141, %p142
      %p144 = scmp.ne.s32.totalorder %s130, %s131
      %p145 = scmp.eq.s32.totalorder %s31, 7
      %p146 = por %p144, %p145
      %p148 = scmp.ne.s32.totalorder %s131, %s147
      %p149 = scmp.eq.s32.totalorder %s31, 0
      %p150 = por %p148, %p149
      %s151 = ssub.s32 %s32, %s44
      %p152 = scmp.eq.s32.totalorder %s151, 0
      %s154 = sadd.s32 %s153, 1
      %s155 = scalar_select %p152, %s153, %s154
      %p158 = pneg %p152
      %p159 = scmp.eq.s32.totalorder %s25, 7
      %p160 = por %p158, %p159
      %p161 = scmp.ne.s32.totalorder %s153, %s156
      %p162 = scmp.eq.s32.totalorder %s25, 0
      %p163 = por %p161, %p162
      %p164 = scmp.ne.s32.totalorder %s153, %s156
      %p165 = scmp.eq.s32.totalorder %s30, 7
      %p166 = por %p164, %p165
      %p167 = scmp.ne.s32.totalorder %s156, %s157
      %p168 = scmp.eq.s32.totalorder %s30, 0
      %p169 = por %p167, %p168
      %p170 = scmp.ne.s32.totalorder %s156, %s157
      %p171 = scmp.eq.s32.totalorder %s31, 7
      %p172 = por %p170, %p171
      %p174 = scmp.ne.s32.totalorder %s157, %s173
      %p175 = scmp.eq.s32.totalorder %s31, 0
      %p176 = por %p174, %p175
      %s178 = sadd.s32 %s177, 1
      %p181 = scmp.eq.s32.totalorder %s25, 7
      %p182 = scmp.ne.s32.totalorder %s177, %s179
      %p183 = scmp.eq.s32.totalorder %s25, 0
      %p184 = por %p182, %p183
      %p185 = scmp.ne.s32.totalorder %s177, %s179
      %p186 = scmp.eq.s32.totalorder %s30, 7
      %p187 = por %p185, %p186
      %p188 = scmp.ne.s32.totalorder %s179, %s180
      %p189 = scmp.eq.s32.totalorder %s30, 0
      %p190 = por %p188, %p189
      %p191 = scmp.ne.s32.totalorder %s179, %s180
      %p192 = scmp.eq.s32.totalorder %s31, 7
      %p193 = por %p191, %p192
      %p195 = scmp.ne.s32.totalorder %s180, %s194
      %p196 = scmp.eq.s32.totalorder %s31, 0
      %p197 = por %p195, %p196
      %s199 = sadd.s32 %s198, 1
      %p202 = scmp.eq.s32.totalorder %s25, 7
      %p203 = scmp.ne.s32.totalorder %s198, %s200
      %p204 = scmp.eq.s32.totalorder %s25, 0
      %p205 = por %p203, %p204
      %p206 = scmp.ne.s32.totalorder %s198, %s200
      %p207 = scmp.eq.s32.totalorder %s30, 7
      %p208 = por %p206, %p207
      %p209 = scmp.ne.s32.totalorder %s200, %s201
      %p210 = scmp.eq.s32.totalorder %s30, 0
      %p211 = por %p209, %p210
      %p212 = scmp.ne.s32.totalorder %s200, %s201
      %p213 = scmp.eq.s32.totalorder %s31, 7
      %p214 = por %p212, %p213
      %p216 = scmp.ne.s32.totalorder %s201, %s215
      %p217 = scmp.eq.s32.totalorder %s31, 0
      %p218 = por %p216, %p217
      %s220 = sadd.s32 %s219, 1
      %p223 = scmp.eq.s32.totalorder %s25, 7
      %p224 = scmp.ne.s32.totalorder %s219, %s221
      %p225 = scmp.eq.s32.totalorder %s25, 0
      %p226 = por %p224, %p225
      %p227 = scmp.ne.s32.totalorder %s219, %s221
      %p228 = scmp.eq.s32.totalorder %s30, 7
      %p229 = por %p227, %p228
      %p230 = scmp.ne.s32.totalorder %s221, %s222
      %p231 = scmp.eq.s32.totalorder %s30, 0
      %p232 = por %p230, %p231
      %p233 = scmp.ne.s32.totalorder %s221, %s222
      %p234 = scmp.eq.s32.totalorder %s31, 7
      %p235 = por %p233, %p234
      %p237 = scmp.ne.s32.totalorder %s222, %s236
      %p238 = scmp.eq.s32.totalorder %s31, 0
      %p239 = por %p237, %p238
      %s241 = sadd.s32 %s240, 1
      %p244 = scmp.eq.s32.totalorder %s25, 7
      %p245 = scmp.ne.s32.totalorder %s240, %s242
      %p246 = scmp.eq.s32.totalorder %s25, 0
      %p247 = por %p245, %p246
      %p248 = scmp.ne.s32.totalorder %s240, %s242
      %p249 = scmp.eq.s32.totalorder %s30, 7
      %p250 = por %p248, %p249
      %p251 = scmp.ne.s32.totalorder %s242, %s243
      %p252 = scmp.eq.s32.totalorder %s30, 0
      %p253 = por %p251, %p252
      %p254 = scmp.ne.s32.totalorder %s242, %s243
      %p255 = scmp.eq.s32.totalorder %s31, 7
      %p256 = por %p254, %p255
      %p258 = scmp.ne.s32.totalorder %s243, %s257
      %p259 = scmp.eq.s32.totalorder %s31, 0
      %p260 = por %p258, %p259
      %s262 = sadd.s32 %s261, 1
      %p265 = scmp.eq.s32.totalorder %s25, 7
      %p266 = scmp.ne.s32.totalorder %s261, %s263
      %p267 = scmp.eq.s32.totalorder %s25, 0
      %p268 = por %p266, %p267
      %p269 = scmp.ne.s32.totalorder %s261, %s263
      %p270 = scmp.eq.s32.totalorder %s30, 7
      %p271 = por %p269, %p270
      %p272 = scmp.ne.s32.totalorder %s263, %s264
      %p273 = scmp.eq.s32.totalorder %s30, 0
      %p274 = por %p272, %p273
      %p275 = scmp.ne.s32.totalorder %s263, %s264
      %p276 = scmp.eq.s32.totalorder %s31, 7
      %p277 = por %p275, %p276
      %p279 = scmp.ne.s32.totalorder %s264, %s278
      %p280 = scmp.eq.s32.totalorder %s31, 0
      %p281 = por %p279, %p280
      %s283 = sadd.s32 %s282, 1
      %p286 = scmp.eq.s32.totalorder %s25, 7
      %p287 = scmp.ne.s32.totalorder %s282, %s284
      %p288 = scmp.eq.s32.totalorder %s25, 0
      %p289 = por %p287, %p288
      %p290 = scmp.ne.s32.totalorder %s282, %s284
      %p291 = scmp.eq.s32.totalorder %s30, 7
      %p292 = por %p290, %p291
      %p293 = scmp.ne.s32.totalorder %s284, %s285
      %p294 = scmp.eq.s32.totalorder %s30, 0
      %p295 = por %p293, %p294
      %p296 = scmp.ne.s32.totalorder %s284, %s285
      %p297 = scmp.eq.s32.totalorder %s31, 7
      %p298 = por %p296, %p297
      %p300 = scmp.ne.s32.totalorder %s285, %s299
      %p301 = scmp.eq.s32.totalorder %s31, 0
      %p302 = por %p300, %p301
      %s303 = ssub.s32 %s33, %s40
      %s304 = ssub.s32 %s32, %s44
      %s305 = sor.u32 %s303, %s304
      %p306 = scmp.eq.s32.totalorder %s305, 0
      %s308 = sadd.s32 %s307, 1
      %s309 = scalar_select %p306, %s307, %s308
      %p312 = pneg %p306
      %p313 = scmp.eq.s32.totalorder %s25, 7
      %p314 = por %p312, %p313
      %p315 = scmp.ne.s32.totalorder %s307, %s310
      %p316 = scmp.eq.s32.totalorder %s25, 0
      %p317 = por %p315, %p316
      %p318 = scmp.ne.s32.totalorder %s307, %s310
      %p319 = scmp.eq.s32.totalorder %s30, 7
      %p320 = por %p318, %p319
      %p321 = scmp.ne.s32.totalorder %s310, %s311
      %p322 = scmp.eq.s32.totalorder %s30, 0
      %p323 = por %p321, %p322
      %p324 = scmp.ne.s32.totalorder %s310, %s311
      %p325 = scmp.eq.s32.totalorder %s31, 7
      %p326 = por %p324, %p325
      %p328 = scmp.ne.s32.totalorder %s311, %s327
      %p329 = scmp.eq.s32.totalorder %s31, 0
      %p330 = por %p328, %p329
      %s331 = ssub.s32 %s33, %s40
      %s332 = ssub.s32 %s32, %s44
      %s333 = sor.u32 %s331, %s332
      %p334 = scmp.eq.s32.totalorder %s333, 0
      %s336 = sadd.s32 %s335, 1
      %s337 = scalar_select %p334, %s335, %s336
      %p340 = pneg %p334
      %p341 = scmp.eq.s32.totalorder %s25, 7
      %p342 = por %p340, %p341
      %p343 = scmp.ne.s32.totalorder %s335, %s338
      %p344 = scmp.eq.s32.totalorder %s25, 0
      %p345 = por %p343, %p344
      %p346 = scmp.ne.s32.totalorder %s335, %s338
      %p347 = scmp.eq.s32.totalorder %s30, 7
      %p348 = por %p346, %p347
      %p349 = scmp.ne.s32.totalorder %s338, %s339
      %p350 = scmp.eq.s32.totalorder %s30, 0
      %p351 = por %p349, %p350
      %p352 = scmp.ne.s32.totalorder %s338, %s339
      %p353 = scmp.eq.s32.totalorder %s31, 7
      %p354 = por %p352, %p353
      %p356 = scmp.ne.s32.totalorder %s339, %s355
      %p357 = scmp.eq.s32.totalorder %s31, 0
      %p358 = por %p356, %p357
      %p359 = scmp.le.s32.totalorder 1, %s25
      %p360 = scmp.lt.s32.totalorder %s25, 9
      %p361 = pnand %p359, %p360
      %p362 = pneg %p361
      // Predicated region
      $region9: #{tpu_custom_call.1} parent=5 // pred_check
        _
      $region10: #{tpu_custom_call.1} parent=5 // pred_check_branch
        %364 = sbr.rel (%p361) target = $region12
      $region11: #{tpu_custom_call.1} parent=5 // pred_region
        %s365 = ssub.s32 %s25, 1
        // Predicated region
        $region13: #{tpu_custom_call.1} parent=11 // pred_check
          %p366 = pneg %p63
        $region14: #{tpu_custom_call.1} parent=11 // pred_check_branch
          %368 = sbr.rel (%p366) target = $region16
        $region15: #{tpu_custom_call.1} parent=11 // pred_region
          %s369 = smul.u32 8, %s34
          %p370 = scmp.lt.s32.totalorder %s369, 7
          %s371 = scalar_select %p370, %s369, 7
          %s372 = smul.addr %s371, 16
          %s373 = smul.addr %s372, 8
          %s374 = scalar_lea.vmem %s0, %s373
          %s375 = smul.u32 8, %s34
        $region16: #{tpu_custom_call.1} parent=11 // pred_fallthru
          _
        // Predicated region
        $region17: #{tpu_custom_call.1} parent=11 // pred_check
          %p376 = pneg %p89
        $region18: #{tpu_custom_call.1} parent=11 // pred_check_branch
          %378 = sbr.rel (%p376) target = $region20
        $region19: #{tpu_custom_call.1} parent=11 // pred_region
          %s379 = smul.u32 8, %s34
          %p380 = scmp.lt.s32.totalorder %s379, 7
          %s381 = scalar_select %p380, %s379, 7
          %s382 = smul.addr %s381, 16
          %s383 = smul.addr %s382, 8
          %s384 = scalar_lea.vmem %s1, %s383
          %s385 = smul.u32 8, %s34
        $region20: #{tpu_custom_call.1} parent=11 // pred_fallthru
          _
        // Predicated region
        $region21: #{tpu_custom_call.1} parent=11 // pred_check
          %p386 = pneg %p143
        $region22: #{tpu_custom_call.1} parent=11 // pred_check_branch
          %388 = sbr.rel (%p386) target = $region24
        $region23: #{tpu_custom_call.1} parent=11 // pred_region
          %p389 = scmp.lt.s32.totalorder %s34, 0
          %s390 = scalar_select %p389, %s34, 0
          %s391 = smul.addr %s390, 8
          %s392 = scalar_lea.vmem %s3, %s391
        $region24: #{tpu_custom_call.1} parent=11 // pred_fallthru
          _
        // Predicated region
        $region25: #{tpu_custom_call.1} parent=11 // pred_check
          %p393 = pneg %p169
        $region26: #{tpu_custom_call.1} parent=11 // pred_check_branch
          %395 = sbr.rel (%p393) target = $region28
        $region27: #{tpu_custom_call.1} parent=11 // pred_region
          %p396 = scmp.lt.s32.totalorder %s34, 0
          %s397 = scalar_select %p396, %s34, 0
          %s398 = smul.addr %s397, 8
          %s399 = scalar_lea.vmem %s4, %s398
        $region28: #{tpu_custom_call.1} parent=11 // pred_fallthru
          _
        // Predicated region
        $region29: #{tpu_custom_call.1} parent=11 // pred_check
          %p400 = pneg %p190
        $region30: #{tpu_custom_call.1} parent=11 // pred_check_branch
          %402 = sbr.rel (%p400) target = $region32
        $region31: #{tpu_custom_call.1} parent=11 // pred_region
          _
        $region32: #{tpu_custom_call.1} parent=11 // pred_fallthru
          _
        // Predicated region
        $region33: #{tpu_custom_call.1} parent=11 // pred_check
          %p403 = pneg %p211
        $region34: #{tpu_custom_call.1} parent=11 // pred_check_branch
          %405 = sbr.rel (%p403) target = $region36
        $region35: #{tpu_custom_call.1} parent=11 // pred_region
          _
        $region36: #{tpu_custom_call.1} parent=11 // pred_fallthru
          _
        // Predicated region
        $region37: #{tpu_custom_call.1} parent=11 // pred_check
          %p406 = pneg %p232
        $region38: #{tpu_custom_call.1} parent=11 // pred_check_branch
          %408 = sbr.rel (%p406) target = $region40
        $region39: #{tpu_custom_call.1} parent=11 // pred_region
          _
        $region40: #{tpu_custom_call.1} parent=11 // pred_fallthru
          _
        // Predicated region
        $region41: #{tpu_custom_call.1} parent=11 // pred_check
          %p409 = pneg %p253
        $region42: #{tpu_custom_call.1} parent=11 // pred_check_branch
          %411 = sbr.rel (%p409) target = $region44
        $region43: #{tpu_custom_call.1} parent=11 // pred_region
          _
        $region44: #{tpu_custom_call.1} parent=11 // pred_fallthru
          _
        // Predicated region
        $region45: #{tpu_custom_call.1} parent=11 // pred_check
          %p412 = pneg %p274
        $region46: #{tpu_custom_call.1} parent=11 // pred_check_branch
          %414 = sbr.rel (%p412) target = $region48
        $region47: #{tpu_custom_call.1} parent=11 // pred_region
          _
        $region48: #{tpu_custom_call.1} parent=11 // pred_fallthru
          _
        // Predicated region
        $region49: #{tpu_custom_call.1} parent=11 // pred_check
          %p415 = pneg %p295
        $region50: #{tpu_custom_call.1} parent=11 // pred_check_branch
          %417 = sbr.rel (%p415) target = $region52
        $region51: #{tpu_custom_call.1} parent=11 // pred_region
          _
        $region52: #{tpu_custom_call.1} parent=11 // pred_fallthru
          _
      $region12: #{tpu_custom_call.1} parent=5 // pred_fallthru
        _
      %p418 = scmp.lt.s32.totalorder %s25, 8
      // Predicated region
      $region53: #{tpu_custom_call.1} parent=5 // pred_check
        %p419 = pneg %p418
      $region54: #{tpu_custom_call.1} parent=5 // pred_check_branch
        %421 = sbr.rel (%p419) target = $region56
      $region55: #{tpu_custom_call.1} parent=5 // pred_region
        // Predicated region
        $region57: #{tpu_custom_call.1} parent=55 // pred_check
          %p422 = pneg %p111
        $region58: #{tpu_custom_call.1} parent=55 // pred_check_branch
          %424 = sbr.rel (%p422) target = $region60
        $region59: #{tpu_custom_call.1} parent=55 // pred_region
          %p425 = scmp.lt.s32.totalorder %s33, 7
          %s426 = scalar_select %p425, %s33, 7
          %p427 = scmp.lt.s32.totalorder %s32, 0
          %s428 = scalar_select %p427, %s32, 0
          %s429 = sadd.s32 %s428, %s426
          %s430 = smul.addr %s429, 8
          %s431 = scalar_lea.vmem %s2, %s430
        $region60: #{tpu_custom_call.1} parent=55 // pred_fallthru
          _
      $region56: #{tpu_custom_call.1} parent=5 // pred_fallthru
        _
      %p432 = scmp.le.s32.totalorder 1, %s25
      %p433 = scmp.lt.s32.totalorder %s25, 9
      %p434 = pnand %p432, %p433
      %p435 = pneg %p434
      // Predicated region
      $region61: #{tpu_custom_call.1} parent=5 // pred_check
        _
      $region62: #{tpu_custom_call.1} parent=5 // pred_check_branch
        %437 = sbr.rel (%p434) target = $region64
      $region63: #{tpu_custom_call.1} parent=5 // pred_region
        %s438 = ssub.s32 %s25, 1
        %s439 = smul.u32 8, %s34
        %p440 = scmp.lt.s32.totalorder %s439, 7
        %s441 = scalar_select %p440, %s439, 7
        %s442 = smul.addr %s441, 16
        %s443 = smul.addr %s442, 8
        %s444 = scalar_lea.vmem %s0, %s443
        %p445 = pneg %p63
        %p446 = pneg %p60
        %s447 = smul.u32 8, %s34
        %p448 = scmp.lt.s32.totalorder %s447, 7
        %s449 = scalar_select %p448, %s447, 7
        %s450 = smul.addr %s449, 16
        %s451 = smul.addr %s450, 8
        %s452 = scalar_lea.vmem %s1, %s451
        %p453 = pneg %p89
        %p454 = pneg %p86
        %p455 = scmp.lt.s32.totalorder %s35, 7
        %s456 = scalar_select %p455, %s35, 7
        %p457 = scmp.lt.s32.totalorder %s34, 0
        %s458 = scalar_select %p457, %s34, 0
        %s459 = sadd.s32 %s458, %s456
        %s460 = smul.addr %s459, 8
        %s461 = scalar_lea.vmem %s2, %s460
        %p462 = pneg %p117
        %p463 = pneg %p114
        %p464 = scmp.lt.s32.totalorder %s34, 0
        %s465 = scalar_select %p464, %s34, 0
        %s466 = smul.addr %s465, 8
        %s467 = scalar_lea.vmem %s3, %s466
        %p468 = pneg %p143
        %p469 = pneg %p140
        %p470 = scmp.lt.s32.totalorder %s34, 0
        %s471 = scalar_select %p470, %s34, 0
        %s472 = smul.addr %s471, 8
        %s473 = scalar_lea.vmem %s4, %s472
        %p474 = pneg %p169
        %p475 = pneg %p166
        %p476 = pneg %p190
        %p477 = pneg %p187
        %p478 = pneg %p211
        %p479 = pneg %p208
        %p480 = pneg %p232
        %p481 = pneg %p229
        %p482 = pneg %p253
        %p483 = pneg %p250
        %p484 = pneg %p274
        %p485 = pneg %p271
        %p486 = pneg %p295
        %p487 = pneg %p292
        %p488 = pneg %p323
        %p489 = pneg %p320
        %s490 = sand.u32 %s310, 1
        %s491 = scalar_lea.sflag [#allocation5], %s490
        %s492 = sand.u32 %s310, 1
        %s493 = smul.addr %s492, 8
        %s494 = scalar_lea.vmem [#allocation4], %s493
        %p495 = pneg %p351
        %p496 = pneg %p348
        %s497 = sand.u32 %s338, 1
        %s498 = scalar_lea.sflag [#allocation7], %s497
        %s499 = sand.u32 %s338, 1
        %s500 = smul.addr %s499, 8
        %s501 = scalar_lea.vmem [#allocation6], %s500
        %s502 = smul.u32 8, %s34
        %p503 = scmp.lt.s32.totalorder %s502, 7
        %s504 = scalar_select %p503, %s502, 7
        %s505 = smul.addr %s504, 16
        %s506 = smul.addr %s505, 8
        %s507 = scalar_lea.vmem %s0, %s506
        %s508 = smul.u32 8, %s34
        %s509 = smul.u32 8, %s34
        %p510 = scmp.lt.s32.totalorder %s509, 7
        %s511 = scalar_select %p510, %s509, 7
        %s512 = smul.addr %s511, 16
        %s513 = smul.addr %s512, 8
        %s514 = scalar_lea.vmem %s1, %s513
        %s515 = smul.u32 8, %s34
        %p516 = scmp.lt.s32.totalorder %s35, 7
        %s517 = scalar_select %p516, %s35, 7
        %p518 = scmp.lt.s32.totalorder %s34, 0
        %s519 = scalar_select %p518, %s34, 0
        %s520 = sadd.s32 %s519, %s517
        %s521 = smul.addr %s520, 8
        %s522 = scalar_lea.vmem %s2, %s521
        %p523 = scmp.lt.s32.totalorder %s34, 0
        %s524 = scalar_select %p523, %s34, 0
        %s525 = smul.addr %s524, 8
        %s526 = scalar_lea.vmem %s3, %s525
        %p527 = scmp.lt.s32.totalorder %s34, 0
        %s528 = scalar_select %p527, %s34, 0
        %s529 = smul.addr %s528, 8
        %s530 = scalar_lea.vmem %s4, %s529
        %p531 = scmp.eq.s32.totalorder %s35, 0
        // Predicated region
        $region65: #{tpu_custom_call.1} parent=63 // pred_check
          %p532 = pneg %p531
        $region66: #{tpu_custom_call.1} parent=63 // pred_check_branch
          %534 = sbr.rel (%p532) target = $region68
        $region67: #{tpu_custom_call.1} parent=63 // pred_region
          %v535 = vld [vmem:[%s526] sm:$0xff]
          %vm536 = vcmask 261120
          %537 = vst.msk [vmem:[#allocation2] sm:$0xff] %vm536, %v535
          %v538 = vld [vmem:[%s530] sm:$0xff]
          %539 = vst.msk [vmem:[#allocation3] sm:$0xff] %vm536, %v538
        $region68: #{tpu_custom_call.1} parent=63 // pred_fallthru
          _
        %v540 = vld [vmem:[#allocation2] sm:$0xff]
        %v541 = vld [vmem:[#allocation3] sm:$0xff]
        %v542 = vld [vmem:[%s5] sm:$0xff]
        %v543 = vld [vmem:[%s5 + $0x8] sm:$0xff]
        %v544 = vld [vmem:[%s5 + $0x10] sm:$0xff]
        %v545 = vld [vmem:[%s5 + $0x18] sm:$0xff]
        %vm546 = vcmask 261120
        %v548 = vsel %vm546, %v540, 0
        %550 = vmatpush.msra.mxu0 0.0
        %551 = vmatpush.msra.mxu0 0.0
        %552 = vmatpush.msra.mxu0 0.0
        %553 = vmatpush.msra.mxu0 0.0
        %554 = vmatpush.msra.mxu0 0.0
        %555 = vmatpush.msra.mxu0 0.0
        %556 = vmatpush.msra.mxu0 0.0
        %557 = vmatpush.msra.mxu0 0.0
        %558 = vmatpush.msra.mxu0 0.0
        %559 = vmatpush.msra.mxu0 0.0
        %560 = vmatpush.msra.mxu0 0.0
        %561 = vmatpush.msra.mxu0 0.0
        %562 = vmatpush.msra.mxu0 %v545
        %563 = vmatpush.msra.mxu0 %v544
        %564 = vmatpush.msra.mxu0 %v543
        %565 = vmatpush.msra.mxu0 %v542
        %566 = vmatmul.f32.gmra.mxu0 %v548
        %v567 = vpop.f32.mrf.mxu0
        %v568 = vadd.f32 0.0, %v567
        %569 = vdwg.mxu0
        %v570 = vld [vmem:[%s507] sm:$0xff]
        %v571 = vld [vmem:[%s507 + $0x8] sm:$0xff]
        %v572 = vld [vmem:[%s507 + $0x10] sm:$0xff]
        %v573 = vld [vmem:[%s507 + $0x18] sm:$0xff]
        %v574 = vld [vmem:[%s507 + $0x20] sm:$0xff]
        %v575 = vld [vmem:[%s507 + $0x28] sm:$0xff]
        %v576 = vld [vmem:[%s507 + $0x30] sm:$0xff]
        %v577 = vld [vmem:[%s507 + $0x38] sm:$0xff]
        %v578 = vld [vmem:[%s507 + $0x40] sm:$0xff]
        %v579 = vld [vmem:[%s507 + $0x48] sm:$0xff]
        %v580 = vld [vmem:[%s507 + $0x50] sm:$0xff]
        %v581 = vld [vmem:[%s507 + $0x58] sm:$0xff]
        %v582 = vld [vmem:[%s507 + $0x60] sm:$0xff]
        %v583 = vld [vmem:[%s507 + $0x68] sm:$0xff]
        %v584 = vld [vmem:[%s507 + $0x70] sm:$0xff]
        %v585 = vld [vmem:[%s507 + $0x78] sm:$0xff]
        %v586 = vld [vmem:[%s507 + $0x80] sm:$0xff]
        %v587 = vld [vmem:[%s507 + $0x88] sm:$0xff]
        %v588 = vld [vmem:[%s507 + $0x90] sm:$0xff]
        %v589 = vld [vmem:[%s507 + $0x98] sm:$0xff]
        %v590 = vld [vmem:[%s507 + $0xa0] sm:$0xff]
        %v591 = vld [vmem:[%s507 + $0xa8] sm:$0xff]
        %v592 = vld [vmem:[%s507 + $0xb0] sm:$0xff]
        %v593 = vld [vmem:[%s507 + $0xb8] sm:$0xff]
        %v594 = vld [vmem:[%s507 + $0xc0] sm:$0xff]
        %v595 = vld [vmem:[%s507 + $0xc8] sm:$0xff]
        %v596 = vld [vmem:[%s507 + $0xd0] sm:$0xff]
        %v597 = vld [vmem:[%s507 + $0xd8] sm:$0xff]
        %v598 = vld [vmem:[%s507 + $0xe0] sm:$0xff]
        %v599 = vld [vmem:[%s507 + $0xe8] sm:$0xff]
        %v600 = vld [vmem:[%s507 + $0xf0] sm:$0xff]
        %v601 = vld [vmem:[%s507 + $0xf8] sm:$0xff]
        %v602 = vld [vmem:[%s507 + $0x100] sm:$0xff]
        %v603 = vld [vmem:[%s507 + $0x108] sm:$0xff]
        %v604 = vld [vmem:[%s507 + $0x110] sm:$0xff]
        %v605 = vld [vmem:[%s507 + $0x118] sm:$0xff]
        %v606 = vld [vmem:[%s507 + $0x120] sm:$0xff]
        %v607 = vld [vmem:[%s507 + $0x128] sm:$0xff]
        %v608 = vld [vmem:[%s507 + $0x130] sm:$0xff]
        %v609 = vld [vmem:[%s507 + $0x138] sm:$0xff]
        %v610 = vld [vmem:[%s507 + $0x140] sm:$0xff]
        %v611 = vld [vmem:[%s507 + $0x148] sm:$0xff]
        %v612 = vld [vmem:[%s507 + $0x150] sm:$0xff]
        %v613 = vld [vmem:[%s507 + $0x158] sm:$0xff]
        %v614 = vld [vmem:[%s507 + $0x160] sm:$0xff]
        %v615 = vld [vmem:[%s507 + $0x168] sm:$0xff]
        %v616 = vld [vmem:[%s507 + $0x170] sm:$0xff]
        %v617 = vld [vmem:[%s507 + $0x178] sm:$0xff]
        %v618 = vld [vmem:[%s507 + $0x180] sm:$0xff]
        %v619 = vld [vmem:[%s507 + $0x188] sm:$0xff]
        %v620 = vld [vmem:[%s507 + $0x190] sm:$0xff]
        %v621 = vld [vmem:[%s507 + $0x198] sm:$0xff]
        %v622 = vld [vmem:[%s507 + $0x1a0] sm:$0xff]
        %v623 = vld [vmem:[%s507 + $0x1a8] sm:$0xff]
        %v624 = vld [vmem:[%s507 + $0x1b0] sm:$0xff]
        %v625 = vld [vmem:[%s507 + $0x1b8] sm:$0xff]
        %v626 = vld [vmem:[%s507 + $0x1c0] sm:$0xff]
        %v627 = vld [vmem:[%s507 + $0x1c8] sm:$0xff]
        %v628 = vld [vmem:[%s507 + $0x1d0] sm:$0xff]
        %v629 = vld [vmem:[%s507 + $0x1d8] sm:$0xff]
        %v630 = vld [vmem:[%s507 + $0x1e0] sm:$0xff]
        %v631 = vld [vmem:[%s507 + $0x1e8] sm:$0xff]
        %v632 = vld [vmem:[%s507 + $0x1f0] sm:$0xff]
        %v633 = vld [vmem:[%s507 + $0x1f8] sm:$0xff]
        %v634 = vld [vmem:[%s507 + $0x200] sm:$0xff]
        %v635 = vld [vmem:[%s507 + $0x208] sm:$0xff]
        %v636 = vld [vmem:[%s507 + $0x210] sm:$0xff]
        %v637 = vld [vmem:[%s507 + $0x218] sm:$0xff]
        %v638 = vld [vmem:[%s507 + $0x220] sm:$0xff]
        %v639 = vld [vmem:[%s507 + $0x228] sm:$0xff]
        %v640 = vld [vmem:[%s507 + $0x230] sm:$0xff]
        %v641 = vld [vmem:[%s507 + $0x238] sm:$0xff]
        %v642 = vld [vmem:[%s507 + $0x240] sm:$0xff]
        %v643 = vld [vmem:[%s507 + $0x248] sm:$0xff]
        %v644 = vld [vmem:[%s507 + $0x250] sm:$0xff]
        %v645 = vld [vmem:[%s507 + $0x258] sm:$0xff]
        %v646 = vld [vmem:[%s507 + $0x260] sm:$0xff]
        %v647 = vld [vmem:[%s507 + $0x268] sm:$0xff]
        %v648 = vld [vmem:[%s507 + $0x270] sm:$0xff]
        %v649 = vld [vmem:[%s507 + $0x278] sm:$0xff]
        %v650 = vld [vmem:[%s507 + $0x280] sm:$0xff]
        %v651 = vld [vmem:[%s507 + $0x288] sm:$0xff]
        %v652 = vld [vmem:[%s507 + $0x290] sm:$0xff]
        %v653 = vld [vmem:[%s507 + $0x298] sm:$0xff]
        %v654 = vld [vmem:[%s507 + $0x2a0] sm:$0xff]
        %v655 = vld [vmem:[%s507 + $0x2a8] sm:$0xff]
        %v656 = vld [vmem:[%s507 + $0x2b0] sm:$0xff]
        %v657 = vld [vmem:[%s507 + $0x2b8] sm:$0xff]
        %v658 = vld [vmem:[%s507 + $0x2c0] sm:$0xff]
        %v659 = vld [vmem:[%s507 + $0x2c8] sm:$0xff]
        %v660 = vld [vmem:[%s507 + $0x2d0] sm:$0xff]
        %v661 = vld [vmem:[%s507 + $0x2d8] sm:$0xff]
        %v662 = vld [vmem:[%s507 + $0x2e0] sm:$0xff]
        %v663 = vld [vmem:[%s507 + $0x2e8] sm:$0xff]
        %v664 = vld [vmem:[%s507 + $0x2f0] sm:$0xff]
        %v665 = vld [vmem:[%s507 + $0x2f8] sm:$0xff]
        %v666 = vld [vmem:[%s507 + $0x300] sm:$0xff]
        %v667 = vld [vmem:[%s507 + $0x308] sm:$0xff]
        %v668 = vld [vmem:[%s507 + $0x310] sm:$0xff]
        %v669 = vld [vmem:[%s507 + $0x318] sm:$0xff]
        %v670 = vld [vmem:[%s507 + $0x320] sm:$0xff]
        %v671 = vld [vmem:[%s507 + $0x328] sm:$0xff]
        %v672 = vld [vmem:[%s507 + $0x330] sm:$0xff]
        %v673 = vld [vmem:[%s507 + $0x338] sm:$0xff]
        %v674 = vld [vmem:[%s507 + $0x340] sm:$0xff]
        %v675 = vld [vmem:[%s507 + $0x348] sm:$0xff]
        %v676 = vld [vmem:[%s507 + $0x350] sm:$0xff]
        %v677 = vld [vmem:[%s507 + $0x358] sm:$0xff]
        %v678 = vld [vmem:[%s507 + $0x360] sm:$0xff]
        %v679 = vld [vmem:[%s507 + $0x368] sm:$0xff]
        %v680 = vld [vmem:[%s507 + $0x370] sm:$0xff]
        %v681 = vld [vmem:[%s507 + $0x378] sm:$0xff]
        %v682 = vld [vmem:[%s507 + $0x380] sm:$0xff]
        %v683 = vld [vmem:[%s507 + $0x388] sm:$0xff]
        %v684 = vld [vmem:[%s507 + $0x390] sm:$0xff]
        %v685 = vld [vmem:[%s507 + $0x398] sm:$0xff]
        %v686 = vld [vmem:[%s507 + $0x3a0] sm:$0xff]
        %v687 = vld [vmem:[%s507 + $0x3a8] sm:$0xff]
        %v688 = vld [vmem:[%s507 + $0x3b0] sm:$0xff]
        %v689 = vld [vmem:[%s507 + $0x3b8] sm:$0xff]
        %v690 = vld [vmem:[%s507 + $0x3c0] sm:$0xff]
        %v691 = vld [vmem:[%s507 + $0x3c8] sm:$0xff]
        %v692 = vld [vmem:[%s507 + $0x3d0] sm:$0xff]
        %v693 = vld [vmem:[%s507 + $0x3d8] sm:$0xff]
        %v694 = vld [vmem:[%s507 + $0x3e0] sm:$0xff]
        %v695 = vld [vmem:[%s507 + $0x3e8] sm:$0xff]
        %v696 = vld [vmem:[%s507 + $0x3f0] sm:$0xff]
        %v697 = vld [vmem:[%s507 + $0x3f8] sm:$0xff]
        %v699 = vrot.slane %v568, 1
        %v700 = vrot.slane %v568, 2
        %v701 = vrot.slane %v568, 3
        %v702 = vrot.slane %v568, 4
        %v703 = vrot.slane %v568, 5
        %v704 = vrot.slane %v568, 6
        %v705 = vrot.slane %v568, 7
        %v706 = vperm.slane %v568, 0
        %v707 = vperm.slane %v699, 0
        %v708 = vperm.slane %v700, 0
        %v709 = vperm.slane %v701, 0
        %v710 = vperm.slane %v702, 0
        %v711 = vperm.slane %v703, 0
        %v712 = vperm.slane %v704, 0
        %v713 = vperm.slane %v705, 0
        %v722 = vadd.f32 %v570, %v706
        %v723 = vadd.f32 %v571, %v706
        %v724 = vadd.f32 %v572, %v706
        %v725 = vadd.f32 %v573, %v706
        %v726 = vadd.f32 %v574, %v706
        %v727 = vadd.f32 %v575, %v706
        %v728 = vadd.f32 %v576, %v706
        %v729 = vadd.f32 %v577, %v706
        %v730 = vadd.f32 %v578, %v706
        %v731 = vadd.f32 %v579, %v706
        %v732 = vadd.f32 %v580, %v706
        %v733 = vadd.f32 %v581, %v706
        %v734 = vadd.f32 %v582, %v706
        %v735 = vadd.f32 %v583, %v706
        %v736 = vadd.f32 %v584, %v706
        %v737 = vadd.f32 %v585, %v706
        %v738 = vadd.f32 %v586, %v707
        %v739 = vadd.f32 %v587, %v707
        %v740 = vadd.f32 %v588, %v707
        %v741 = vadd.f32 %v589, %v707
        %v742 = vadd.f32 %v590, %v707
        %v743 = vadd.f32 %v591, %v707
        %v744 = vadd.f32 %v592, %v707
        %v745 = vadd.f32 %v593, %v707
        %v746 = vadd.f32 %v594, %v707
        %v747 = vadd.f32 %v595, %v707
        %v748 = vadd.f32 %v596, %v707
        %v749 = vadd.f32 %v597, %v707
        %v750 = vadd.f32 %v598, %v707
        %v751 = vadd.f32 %v599, %v707
        %v752 = vadd.f32 %v600, %v707
        %v753 = vadd.f32 %v601, %v707
        %v754 = vadd.f32 %v602, %v708
        %v755 = vadd.f32 %v603, %v708
        %v756 = vadd.f32 %v604, %v708
        %v757 = vadd.f32 %v605, %v708
        %v758 = vadd.f32 %v606, %v708
        %v759 = vadd.f32 %v607, %v708
        %v760 = vadd.f32 %v608, %v708
        %v761 = vadd.f32 %v609, %v708
        %v762 = vadd.f32 %v610, %v708
        %v763 = vadd.f32 %v611, %v708
        %v764 = vadd.f32 %v612, %v708
        %v765 = vadd.f32 %v613, %v708
        %v766 = vadd.f32 %v614, %v708
        %v767 = vadd.f32 %v615, %v708
        %v768 = vadd.f32 %v616, %v708
        %v769 = vadd.f32 %v617, %v708
        %v770 = vadd.f32 %v618, %v709
        %v771 = vadd.f32 %v619, %v709
        %v772 = vadd.f32 %v620, %v709
        %v773 = vadd.f32 %v621, %v709
        %v774 = vadd.f32 %v622, %v709
        %v775 = vadd.f32 %v623, %v709
        %v776 = vadd.f32 %v624, %v709
        %v777 = vadd.f32 %v625, %v709
        %v778 = vadd.f32 %v626, %v709
        %v779 = vadd.f32 %v627, %v709
        %v780 = vadd.f32 %v628, %v709
        %v781 = vadd.f32 %v629, %v709
        %v782 = vadd.f32 %v630, %v709
        %v783 = vadd.f32 %v631, %v709
        %v784 = vadd.f32 %v632, %v709
        %v785 = vadd.f32 %v633, %v709
        %v786 = vadd.f32 %v634, %v710
        %v787 = vadd.f32 %v635, %v710
        %v788 = vadd.f32 %v636, %v710
        %v789 = vadd.f32 %v637, %v710
        %v790 = vadd.f32 %v638, %v710
        %v791 = vadd.f32 %v639, %v710
        %v792 = vadd.f32 %v640, %v710
        %v793 = vadd.f32 %v641, %v710
        %v794 = vadd.f32 %v642, %v710
        %v795 = vadd.f32 %v643, %v710
        %v796 = vadd.f32 %v644, %v710
        %v797 = vadd.f32 %v645, %v710
        %v798 = vadd.f32 %v646, %v710
        %v799 = vadd.f32 %v647, %v710
        %v800 = vadd.f32 %v648, %v710
        %v801 = vadd.f32 %v649, %v710
        %v802 = vadd.f32 %v650, %v711
        %v803 = vadd.f32 %v651, %v711
        %v804 = vadd.f32 %v652, %v711
        %v805 = vadd.f32 %v653, %v711
        %v806 = vadd.f32 %v654, %v711
        %v807 = vadd.f32 %v655, %v711
        %v808 = vadd.f32 %v656, %v711
        %v809 = vadd.f32 %v657, %v711
        %v810 = vadd.f32 %v658, %v711
        %v811 = vadd.f32 %v659, %v711
        %v812 = vadd.f32 %v660, %v711
        %v813 = vadd.f32 %v661, %v711
        %v814 = vadd.f32 %v662, %v711
        %v815 = vadd.f32 %v663, %v711
        %v816 = vadd.f32 %v664, %v711
        %v817 = vadd.f32 %v665, %v711
        %v818 = vadd.f32 %v666, %v712
        %v819 = vadd.f32 %v667, %v712
        %v820 = vadd.f32 %v668, %v712
        %v821 = vadd.f32 %v669, %v712
        %v822 = vadd.f32 %v670, %v712
        %v823 = vadd.f32 %v671, %v712
        %v824 = vadd.f32 %v672, %v712
        %v825 = vadd.f32 %v673, %v712
        %v826 = vadd.f32 %v674, %v712
        %v827 = vadd.f32 %v675, %v712
        %v828 = vadd.f32 %v676, %v712
        %v829 = vadd.f32 %v677, %v712
        %v830 = vadd.f32 %v678, %v712
        %v831 = vadd.f32 %v679, %v712
        %v832 = vadd.f32 %v680, %v712
        %v833 = vadd.f32 %v681, %v712
        %v834 = vadd.f32 %v682, %v713
        %v835 = vadd.f32 %v683, %v713
        %v836 = vadd.f32 %v684, %v713
        %v837 = vadd.f32 %v685, %v713
        %v838 = vadd.f32 %v686, %v713
        %v839 = vadd.f32 %v687, %v713
        %v840 = vadd.f32 %v688, %v713
        %v841 = vadd.f32 %v689, %v713
        %v842 = vadd.f32 %v690, %v713
        %v843 = vadd.f32 %v691, %v713
        %v844 = vadd.f32 %v692, %v713
        %v845 = vadd.f32 %v693, %v713
        %v846 = vadd.f32 %v694, %v713
        %v847 = vadd.f32 %v695, %v713
        %v848 = vadd.f32 %v696, %v713
        %v849 = vadd.f32 %v697, %v713
        %v850 = vtanh.pop %v722
        %v851 = vtanh.pop %v723
        %v852 = vtanh.pop %v724
        %v853 = vtanh.pop %v725
        %v854 = vtanh.pop %v726
        %v855 = vtanh.pop %v727
        %v856 = vtanh.pop %v728
        %v857 = vtanh.pop %v729
        %v858 = vtanh.pop %v730
        %v859 = vtanh.pop %v731
        %v860 = vtanh.pop %v732
        %v861 = vtanh.pop %v733
        %v862 = vtanh.pop %v734
        %v863 = vtanh.pop %v735
        %v864 = vtanh.pop %v736
        %v865 = vtanh.pop %v737
        %v866 = vtanh.pop %v738
        %v867 = vtanh.pop %v739
        %v868 = vtanh.pop %v740
        %v869 = vtanh.pop %v741
        %v870 = vtanh.pop %v742
        %v871 = vtanh.pop %v743
        %v872 = vtanh.pop %v744
        %v873 = vtanh.pop %v745
        %v874 = vtanh.pop %v746
        %v875 = vtanh.pop %v747
        %v876 = vtanh.pop %v748
        %v877 = vtanh.pop %v749
        %v878 = vtanh.pop %v750
        %v879 = vtanh.pop %v751
        %v880 = vtanh.pop %v752
        %v881 = vtanh.pop %v753
        %v882 = vtanh.pop %v754
        %v883 = vtanh.pop %v755
        %v884 = vtanh.pop %v756
        %v885 = vtanh.pop %v757
        %v886 = vtanh.pop %v758
        %v887 = vtanh.pop %v759
        %v888 = vtanh.pop %v760
        %v889 = vtanh.pop %v761
        %v890 = vtanh.pop %v762
        %v891 = vtanh.pop %v763
        %v892 = vtanh.pop %v764
        %v893 = vtanh.pop %v765
        %v894 = vtanh.pop %v766
        %v895 = vtanh.pop %v767
        %v896 = vtanh.pop %v768
        %v897 = vtanh.pop %v769
        %v898 = vtanh.pop %v770
        %v899 = vtanh.pop %v771
        %v900 = vtanh.pop %v772
        %v901 = vtanh.pop %v773
        %v902 = vtanh.pop %v774
        %v903 = vtanh.pop %v775
        %v904 = vtanh.pop %v776
        %v905 = vtanh.pop %v777
        %v906 = vtanh.pop %v778
        %v907 = vtanh.pop %v779
        %v908 = vtanh.pop %v780
        %v909 = vtanh.pop %v781
        %v910 = vtanh.pop %v782
        %v911 = vtanh.pop %v783
        %v912 = vtanh.pop %v784
        %v913 = vtanh.pop %v785
        %v914 = vtanh.pop %v786
        %v915 = vtanh.pop %v787
        %v916 = vtanh.pop %v788
        %v917 = vtanh.pop %v789
        %v918 = vtanh.pop %v790
        %v919 = vtanh.pop %v791
        %v920 = vtanh.pop %v792
        %v921 = vtanh.pop %v793
        %v922 = vtanh.pop %v794
        %v923 = vtanh.pop %v795
        %v924 = vtanh.pop %v796
        %v925 = vtanh.pop %v797
        %v926 = vtanh.pop %v798
        %v927 = vtanh.pop %v799
        %v928 = vtanh.pop %v800
        %v929 = vtanh.pop %v801
        %v930 = vtanh.pop %v802
        %v931 = vtanh.pop %v803
        %v932 = vtanh.pop %v804
        %v933 = vtanh.pop %v805
        %v934 = vtanh.pop %v806
        %v935 = vtanh.pop %v807
        %v936 = vtanh.pop %v808
        %v937 = vtanh.pop %v809
        %v938 = vtanh.pop %v810
        %v939 = vtanh.pop %v811
        %v940 = vtanh.pop %v812
        %v941 = vtanh.pop %v813
        %v942 = vtanh.pop %v814
        %v943 = vtanh.pop %v815
        %v944 = vtanh.pop %v816
        %v945 = vtanh.pop %v817
        %v946 = vtanh.pop %v818
        %v947 = vtanh.pop %v819
        %v948 = vtanh.pop %v820
        %v949 = vtanh.pop %v821
        %v950 = vtanh.pop %v822
        %v951 = vtanh.pop %v823
        %v952 = vtanh.pop %v824
        %v953 = vtanh.pop %v825
        %v954 = vtanh.pop %v826
        %v955 = vtanh.pop %v827
        %v956 = vtanh.pop %v828
        %v957 = vtanh.pop %v829
        %v958 = vtanh.pop %v830
        %v959 = vtanh.pop %v831
        %v960 = vtanh.pop %v832
        %v961 = vtanh.pop %v833
        %v962 = vtanh.pop %v834
        %v963 = vtanh.pop %v835
        %v964 = vtanh.pop %v836
        %v965 = vtanh.pop %v837
        %v966 = vtanh.pop %v838
        %v967 = vtanh.pop %v839
        %v968 = vtanh.pop %v840
        %v969 = vtanh.pop %v841
        %v970 = vtanh.pop %v842
        %v971 = vtanh.pop %v843
        %v972 = vtanh.pop %v844
        %v973 = vtanh.pop %v845
        %v974 = vtanh.pop %v846
        %v975 = vtanh.pop %v847
        %v976 = vtanh.pop %v848
        %v977 = vtanh.pop %v849
        %v978 = vld [vmem:[%s6] sm:$0x1]
        %v980 = vperm.slane %v978, 0
        %v982 = vmul.f32 %v850, %v980
        %v983 = vmul.f32 %v851, %v980
        %v984 = vmul.f32 %v852, %v980
        %v985 = vmul.f32 %v853, %v980
        %v986 = vmul.f32 %v854, %v980
        %v987 = vmul.f32 %v855, %v980
        %v988 = vmul.f32 %v856, %v980
        %v989 = vmul.f32 %v857, %v980
        %v990 = vmul.f32 %v858, %v980
        %v991 = vmul.f32 %v859, %v980
        %v992 = vmul.f32 %v860, %v980
        %v993 = vmul.f32 %v861, %v980
        %v994 = vmul.f32 %v862, %v980
        %v995 = vmul.f32 %v863, %v980
        %v996 = vmul.f32 %v864, %v980
        %v997 = vmul.f32 %v865, %v980
        %v998 = vmul.f32 %v866, %v980
        %v999 = vmul.f32 %v867, %v980
        %v1000 = vmul.f32 %v868, %v980
        %v1001 = vmul.f32 %v869, %v980
        %v1002 = vmul.f32 %v870, %v980
        %v1003 = vmul.f32 %v871, %v980
        %v1004 = vmul.f32 %v872, %v980
        %v1005 = vmul.f32 %v873, %v980
        %v1006 = vmul.f32 %v874, %v980
        %v1007 = vmul.f32 %v875, %v980
        %v1008 = vmul.f32 %v876, %v980
        %v1009 = vmul.f32 %v877, %v980
        %v1010 = vmul.f32 %v878, %v980
        %v1011 = vmul.f32 %v879, %v980
        %v1012 = vmul.f32 %v880, %v980
        %v1013 = vmul.f32 %v881, %v980
        %v1014 = vmul.f32 %v882, %v980
        %v1015 = vmul.f32 %v883, %v980
        %v1016 = vmul.f32 %v884, %v980
        %v1017 = vmul.f32 %v885, %v980
        %v1018 = vmul.f32 %v886, %v980
        %v1019 = vmul.f32 %v887, %v980
        %v1020 = vmul.f32 %v888, %v980
        %v1021 = vmul.f32 %v889, %v980
        %v1022 = vmul.f32 %v890, %v980
        %v1023 = vmul.f32 %v891, %v980
        %v1024 = vmul.f32 %v892, %v980
        %v1025 = vmul.f32 %v893, %v980
        %v1026 = vmul.f32 %v894, %v980
        %v1027 = vmul.f32 %v895, %v980
        %v1028 = vmul.f32 %v896, %v980
        %v1029 = vmul.f32 %v897, %v980
        %v1030 = vmul.f32 %v898, %v980
        %v1031 = vmul.f32 %v899, %v980
        %v1032 = vmul.f32 %v900, %v980
        %v1033 = vmul.f32 %v901, %v980
        %v1034 = vmul.f32 %v902, %v980
        %v1035 = vmul.f32 %v903, %v980
        %v1036 = vmul.f32 %v904, %v980
        %v1037 = vmul.f32 %v905, %v980
        %v1038 = vmul.f32 %v906, %v980
        %v1039 = vmul.f32 %v907, %v980
        %v1040 = vmul.f32 %v908, %v980
        %v1041 = vmul.f32 %v909, %v980
        %v1042 = vmul.f32 %v910, %v980
        %v1043 = vmul.f32 %v911, %v980
        %v1044 = vmul.f32 %v912, %v980
        %v1045 = vmul.f32 %v913, %v980
        %v1046 = vmul.f32 %v914, %v980
        %v1047 = vmul.f32 %v915, %v980
        %v1048 = vmul.f32 %v916, %v980
        %v1049 = vmul.f32 %v917, %v980
        %v1050 = vmul.f32 %v918, %v980
        %v1051 = vmul.f32 %v919, %v980
        %v1052 = vmul.f32 %v920, %v980
        %v1053 = vmul.f32 %v921, %v980
        %v1054 = vmul.f32 %v922, %v980
        %v1055 = vmul.f32 %v923, %v980
        %v1056 = vmul.f32 %v924, %v980
        %v1057 = vmul.f32 %v925, %v980
        %v1058 = vmul.f32 %v926, %v980
        %v1059 = vmul.f32 %v927, %v980
        %v1060 = vmul.f32 %v928, %v980
        %v1061 = vmul.f32 %v929, %v980
        %v1062 = vmul.f32 %v930, %v980
        %v1063 = vmul.f32 %v931, %v980
        %v1064 = vmul.f32 %v932, %v980
        %v1065 = vmul.f32 %v933, %v980
        %v1066 = vmul.f32 %v934, %v980
        %v1067 = vmul.f32 %v935, %v980
        %v1068 = vmul.f32 %v936, %v980
        %v1069 = vmul.f32 %v937, %v980
        %v1070 = vmul.f32 %v938, %v980
        %v1071 = vmul.f32 %v939, %v980
        %v1072 = vmul.f32 %v940, %v980
        %v1073 = vmul.f32 %v941, %v980
        %v1074 = vmul.f32 %v942, %v980
        %v1075 = vmul.f32 %v943, %v980
        %v1076 = vmul.f32 %v944, %v980
        %v1077 = vmul.f32 %v945, %v980
        %v1078 = vmul.f32 %v946, %v980
        %v1079 = vmul.f32 %v947, %v980
        %v1080 = vmul.f32 %v948, %v980
        %v1081 = vmul.f32 %v949, %v980
        %v1082 = vmul.f32 %v950, %v980
        %v1083 = vmul.f32 %v951, %v980
        %v1084 = vmul.f32 %v952, %v980
        %v1085 = vmul.f32 %v953, %v980
        %v1086 = vmul.f32 %v954, %v980
        %v1087 = vmul.f32 %v955, %v980
        %v1088 = vmul.f32 %v956, %v980
        %v1089 = vmul.f32 %v957, %v980
        %v1090 = vmul.f32 %v958, %v980
        %v1091 = vmul.f32 %v959, %v980
        %v1092 = vmul.f32 %v960, %v980
        %v1093 = vmul.f32 %v961, %v980
        %v1094 = vmul.f32 %v962, %v980
        %v1095 = vmul.f32 %v963, %v980
        %v1096 = vmul.f32 %v964, %v980
        %v1097 = vmul.f32 %v965, %v980
        %v1098 = vmul.f32 %v966, %v980
        %v1099 = vmul.f32 %v967, %v980
        %v1100 = vmul.f32 %v968, %v980
        %v1101 = vmul.f32 %v969, %v980
        %v1102 = vmul.f32 %v970, %v980
        %v1103 = vmul.f32 %v971, %v980
        %v1104 = vmul.f32 %v972, %v980
        %v1105 = vmul.f32 %v973, %v980
        %v1106 = vmul.f32 %v974, %v980
        %v1107 = vmul.f32 %v975, %v980
        %v1108 = vmul.f32 %v976, %v980
        %v1109 = vmul.f32 %v977, %v980
        %v1110 = vsel %vm546, %v982, 0.0
        %1111 = vadd.xlane.f32.xlu0 %v1110
        %v1112 = vpop.xlane.xlu0 %1111
        %v1113 = vsel %vm546, %v983, 0.0
        %1114 = vadd.xlane.f32.xlu0 %v1113
        %v1115 = vpop.xlane.xlu0 %1114
        %v1116 = vsel %vm546, %v984, 0.0
        %1117 = vadd.xlane.f32.xlu0 %v1116
        %v1118 = vpop.xlane.xlu0 %1117
        %v1119 = vsel %vm546, %v985, 0.0
        %1120 = vadd.xlane.f32.xlu0 %v1119
        %v1121 = vpop.xlane.xlu0 %1120
        %v1122 = vsel %vm546, %v986, 0.0
        %1123 = vadd.xlane.f32.xlu0 %v1122
        %v1124 = vpop.xlane.xlu0 %1123
        %v1125 = vsel %vm546, %v987, 0.0
        %1126 = vadd.xlane.f32.xlu0 %v1125
        %v1127 = vpop.xlane.xlu0 %1126
        %v1128 = vsel %vm546, %v988, 0.0
        %1129 = vadd.xlane.f32.xlu0 %v1128
        %v1130 = vpop.xlane.xlu0 %1129
        %v1131 = vsel %vm546, %v989, 0.0
        %1132 = vadd.xlane.f32.xlu0 %v1131
        %v1133 = vpop.xlane.xlu0 %1132
        %v1134 = vsel %vm546, %v990, 0.0
        %1135 = vadd.xlane.f32.xlu0 %v1134
        %v1136 = vpop.xlane.xlu0 %1135
        %v1137 = vsel %vm546, %v991, 0.0
        %1138 = vadd.xlane.f32.xlu0 %v1137
        %v1139 = vpop.xlane.xlu0 %1138
        %v1140 = vsel %vm546, %v992, 0.0
        %1141 = vadd.xlane.f32.xlu0 %v1140
        %v1142 = vpop.xlane.xlu0 %1141
        %v1143 = vsel %vm546, %v993, 0.0
        %1144 = vadd.xlane.f32.xlu0 %v1143
        %v1145 = vpop.xlane.xlu0 %1144
        %v1146 = vsel %vm546, %v994, 0.0
        %1147 = vadd.xlane.f32.xlu0 %v1146
        %v1148 = vpop.xlane.xlu0 %1147
        %v1149 = vsel %vm546, %v995, 0.0
        %1150 = vadd.xlane.f32.xlu0 %v1149
        %v1151 = vpop.xlane.xlu0 %1150
        %v1152 = vsel %vm546, %v996, 0.0
        %1153 = vadd.xlane.f32.xlu0 %v1152
        %v1154 = vpop.xlane.xlu0 %1153
        %v1155 = vsel %vm546, %v997, 0.0
        %1156 = vadd.xlane.f32.xlu0 %v1155
        %v1157 = vpop.xlane.xlu0 %1156
        %v1158 = vsel %vm546, %v998, 0.0
        %1159 = vadd.xlane.f32.xlu0 %v1158
        %v1160 = vpop.xlane.xlu0 %1159
        %v1161 = vsel %vm546, %v999, 0.0
        %1162 = vadd.xlane.f32.xlu0 %v1161
        %v1163 = vpop.xlane.xlu0 %1162
        %v1164 = vsel %vm546, %v1000, 0.0
        %1165 = vadd.xlane.f32.xlu0 %v1164
        %v1166 = vpop.xlane.xlu0 %1165
        %v1167 = vsel %vm546, %v1001, 0.0
        %1168 = vadd.xlane.f32.xlu0 %v1167
        %v1169 = vpop.xlane.xlu0 %1168
        %v1170 = vsel %vm546, %v1002, 0.0
        %1171 = vadd.xlane.f32.xlu0 %v1170
        %v1172 = vpop.xlane.xlu0 %1171
        %v1173 = vsel %vm546, %v1003, 0.0
        %1174 = vadd.xlane.f32.xlu0 %v1173
        %v1175 = vpop.xlane.xlu0 %1174
        %v1176 = vsel %vm546, %v1004, 0.0
        %1177 = vadd.xlane.f32.xlu0 %v1176
        %v1178 = vpop.xlane.xlu0 %1177
        %v1179 = vsel %vm546, %v1005, 0.0
        %1180 = vadd.xlane.f32.xlu0 %v1179
        %v1181 = vpop.xlane.xlu0 %1180
        %v1182 = vsel %vm546, %v1006, 0.0
        %1183 = vadd.xlane.f32.xlu0 %v1182
        %v1184 = vpop.xlane.xlu0 %1183
        %v1185 = vsel %vm546, %v1007, 0.0
        %1186 = vadd.xlane.f32.xlu0 %v1185
        %v1187 = vpop.xlane.xlu0 %1186
        %v1188 = vsel %vm546, %v1008, 0.0
        %1189 = vadd.xlane.f32.xlu0 %v1188
        %v1190 = vpop.xlane.xlu0 %1189
        %v1191 = vsel %vm546, %v1009, 0.0
        %1192 = vadd.xlane.f32.xlu0 %v1191
        %v1193 = vpop.xlane.xlu0 %1192
        %v1194 = vsel %vm546, %v1010, 0.0
        %1195 = vadd.xlane.f32.xlu0 %v1194
        %v1196 = vpop.xlane.xlu0 %1195
        %v1197 = vsel %vm546, %v1011, 0.0
        %1198 = vadd.xlane.f32.xlu0 %v1197
        %v1199 = vpop.xlane.xlu0 %1198
        %v1200 = vsel %vm546, %v1012, 0.0
        %1201 = vadd.xlane.f32.xlu0 %v1200
        %v1202 = vpop.xlane.xlu0 %1201
        %v1203 = vsel %vm546, %v1013, 0.0
        %1204 = vadd.xlane.f32.xlu0 %v1203
        %v1205 = vpop.xlane.xlu0 %1204
        %v1206 = vsel %vm546, %v1014, 0.0
        %1207 = vadd.xlane.f32.xlu0 %v1206
        %v1208 = vpop.xlane.xlu0 %1207
        %v1209 = vsel %vm546, %v1015, 0.0
        %1210 = vadd.xlane.f32.xlu0 %v1209
        %v1211 = vpop.xlane.xlu0 %1210
        %v1212 = vsel %vm546, %v1016, 0.0
        %1213 = vadd.xlane.f32.xlu0 %v1212
        %v1214 = vpop.xlane.xlu0 %1213
        %v1215 = vsel %vm546, %v1017, 0.0
        %1216 = vadd.xlane.f32.xlu0 %v1215
        %v1217 = vpop.xlane.xlu0 %1216
        %v1218 = vsel %vm546, %v1018, 0.0
        %1219 = vadd.xlane.f32.xlu0 %v1218
        %v1220 = vpop.xlane.xlu0 %1219
        %v1221 = vsel %vm546, %v1019, 0.0
        %1222 = vadd.xlane.f32.xlu0 %v1221
        %v1223 = vpop.xlane.xlu0 %1222
        %v1224 = vsel %vm546, %v1020, 0.0
        %1225 = vadd.xlane.f32.xlu0 %v1224
        %v1226 = vpop.xlane.xlu0 %1225
        %v1227 = vsel %vm546, %v1021, 0.0
        %1228 = vadd.xlane.f32.xlu0 %v1227
        %v1229 = vpop.xlane.xlu0 %1228
        %v1230 = vsel %vm546, %v1022, 0.0
        %1231 = vadd.xlane.f32.xlu0 %v1230
        %v1232 = vpop.xlane.xlu0 %1231
        %v1233 = vsel %vm546, %v1023, 0.0
        %1234 = vadd.xlane.f32.xlu0 %v1233
        %v1235 = vpop.xlane.xlu0 %1234
        %v1236 = vsel %vm546, %v1024, 0.0
        %1237 = vadd.xlane.f32.xlu0 %v1236
        %v1238 = vpop.xlane.xlu0 %1237
        %v1239 = vsel %vm546, %v1025, 0.0
        %1240 = vadd.xlane.f32.xlu0 %v1239
        %v1241 = vpop.xlane.xlu0 %1240
        %v1242 = vsel %vm546, %v1026, 0.0
        %1243 = vadd.xlane.f32.xlu0 %v1242
        %v1244 = vpop.xlane.xlu0 %1243
        %v1245 = vsel %vm546, %v1027, 0.0
        %1246 = vadd.xlane.f32.xlu0 %v1245
        %v1247 = vpop.xlane.xlu0 %1246
        %v1248 = vsel %vm546, %v1028, 0.0
        %1249 = vadd.xlane.f32.xlu0 %v1248
        %v1250 = vpop.xlane.xlu0 %1249
        %v1251 = vsel %vm546, %v1029, 0.0
        %1252 = vadd.xlane.f32.xlu0 %v1251
        %v1253 = vpop.xlane.xlu0 %1252
        %v1254 = vsel %vm546, %v1030, 0.0
        %1255 = vadd.xlane.f32.xlu0 %v1254
        %v1256 = vpop.xlane.xlu0 %1255
        %v1257 = vsel %vm546, %v1031, 0.0
        %1258 = vadd.xlane.f32.xlu0 %v1257
        %v1259 = vpop.xlane.xlu0 %1258
        %v1260 = vsel %vm546, %v1032, 0.0
        %1261 = vadd.xlane.f32.xlu0 %v1260
        %v1262 = vpop.xlane.xlu0 %1261
        %v1263 = vsel %vm546, %v1033, 0.0
        %1264 = vadd.xlane.f32.xlu0 %v1263
        %v1265 = vpop.xlane.xlu0 %1264
        %v1266 = vsel %vm546, %v1034, 0.0
        %1267 = vadd.xlane.f32.xlu0 %v1266
        %v1268 = vpop.xlane.xlu0 %1267
        %v1269 = vsel %vm546, %v1035, 0.0
        %1270 = vadd.xlane.f32.xlu0 %v1269
        %v1271 = vpop.xlane.xlu0 %1270
        %v1272 = vsel %vm546, %v1036, 0.0
        %1273 = vadd.xlane.f32.xlu0 %v1272
        %v1274 = vpop.xlane.xlu0 %1273
        %v1275 = vsel %vm546, %v1037, 0.0
        %1276 = vadd.xlane.f32.xlu0 %v1275
        %v1277 = vpop.xlane.xlu0 %1276
        %v1278 = vsel %vm546, %v1038, 0.0
        %1279 = vadd.xlane.f32.xlu0 %v1278
        %v1280 = vpop.xlane.xlu0 %1279
        %v1281 = vsel %vm546, %v1039, 0.0
        %1282 = vadd.xlane.f32.xlu0 %v1281
        %v1283 = vpop.xlane.xlu0 %1282
        %v1284 = vsel %vm546, %v1040, 0.0
        %1285 = vadd.xlane.f32.xlu0 %v1284
        %v1286 = vpop.xlane.xlu0 %1285
        %v1287 = vsel %vm546, %v1041, 0.0
        %1288 = vadd.xlane.f32.xlu0 %v1287
        %v1289 = vpop.xlane.xlu0 %1288
        %v1290 = vsel %vm546, %v1042, 0.0
        %1291 = vadd.xlane.f32.xlu0 %v1290
        %v1292 = vpop.xlane.xlu0 %1291
        %v1293 = vsel %vm546, %v1043, 0.0
        %1294 = vadd.xlane.f32.xlu0 %v1293
        %v1295 = vpop.xlane.xlu0 %1294
        %v1296 = vsel %vm546, %v1044, 0.0
        %1297 = vadd.xlane.f32.xlu0 %v1296
        %v1298 = vpop.xlane.xlu0 %1297
        %v1299 = vsel %vm546, %v1045, 0.0
        %1300 = vadd.xlane.f32.xlu0 %v1299
        %v1301 = vpop.xlane.xlu0 %1300
        %v1302 = vsel %vm546, %v1046, 0.0
        %1303 = vadd.xlane.f32.xlu0 %v1302
        %v1304 = vpop.xlane.xlu0 %1303
        %v1305 = vsel %vm546, %v1047, 0.0
        %1306 = vadd.xlane.f32.xlu0 %v1305
        %v1307 = vpop.xlane.xlu0 %1306
        %v1308 = vsel %vm546, %v1048, 0.0
        %1309 = vadd.xlane.f32.xlu0 %v1308
        %v1310 = vpop.xlane.xlu0 %1309
        %v1311 = vsel %vm546, %v1049, 0.0
        %1312 = vadd.xlane.f32.xlu0 %v1311
        %v1313 = vpop.xlane.xlu0 %1312
        %v1314 = vsel %vm546, %v1050, 0.0
        %1315 = vadd.xlane.f32.xlu0 %v1314
        %v1316 = vpop.xlane.xlu0 %1315
        %v1317 = vsel %vm546, %v1051, 0.0
        %1318 = vadd.xlane.f32.xlu0 %v1317
        %v1319 = vpop.xlane.xlu0 %1318
        %v1320 = vsel %vm546, %v1052, 0.0
        %1321 = vadd.xlane.f32.xlu0 %v1320
        %v1322 = vpop.xlane.xlu0 %1321
        %v1323 = vsel %vm546, %v1053, 0.0
        %1324 = vadd.xlane.f32.xlu0 %v1323
        %v1325 = vpop.xlane.xlu0 %1324
        %v1326 = vsel %vm546, %v1054, 0.0
        %1327 = vadd.xlane.f32.xlu0 %v1326
        %v1328 = vpop.xlane.xlu0 %1327
        %v1329 = vsel %vm546, %v1055, 0.0
        %1330 = vadd.xlane.f32.xlu0 %v1329
        %v1331 = vpop.xlane.xlu0 %1330
        %v1332 = vsel %vm546, %v1056, 0.0
        %1333 = vadd.xlane.f32.xlu0 %v1332
        %v1334 = vpop.xlane.xlu0 %1333
        %v1335 = vsel %vm546, %v1057, 0.0
        %1336 = vadd.xlane.f32.xlu0 %v1335
        %v1337 = vpop.xlane.xlu0 %1336
        %v1338 = vsel %vm546, %v1058, 0.0
        %1339 = vadd.xlane.f32.xlu0 %v1338
        %v1340 = vpop.xlane.xlu0 %1339
        %v1341 = vsel %vm546, %v1059, 0.0
        %1342 = vadd.xlane.f32.xlu0 %v1341
        %v1343 = vpop.xlane.xlu0 %1342
        %v1344 = vsel %vm546, %v1060, 0.0
        %1345 = vadd.xlane.f32.xlu0 %v1344
        %v1346 = vpop.xlane.xlu0 %1345
        %v1347 = vsel %vm546, %v1061, 0.0
        %1348 = vadd.xlane.f32.xlu0 %v1347
        %v1349 = vpop.xlane.xlu0 %1348
        %v1350 = vsel %vm546, %v1062, 0.0
        %1351 = vadd.xlane.f32.xlu0 %v1350
        %v1352 = vpop.xlane.xlu0 %1351
        %v1353 = vsel %vm546, %v1063, 0.0
        %1354 = vadd.xlane.f32.xlu0 %v1353
        %v1355 = vpop.xlane.xlu0 %1354
        %v1356 = vsel %vm546, %v1064, 0.0
        %1357 = vadd.xlane.f32.xlu0 %v1356
        %v1358 = vpop.xlane.xlu0 %1357
        %v1359 = vsel %vm546, %v1065, 0.0
        %1360 = vadd.xlane.f32.xlu0 %v1359
        %v1361 = vpop.xlane.xlu0 %1360
        %v1362 = vsel %vm546, %v1066, 0.0
        %1363 = vadd.xlane.f32.xlu0 %v1362
        %v1364 = vpop.xlane.xlu0 %1363
        %v1365 = vsel %vm546, %v1067, 0.0
        %1366 = vadd.xlane.f32.xlu0 %v1365
        %v1367 = vpop.xlane.xlu0 %1366
        %v1368 = vsel %vm546, %v1068, 0.0
        %1369 = vadd.xlane.f32.xlu0 %v1368
        %v1370 = vpop.xlane.xlu0 %1369
        %v1371 = vsel %vm546, %v1069, 0.0
        %1372 = vadd.xlane.f32.xlu0 %v1371
        %v1373 = vpop.xlane.xlu0 %1372
        %v1374 = vsel %vm546, %v1070, 0.0
        %1375 = vadd.xlane.f32.xlu0 %v1374
        %v1376 = vpop.xlane.xlu0 %1375
        %v1377 = vsel %vm546, %v1071, 0.0
        %1378 = vadd.xlane.f32.xlu0 %v1377
        %v1379 = vpop.xlane.xlu0 %1378
        %v1380 = vsel %vm546, %v1072, 0.0
        %1381 = vadd.xlane.f32.xlu0 %v1380
        %v1382 = vpop.xlane.xlu0 %1381
        %v1383 = vsel %vm546, %v1073, 0.0
        %1384 = vadd.xlane.f32.xlu0 %v1383
        %v1385 = vpop.xlane.xlu0 %1384
        %v1386 = vsel %vm546, %v1074, 0.0
        %1387 = vadd.xlane.f32.xlu0 %v1386
        %v1388 = vpop.xlane.xlu0 %1387
        %v1389 = vsel %vm546, %v1075, 0.0
        %1390 = vadd.xlane.f32.xlu0 %v1389
        %v1391 = vpop.xlane.xlu0 %1390
        %v1392 = vsel %vm546, %v1076, 0.0
        %1393 = vadd.xlane.f32.xlu0 %v1392
        %v1394 = vpop.xlane.xlu0 %1393
        %v1395 = vsel %vm546, %v1077, 0.0
        %1396 = vadd.xlane.f32.xlu0 %v1395
        %v1397 = vpop.xlane.xlu0 %1396
        %v1398 = vsel %vm546, %v1078, 0.0
        %1399 = vadd.xlane.f32.xlu0 %v1398
        %v1400 = vpop.xlane.xlu0 %1399
        %v1401 = vsel %vm546, %v1079, 0.0
        %1402 = vadd.xlane.f32.xlu0 %v1401
        %v1403 = vpop.xlane.xlu0 %1402
        %v1404 = vsel %vm546, %v1080, 0.0
        %1405 = vadd.xlane.f32.xlu0 %v1404
        %v1406 = vpop.xlane.xlu0 %1405
        %v1407 = vsel %vm546, %v1081, 0.0
        %1408 = vadd.xlane.f32.xlu0 %v1407
        %v1409 = vpop.xlane.xlu0 %1408
        %v1410 = vsel %vm546, %v1082, 0.0
        %1411 = vadd.xlane.f32.xlu0 %v1410
        %v1412 = vpop.xlane.xlu0 %1411
        %v1413 = vsel %vm546, %v1083, 0.0
        %1414 = vadd.xlane.f32.xlu0 %v1413
        %v1415 = vpop.xlane.xlu0 %1414
        %v1416 = vsel %vm546, %v1084, 0.0
        %1417 = vadd.xlane.f32.xlu0 %v1416
        %v1418 = vpop.xlane.xlu0 %1417
        %v1419 = vsel %vm546, %v1085, 0.0
        %1420 = vadd.xlane.f32.xlu0 %v1419
        %v1421 = vpop.xlane.xlu0 %1420
        %v1422 = vsel %vm546, %v1086, 0.0
        %1423 = vadd.xlane.f32.xlu0 %v1422
        %v1424 = vpop.xlane.xlu0 %1423
        %v1425 = vsel %vm546, %v1087, 0.0
        %1426 = vadd.xlane.f32.xlu0 %v1425
        %v1427 = vpop.xlane.xlu0 %1426
        %v1428 = vsel %vm546, %v1088, 0.0
        %1429 = vadd.xlane.f32.xlu0 %v1428
        %v1430 = vpop.xlane.xlu0 %1429
        %v1431 = vsel %vm546, %v1089, 0.0
        %1432 = vadd.xlane.f32.xlu0 %v1431
        %v1433 = vpop.xlane.xlu0 %1432
        %v1434 = vsel %vm546, %v1090, 0.0
        %1435 = vadd.xlane.f32.xlu0 %v1434
        %v1436 = vpop.xlane.xlu0 %1435
        %v1437 = vsel %vm546, %v1091, 0.0
        %1438 = vadd.xlane.f32.xlu0 %v1437
        %v1439 = vpop.xlane.xlu0 %1438
        %v1440 = vsel %vm546, %v1092, 0.0
        %1441 = vadd.xlane.f32.xlu0 %v1440
        %v1442 = vpop.xlane.xlu0 %1441
        %v1443 = vsel %vm546, %v1093, 0.0
        %1444 = vadd.xlane.f32.xlu0 %v1443
        %v1445 = vpop.xlane.xlu0 %1444
        %v1446 = vsel %vm546, %v1094, 0.0
        %1447 = vadd.xlane.f32.xlu0 %v1446
        %v1448 = vpop.xlane.xlu0 %1447
        %v1449 = vsel %vm546, %v1095, 0.0
        %1450 = vadd.xlane.f32.xlu0 %v1449
        %v1451 = vpop.xlane.xlu0 %1450
        %v1452 = vsel %vm546, %v1096, 0.0
        %1453 = vadd.xlane.f32.xlu0 %v1452
        %v1454 = vpop.xlane.xlu0 %1453
        %v1455 = vsel %vm546, %v1097, 0.0
        %1456 = vadd.xlane.f32.xlu0 %v1455
        %v1457 = vpop.xlane.xlu0 %1456
        %v1458 = vsel %vm546, %v1098, 0.0
        %1459 = vadd.xlane.f32.xlu0 %v1458
        %v1460 = vpop.xlane.xlu0 %1459
        %v1461 = vsel %vm546, %v1099, 0.0
        %1462 = vadd.xlane.f32.xlu0 %v1461
        %v1463 = vpop.xlane.xlu0 %1462
        %v1464 = vsel %vm546, %v1100, 0.0
        %1465 = vadd.xlane.f32.xlu0 %v1464
        %v1466 = vpop.xlane.xlu0 %1465
        %v1467 = vsel %vm546, %v1101, 0.0
        %1468 = vadd.xlane.f32.xlu0 %v1467
        %v1469 = vpop.xlane.xlu0 %1468
        %v1470 = vsel %vm546, %v1102, 0.0
        %1471 = vadd.xlane.f32.xlu0 %v1470
        %v1472 = vpop.xlane.xlu0 %1471
        %v1473 = vsel %vm546, %v1103, 0.0
        %1474 = vadd.xlane.f32.xlu0 %v1473
        %v1475 = vpop.xlane.xlu0 %1474
        %v1476 = vsel %vm546, %v1104, 0.0
        %1477 = vadd.xlane.f32.xlu0 %v1476
        %v1478 = vpop.xlane.xlu0 %1477
        %v1479 = vsel %vm546, %v1105, 0.0
        %1480 = vadd.xlane.f32.xlu0 %v1479
        %v1481 = vpop.xlane.xlu0 %1480
        %v1482 = vsel %vm546, %v1106, 0.0
        %1483 = vadd.xlane.f32.xlu0 %v1482
        %v1484 = vpop.xlane.xlu0 %1483
        %v1485 = vsel %vm546, %v1107, 0.0
        %1486 = vadd.xlane.f32.xlu0 %v1485
        %v1487 = vpop.xlane.xlu0 %1486
        %v1488 = vsel %vm546, %v1108, 0.0
        %1489 = vadd.xlane.f32.xlu0 %v1488
        %v1490 = vpop.xlane.xlu0 %1489
        %v1491 = vsel %vm546, %v1109, 0.0
        %1492 = vadd.xlane.f32.xlu0 %v1491
        %v1493 = vpop.xlane.xlu0 %1492
        %v1494 = vlaneseq
        %v1495 = vand.u32 %v1494, 127
        %vm1496 = vcmp.lt.s32.totalorder %v1495, 8
        %v1625 = vperm.slane %v1112, %v1495
        %v1626 = vadd.s32 %v1495, 4294967288
        %v1627 = vperm.slane %v1115, %v1626
        %vm1628 = vcmask 130112
        %v1629 = vsel %vm1628, %v1627, %v1625
        %v1630 = vadd.s32 %v1495, 4294967280
        %v1631 = vperm.slane %v1118, %v1630
        %vm1632 = vcmask 195712
        %v1633 = vsel %vm1632, %v1631, %v1629
        %v1634 = vadd.s32 %v1495, 4294967272
        %v1635 = vperm.slane %v1121, %v1634
        %vm1636 = vcmask 261312
        %v1637 = vsel %vm1636, %v1635, %v1633
        %v1638 = vadd.s32 %v1495, 4294967264
        %v1639 = vperm.slane %v1124, %v1638
        %vm1640 = vcmask 326912
        %v1641 = vsel %vm1640, %v1639, %v1637
        %v1642 = vadd.s32 %v1495, 4294967256
        %v1643 = vperm.slane %v1127, %v1642
        %vm1644 = vcmask 392512
        %v1645 = vsel %vm1644, %v1643, %v1641
        %v1646 = vadd.s32 %v1495, 4294967248
        %v1647 = vperm.slane %v1130, %v1646
        %vm1648 = vcmask 458112
        %v1649 = vsel %vm1648, %v1647, %v1645
        %v1650 = vadd.s32 %v1495, 4294967240
        %v1651 = vperm.slane %v1133, %v1650
        %vm1652 = vcmask 523712
        %v1653 = vsel %vm1652, %v1651, %v1649
        %v1654 = vadd.s32 %v1495, 4294967232
        %v1655 = vperm.slane %v1136, %v1654
        %vm1656 = vcmask 589312
        %v1657 = vsel %vm1656, %v1655, %v1653
        %v1658 = vadd.s32 %v1495, 4294967224
        %v1659 = vperm.slane %v1139, %v1658
        %vm1660 = vcmask 654912
        %v1661 = vsel %vm1660, %v1659, %v1657
        %v1662 = vadd.s32 %v1495, 4294967216
        %v1663 = vperm.slane %v1142, %v1662
        %vm1664 = vcmask 720512
        %v1665 = vsel %vm1664, %v1663, %v1661
        %v1666 = vadd.s32 %v1495, 4294967208
        %v1667 = vperm.slane %v1145, %v1666
        %vm1668 = vcmask 786112
        %v1669 = vsel %vm1668, %v1667, %v1665
        %v1670 = vadd.s32 %v1495, 4294967200
        %v1671 = vperm.slane %v1148, %v1670
        %vm1672 = vcmask 851712
        %v1673 = vsel %vm1672, %v1671, %v1669
        %v1674 = vadd.s32 %v1495, 4294967192
        %v1675 = vperm.slane %v1151, %v1674
        %vm1676 = vcmask 917312
        %v1677 = vsel %vm1676, %v1675, %v1673
        %v1678 = vadd.s32 %v1495, 4294967184
        %v1679 = vperm.slane %v1154, %v1678
        %vm1680 = vcmask 982912
        %v1681 = vsel %vm1680, %v1679, %v1677
        %v1682 = vadd.s32 %v1495, 4294967176
        %v1683 = vperm.slane %v1157, %v1682
        %vm1684 = vcmask 1048512
        %v1685 = vsel %vm1684, %v1683, %v1681
        %v1686 = vperm.slane %v1160, %v1495
        %v1687 = vperm.slane %v1163, %v1626
        %v1688 = vsel %vm1628, %v1687, %v1686
        %v1689 = vperm.slane %v1166, %v1630
        %v1690 = vsel %vm1632, %v1689, %v1688
        %v1691 = vperm.slane %v1169, %v1634
        %v1692 = vsel %vm1636, %v1691, %v1690
        %v1693 = vperm.slane %v1172, %v1638
        %v1694 = vsel %vm1640, %v1693, %v1692
        %v1695 = vperm.slane %v1175, %v1642
        %v1696 = vsel %vm1644, %v1695, %v1694
        %v1697 = vperm.slane %v1178, %v1646
        %v1698 = vsel %vm1648, %v1697, %v1696
        %v1699 = vperm.slane %v1181, %v1650
        %v1700 = vsel %vm1652, %v1699, %v1698
        %v1701 = vperm.slane %v1184, %v1654
        %v1702 = vsel %vm1656, %v1701, %v1700
        %v1703 = vperm.slane %v1187, %v1658
        %v1704 = vsel %vm1660, %v1703, %v1702
        %v1705 = vperm.slane %v1190, %v1662
        %v1706 = vsel %vm1664, %v1705, %v1704
        %v1707 = vperm.slane %v1193, %v1666
        %v1708 = vsel %vm1668, %v1707, %v1706
        %v1709 = vperm.slane %v1196, %v1670
        %v1710 = vsel %vm1672, %v1709, %v1708
        %v1711 = vperm.slane %v1199, %v1674
        %v1712 = vsel %vm1676, %v1711, %v1710
        %v1713 = vperm.slane %v1202, %v1678
        %v1714 = vsel %vm1680, %v1713, %v1712
        %v1715 = vperm.slane %v1205, %v1682
        %v1716 = vsel %vm1684, %v1715, %v1714
        %v1717 = vperm.slane %v1208, %v1495
        %v1718 = vperm.slane %v1211, %v1626
        %v1719 = vsel %vm1628, %v1718, %v1717
        %v1720 = vperm.slane %v1214, %v1630
        %v1721 = vsel %vm1632, %v1720, %v1719
        %v1722 = vperm.slane %v1217, %v1634
        %v1723 = vsel %vm1636, %v1722, %v1721
        %v1724 = vperm.slane %v1220, %v1638
        %v1725 = vsel %vm1640, %v1724, %v1723
        %v1726 = vperm.slane %v1223, %v1642
        %v1727 = vsel %vm1644, %v1726, %v1725
        %v1728 = vperm.slane %v1226, %v1646
        %v1729 = vsel %vm1648, %v1728, %v1727
        %v1730 = vperm.slane %v1229, %v1650
        %v1731 = vsel %vm1652, %v1730, %v1729
        %v1732 = vperm.slane %v1232, %v1654
        %v1733 = vsel %vm1656, %v1732, %v1731
        %v1734 = vperm.slane %v1235, %v1658
        %v1735 = vsel %vm1660, %v1734, %v1733
        %v1736 = vperm.slane %v1238, %v1662
        %v1737 = vsel %vm1664, %v1736, %v1735
        %v1738 = vperm.slane %v1241, %v1666
        %v1739 = vsel %vm1668, %v1738, %v1737
        %v1740 = vperm.slane %v1244, %v1670
        %v1741 = vsel %vm1672, %v1740, %v1739
        %v1742 = vperm.slane %v1247, %v1674
        %v1743 = vsel %vm1676, %v1742, %v1741
        %v1744 = vperm.slane %v1250, %v1678
        %v1745 = vsel %vm1680, %v1744, %v1743
        %v1746 = vperm.slane %v1253, %v1682
        %v1747 = vsel %vm1684, %v1746, %v1745
        %v1748 = vperm.slane %v1256, %v1495
        %v1749 = vperm.slane %v1259, %v1626
        %v1750 = vsel %vm1628, %v1749, %v1748
        %v1751 = vperm.slane %v1262, %v1630
        %v1752 = vsel %vm1632, %v1751, %v1750
        %v1753 = vperm.slane %v1265, %v1634
        %v1754 = vsel %vm1636, %v1753, %v1752
        %v1755 = vperm.slane %v1268, %v1638
        %v1756 = vsel %vm1640, %v1755, %v1754
        %v1757 = vperm.slane %v1271, %v1642
        %v1758 = vsel %vm1644, %v1757, %v1756
        %v1759 = vperm.slane %v1274, %v1646
        %v1760 = vsel %vm1648, %v1759, %v1758
        %v1761 = vperm.slane %v1277, %v1650
        %v1762 = vsel %vm1652, %v1761, %v1760
        %v1763 = vperm.slane %v1280, %v1654
        %v1764 = vsel %vm1656, %v1763, %v1762
        %v1765 = vperm.slane %v1283, %v1658
        %v1766 = vsel %vm1660, %v1765, %v1764
        %v1767 = vperm.slane %v1286, %v1662
        %v1768 = vsel %vm1664, %v1767, %v1766
        %v1769 = vperm.slane %v1289, %v1666
        %v1770 = vsel %vm1668, %v1769, %v1768
        %v1771 = vperm.slane %v1292, %v1670
        %v1772 = vsel %vm1672, %v1771, %v1770
        %v1773 = vperm.slane %v1295, %v1674
        %v1774 = vsel %vm1676, %v1773, %v1772
        %v1775 = vperm.slane %v1298, %v1678
        %v1776 = vsel %vm1680, %v1775, %v1774
        %v1777 = vperm.slane %v1301, %v1682
        %v1778 = vsel %vm1684, %v1777, %v1776
        %v1779 = vperm.slane %v1304, %v1495
        %v1780 = vperm.slane %v1307, %v1626
        %v1781 = vsel %vm1628, %v1780, %v1779
        %v1782 = vperm.slane %v1310, %v1630
        %v1783 = vsel %vm1632, %v1782, %v1781
        %v1784 = vperm.slane %v1313, %v1634
        %v1785 = vsel %vm1636, %v1784, %v1783
        %v1786 = vperm.slane %v1316, %v1638
        %v1787 = vsel %vm1640, %v1786, %v1785
        %v1788 = vperm.slane %v1319, %v1642
        %v1789 = vsel %vm1644, %v1788, %v1787
        %v1790 = vperm.slane %v1322, %v1646
        %v1791 = vsel %vm1648, %v1790, %v1789
        %v1792 = vperm.slane %v1325, %v1650
        %v1793 = vsel %vm1652, %v1792, %v1791
        %v1794 = vperm.slane %v1328, %v1654
        %v1795 = vsel %vm1656, %v1794, %v1793
        %v1796 = vperm.slane %v1331, %v1658
        %v1797 = vsel %vm1660, %v1796, %v1795
        %v1798 = vperm.slane %v1334, %v1662
        %v1799 = vsel %vm1664, %v1798, %v1797
        %v1800 = vperm.slane %v1337, %v1666
        %v1801 = vsel %vm1668, %v1800, %v1799
        %v1802 = vperm.slane %v1340, %v1670
        %v1803 = vsel %vm1672, %v1802, %v1801
        %v1804 = vperm.slane %v1343, %v1674
        %v1805 = vsel %vm1676, %v1804, %v1803
        %v1806 = vperm.slane %v1346, %v1678
        %v1807 = vsel %vm1680, %v1806, %v1805
        %v1808 = vperm.slane %v1349, %v1682
        %v1809 = vsel %vm1684, %v1808, %v1807
        %v1810 = vperm.slane %v1352, %v1495
        %v1811 = vperm.slane %v1355, %v1626
        %v1812 = vsel %vm1628, %v1811, %v1810
        %v1813 = vperm.slane %v1358, %v1630
        %v1814 = vsel %vm1632, %v1813, %v1812
        %v1815 = vperm.slane %v1361, %v1634
        %v1816 = vsel %vm1636, %v1815, %v1814
        %v1817 = vperm.slane %v1364, %v1638
        %v1818 = vsel %vm1640, %v1817, %v1816
        %v1819 = vperm.slane %v1367, %v1642
        %v1820 = vsel %vm1644, %v1819, %v1818
        %v1821 = vperm.slane %v1370, %v1646
        %v1822 = vsel %vm1648, %v1821, %v1820
        %v1823 = vperm.slane %v1373, %v1650
        %v1824 = vsel %vm1652, %v1823, %v1822
        %v1825 = vperm.slane %v1376, %v1654
        %v1826 = vsel %vm1656, %v1825, %v1824
        %v1827 = vperm.slane %v1379, %v1658
        %v1828 = vsel %vm1660, %v1827, %v1826
        %v1829 = vperm.slane %v1382, %v1662
        %v1830 = vsel %vm1664, %v1829, %v1828
        %v1831 = vperm.slane %v1385, %v1666
        %v1832 = vsel %vm1668, %v1831, %v1830
        %v1833 = vperm.slane %v1388, %v1670
        %v1834 = vsel %vm1672, %v1833, %v1832
        %v1835 = vperm.slane %v1391, %v1674
        %v1836 = vsel %vm1676, %v1835, %v1834
        %v1837 = vperm.slane %v1394, %v1678
        %v1838 = vsel %vm1680, %v1837, %v1836
        %v1839 = vperm.slane %v1397, %v1682
        %v1840 = vsel %vm1684, %v1839, %v1838
        %v1841 = vperm.slane %v1400, %v1495
        %v1842 = vperm.slane %v1403, %v1626
        %v1843 = vsel %vm1628, %v1842, %v1841
        %v1844 = vperm.slane %v1406, %v1630
        %v1845 = vsel %vm1632, %v1844, %v1843
        %v1846 = vperm.slane %v1409, %v1634
        %v1847 = vsel %vm1636, %v1846, %v1845
        %v1848 = vperm.slane %v1412, %v1638
        %v1849 = vsel %vm1640, %v1848, %v1847
        %v1850 = vperm.slane %v1415, %v1642
        %v1851 = vsel %vm1644, %v1850, %v1849
        %v1852 = vperm.slane %v1418, %v1646
        %v1853 = vsel %vm1648, %v1852, %v1851
        %v1854 = vperm.slane %v1421, %v1650
        %v1855 = vsel %vm1652, %v1854, %v1853
        %v1856 = vperm.slane %v1424, %v1654
        %v1857 = vsel %vm1656, %v1856, %v1855
        %v1858 = vperm.slane %v1427, %v1658
        %v1859 = vsel %vm1660, %v1858, %v1857
        %v1860 = vperm.slane %v1430, %v1662
        %v1861 = vsel %vm1664, %v1860, %v1859
        %v1862 = vperm.slane %v1433, %v1666
        %v1863 = vsel %vm1668, %v1862, %v1861
        %v1864 = vperm.slane %v1436, %v1670
        %v1865 = vsel %vm1672, %v1864, %v1863
        %v1866 = vperm.slane %v1439, %v1674
        %v1867 = vsel %vm1676, %v1866, %v1865
        %v1868 = vperm.slane %v1442, %v1678
        %v1869 = vsel %vm1680, %v1868, %v1867
        %v1870 = vperm.slane %v1445, %v1682
        %v1871 = vsel %vm1684, %v1870, %v1869
        %v1872 = vperm.slane %v1448, %v1495
        %v1873 = vperm.slane %v1451, %v1626
        %v1874 = vsel %vm1628, %v1873, %v1872
        %v1875 = vperm.slane %v1454, %v1630
        %v1876 = vsel %vm1632, %v1875, %v1874
        %v1877 = vperm.slane %v1457, %v1634
        %v1878 = vsel %vm1636, %v1877, %v1876
        %v1879 = vperm.slane %v1460, %v1638
        %v1880 = vsel %vm1640, %v1879, %v1878
        %v1881 = vperm.slane %v1463, %v1642
        %v1882 = vsel %vm1644, %v1881, %v1880
        %v1883 = vperm.slane %v1466, %v1646
        %v1884 = vsel %vm1648, %v1883, %v1882
        %v1885 = vperm.slane %v1469, %v1650
        %v1886 = vsel %vm1652, %v1885, %v1884
        %v1887 = vperm.slane %v1472, %v1654
        %v1888 = vsel %vm1656, %v1887, %v1886
        %v1889 = vperm.slane %v1475, %v1658
        %v1890 = vsel %vm1660, %v1889, %v1888
        %v1891 = vperm.slane %v1478, %v1662
        %v1892 = vsel %vm1664, %v1891, %v1890
        %v1893 = vperm.slane %v1481, %v1666
        %v1894 = vsel %vm1668, %v1893, %v1892
        %v1895 = vperm.slane %v1484, %v1670
        %v1896 = vsel %vm1672, %v1895, %v1894
        %v1897 = vperm.slane %v1487, %v1674
        %v1898 = vsel %vm1676, %v1897, %v1896
        %v1899 = vperm.slane %v1490, %v1678
        %v1900 = vsel %vm1680, %v1899, %v1898
        %v1901 = vperm.slane %v1493, %v1682
        %v1902 = vsel %vm1684, %v1901, %v1900
        %vm1903 = vcmask 1041409
        %v1904 = vsel %vm1903, %v1716, %v1685
        %vm1905 = vcmask 1042434
        %v1906 = vsel %vm1905, %v1747, %v1904
        %vm1907 = vcmask 1043459
        %v1908 = vsel %vm1907, %v1778, %v1906
        %vm1909 = vcmask 1044484
        %v1910 = vsel %vm1909, %v1809, %v1908
        %vm1911 = vcmask 1045509
        %v1912 = vsel %vm1911, %v1840, %v1910
        %vm1913 = vcmask 1046534
        %v1914 = vsel %vm1913, %v1871, %v1912
        %vm1915 = vcmask 1047559
        %v1916 = vsel %vm1915, %v1902, %v1914
        %v1918 = vsel %vm1496, %v1916, -inf
        %1919 = vmax.xlane.f32.xlu0 %v1918
        %v1920 = vpop.xlane.xlu0 %1919
        %v1921 = vsub.f32 %v1918, %v1920
        %v1922 = vmul.f32 %v1921, 1.442695
        %v1923 = vpow.pop %v1922
        %1924 = vadd.xlane.f32.xlu0 %v1923
        %v1925 = vpop.xlane.xlu0 %1924
        %v1926 = vrcp.pop %v1925
        %v1927 = vmul.f32 %v1925, %v1926
        %v1928 = vsub.f32 1.0, %v1927
        %v1929 = vmul.f32 %v1926, %v1928
        %v1930 = vadd.f32 %v1926, %v1929
        %vm1931 = vweird.f32 %v1925
        %vm1932 = vweird.f32 %v1926
        %vm1933 = vmor %vm1931, %vm1932
        %v1934 = vsel %vm1933, %v1926, %v1930
        %v1935 = vand.u32 2147483647, %v1925
        %vm1936 = vcmp.eq.f32.partialorder %v1935, 8.507059e+37
        %v1937 = vand.u32 %v1925, 2147483648
        %v1938 = vor.u32 1.1754944e-38, %v1937
        %v1939 = vsel %vm1936, %v1938, %v1934
        %v1940 = vmul.f32 %v1923, %v1939
        %v1941 = vld [vmem:[%s514] sm:$0xff]
        %v1942 = vld [vmem:[%s514 + $0x8] sm:$0xff]
        %v1943 = vld [vmem:[%s514 + $0x10] sm:$0xff]
        %v1944 = vld [vmem:[%s514 + $0x18] sm:$0xff]
        %v1945 = vld [vmem:[%s514 + $0x20] sm:$0xff]
        %v1946 = vld [vmem:[%s514 + $0x28] sm:$0xff]
        %v1947 = vld [vmem:[%s514 + $0x30] sm:$0xff]
        %v1948 = vld [vmem:[%s514 + $0x38] sm:$0xff]
        %v1949 = vld [vmem:[%s514 + $0x40] sm:$0xff]
        %v1950 = vld [vmem:[%s514 + $0x48] sm:$0xff]
        %v1951 = vld [vmem:[%s514 + $0x50] sm:$0xff]
        %v1952 = vld [vmem:[%s514 + $0x58] sm:$0xff]
        %v1953 = vld [vmem:[%s514 + $0x60] sm:$0xff]
        %v1954 = vld [vmem:[%s514 + $0x68] sm:$0xff]
        %v1955 = vld [vmem:[%s514 + $0x70] sm:$0xff]
        %v1956 = vld [vmem:[%s514 + $0x78] sm:$0xff]
        %v1957 = vld [vmem:[%s514 + $0x80] sm:$0xff]
        %v1958 = vld [vmem:[%s514 + $0x88] sm:$0xff]
        %v1959 = vld [vmem:[%s514 + $0x90] sm:$0xff]
        %v1960 = vld [vmem:[%s514 + $0x98] sm:$0xff]
        %v1961 = vld [vmem:[%s514 + $0xa0] sm:$0xff]
        %v1962 = vld [vmem:[%s514 + $0xa8] sm:$0xff]
        %v1963 = vld [vmem:[%s514 + $0xb0] sm:$0xff]
        %v1964 = vld [vmem:[%s514 + $0xb8] sm:$0xff]
        %v1965 = vld [vmem:[%s514 + $0xc0] sm:$0xff]
        %v1966 = vld [vmem:[%s514 + $0xc8] sm:$0xff]
        %v1967 = vld [vmem:[%s514 + $0xd0] sm:$0xff]
        %v1968 = vld [vmem:[%s514 + $0xd8] sm:$0xff]
        %v1969 = vld [vmem:[%s514 + $0xe0] sm:$0xff]
        %v1970 = vld [vmem:[%s514 + $0xe8] sm:$0xff]
        %v1971 = vld [vmem:[%s514 + $0xf0] sm:$0xff]
        %v1972 = vld [vmem:[%s514 + $0xf8] sm:$0xff]
        %v1973 = vld [vmem:[%s514 + $0x100] sm:$0xff]
        %v1974 = vld [vmem:[%s514 + $0x108] sm:$0xff]
        %v1975 = vld [vmem:[%s514 + $0x110] sm:$0xff]
        %v1976 = vld [vmem:[%s514 + $0x118] sm:$0xff]
        %v1977 = vld [vmem:[%s514 + $0x120] sm:$0xff]
        %v1978 = vld [vmem:[%s514 + $0x128] sm:$0xff]
        %v1979 = vld [vmem:[%s514 + $0x130] sm:$0xff]
        %v1980 = vld [vmem:[%s514 + $0x138] sm:$0xff]
        %v1981 = vld [vmem:[%s514 + $0x140] sm:$0xff]
        %v1982 = vld [vmem:[%s514 + $0x148] sm:$0xff]
        %v1983 = vld [vmem:[%s514 + $0x150] sm:$0xff]
        %v1984 = vld [vmem:[%s514 + $0x158] sm:$0xff]
        %v1985 = vld [vmem:[%s514 + $0x160] sm:$0xff]
        %v1986 = vld [vmem:[%s514 + $0x168] sm:$0xff]
        %v1987 = vld [vmem:[%s514 + $0x170] sm:$0xff]
        %v1988 = vld [vmem:[%s514 + $0x178] sm:$0xff]
        %v1989 = vld [vmem:[%s514 + $0x180] sm:$0xff]
        %v1990 = vld [vmem:[%s514 + $0x188] sm:$0xff]
        %v1991 = vld [vmem:[%s514 + $0x190] sm:$0xff]
        %v1992 = vld [vmem:[%s514 + $0x198] sm:$0xff]
        %v1993 = vld [vmem:[%s514 + $0x1a0] sm:$0xff]
        %v1994 = vld [vmem:[%s514 + $0x1a8] sm:$0xff]
        %v1995 = vld [vmem:[%s514 + $0x1b0] sm:$0xff]
        %v1996 = vld [vmem:[%s514 + $0x1b8] sm:$0xff]
        %v1997 = vld [vmem:[%s514 + $0x1c0] sm:$0xff]
        %v1998 = vld [vmem:[%s514 + $0x1c8] sm:$0xff]
        %v1999 = vld [vmem:[%s514 + $0x1d0] sm:$0xff]
        %v2000 = vld [vmem:[%s514 + $0x1d8] sm:$0xff]
        %v2001 = vld [vmem:[%s514 + $0x1e0] sm:$0xff]
        %v2002 = vld [vmem:[%s514 + $0x1e8] sm:$0xff]
        %v2003 = vld [vmem:[%s514 + $0x1f0] sm:$0xff]
        %v2004 = vld [vmem:[%s514 + $0x1f8] sm:$0xff]
        %v2005 = vld [vmem:[%s514 + $0x200] sm:$0xff]
        %v2006 = vld [vmem:[%s514 + $0x208] sm:$0xff]
        %v2007 = vld [vmem:[%s514 + $0x210] sm:$0xff]
        %v2008 = vld [vmem:[%s514 + $0x218] sm:$0xff]
        %v2009 = vld [vmem:[%s514 + $0x220] sm:$0xff]
        %v2010 = vld [vmem:[%s514 + $0x228] sm:$0xff]
        %v2011 = vld [vmem:[%s514 + $0x230] sm:$0xff]
        %v2012 = vld [vmem:[%s514 + $0x238] sm:$0xff]
        %v2013 = vld [vmem:[%s514 + $0x240] sm:$0xff]
        %v2014 = vld [vmem:[%s514 + $0x248] sm:$0xff]
        %v2015 = vld [vmem:[%s514 + $0x250] sm:$0xff]
        %v2016 = vld [vmem:[%s514 + $0x258] sm:$0xff]
        %v2017 = vld [vmem:[%s514 + $0x260] sm:$0xff]
        %v2018 = vld [vmem:[%s514 + $0x268] sm:$0xff]
        %v2019 = vld [vmem:[%s514 + $0x270] sm:$0xff]
        %v2020 = vld [vmem:[%s514 + $0x278] sm:$0xff]
        %v2021 = vld [vmem:[%s514 + $0x280] sm:$0xff]
        %v2022 = vld [vmem:[%s514 + $0x288] sm:$0xff]
        %v2023 = vld [vmem:[%s514 + $0x290] sm:$0xff]
        %v2024 = vld [vmem:[%s514 + $0x298] sm:$0xff]
        %v2025 = vld [vmem:[%s514 + $0x2a0] sm:$0xff]
        %v2026 = vld [vmem:[%s514 + $0x2a8] sm:$0xff]
        %v2027 = vld [vmem:[%s514 + $0x2b0] sm:$0xff]
        %v2028 = vld [vmem:[%s514 + $0x2b8] sm:$0xff]
        %v2029 = vld [vmem:[%s514 + $0x2c0] sm:$0xff]
        %v2030 = vld [vmem:[%s514 + $0x2c8] sm:$0xff]
        %v2031 = vld [vmem:[%s514 + $0x2d0] sm:$0xff]
        %v2032 = vld [vmem:[%s514 + $0x2d8] sm:$0xff]
        %v2033 = vld [vmem:[%s514 + $0x2e0] sm:$0xff]
        %v2034 = vld [vmem:[%s514 + $0x2e8] sm:$0xff]
        %v2035 = vld [vmem:[%s514 + $0x2f0] sm:$0xff]
        %v2036 = vld [vmem:[%s514 + $0x2f8] sm:$0xff]
        %v2037 = vld [vmem:[%s514 + $0x300] sm:$0xff]
        %v2038 = vld [vmem:[%s514 + $0x308] sm:$0xff]
        %v2039 = vld [vmem:[%s514 + $0x310] sm:$0xff]
        %v2040 = vld [vmem:[%s514 + $0x318] sm:$0xff]
        %v2041 = vld [vmem:[%s514 + $0x320] sm:$0xff]
        %v2042 = vld [vmem:[%s514 + $0x328] sm:$0xff]
        %v2043 = vld [vmem:[%s514 + $0x330] sm:$0xff]
        %v2044 = vld [vmem:[%s514 + $0x338] sm:$0xff]
        %v2045 = vld [vmem:[%s514 + $0x340] sm:$0xff]
        %v2046 = vld [vmem:[%s514 + $0x348] sm:$0xff]
        %v2047 = vld [vmem:[%s514 + $0x350] sm:$0xff]
        %v2048 = vld [vmem:[%s514 + $0x358] sm:$0xff]
        %v2049 = vld [vmem:[%s514 + $0x360] sm:$0xff]
        %v2050 = vld [vmem:[%s514 + $0x368] sm:$0xff]
        %v2051 = vld [vmem:[%s514 + $0x370] sm:$0xff]
        %v2052 = vld [vmem:[%s514 + $0x378] sm:$0xff]
        %v2053 = vld [vmem:[%s514 + $0x380] sm:$0xff]
        %v2054 = vld [vmem:[%s514 + $0x388] sm:$0xff]
        %v2055 = vld [vmem:[%s514 + $0x390] sm:$0xff]
        %v2056 = vld [vmem:[%s514 + $0x398] sm:$0xff]
        %v2057 = vld [vmem:[%s514 + $0x3a0] sm:$0xff]
        %v2058 = vld [vmem:[%s514 + $0x3a8] sm:$0xff]
        %v2059 = vld [vmem:[%s514 + $0x3b0] sm:$0xff]
        %v2060 = vld [vmem:[%s514 + $0x3b8] sm:$0xff]
        %v2061 = vld [vmem:[%s514 + $0x3c0] sm:$0xff]
        %v2062 = vld [vmem:[%s514 + $0x3c8] sm:$0xff]
        %v2063 = vld [vmem:[%s514 + $0x3d0] sm:$0xff]
        %v2064 = vld [vmem:[%s514 + $0x3d8] sm:$0xff]
        %v2065 = vld [vmem:[%s514 + $0x3e0] sm:$0xff]
        %v2066 = vld [vmem:[%s514 + $0x3e8] sm:$0xff]
        %v2067 = vld [vmem:[%s514 + $0x3f0] sm:$0xff]
        %v2068 = vld [vmem:[%s514 + $0x3f8] sm:$0xff]
        %v2069 = vperm.slane %v1940, 0
        %v2070 = vlaneseq
        %v2071 = vshrl.u32 %v2070, 7
        %2073 = vset.pattern.permute.xlu0 %v2071
        %2074 = vperm.xlu0 %2073, %v2069
        %v2075 = vpop.permute.xlu0 %2074
        %v2076 = vlaneseq
        %v2077 = vshrl.u32 %v2076, 7
        %v2078 = vadd.s32 %v2077, 8
        %2079 = vset.pattern.permute.xlu0 %v2078
        %2080 = vperm.xlu0 %2079, %v2069
        %v2081 = vpop.permute.xlu0 %2080
        %v2082 = vlaneseq
        %v2083 = vshrl.u32 %v2082, 7
        %v2084 = vadd.s32 %v2083, 16
        %2085 = vset.pattern.permute.xlu0 %v2084
        %2086 = vperm.xlu0 %2085, %v2069
        %v2087 = vpop.permute.xlu0 %2086
        %v2088 = vlaneseq
        %v2089 = vshrl.u32 %v2088, 7
        %v2090 = vadd.s32 %v2089, 24
        %2091 = vset.pattern.permute.xlu0 %v2090
        %2092 = vperm.xlu0 %2091, %v2069
        %v2093 = vpop.permute.xlu0 %2092
        %v2094 = vlaneseq
        %v2095 = vshrl.u32 %v2094, 7
        %v2096 = vadd.s32 %v2095, 32
        %2097 = vset.pattern.permute.xlu0 %v2096
        %2098 = vperm.xlu0 %2097, %v2069
        %v2099 = vpop.permute.xlu0 %2098
        %v2100 = vlaneseq
        %v2101 = vshrl.u32 %v2100, 7
        %v2102 = vadd.s32 %v2101, 40
        %2103 = vset.pattern.permute.xlu0 %v2102
        %2104 = vperm.xlu0 %2103, %v2069
        %v2105 = vpop.permute.xlu0 %2104
        %v2106 = vlaneseq
        %v2107 = vshrl.u32 %v2106, 7
        %v2108 = vadd.s32 %v2107, 48
        %2109 = vset.pattern.permute.xlu0 %v2108
        %2110 = vperm.xlu0 %2109, %v2069
        %v2111 = vpop.permute.xlu0 %2110
        %v2112 = vlaneseq
        %v2113 = vshrl.u32 %v2112, 7
        %v2114 = vadd.s32 %v2113, 56
        %2115 = vset.pattern.permute.xlu0 %v2114
        %2116 = vperm.xlu0 %2115, %v2069
        %v2117 = vpop.permute.xlu0 %2116
        %v2118 = vlaneseq
        %v2119 = vshrl.u32 %v2118, 7
        %v2120 = vadd.s32 %v2119, 64
        %2121 = vset.pattern.permute.xlu0 %v2120
        %2122 = vperm.xlu0 %2121, %v2069
        %v2123 = vpop.permute.xlu0 %2122
        %v2124 = vlaneseq
        %v2125 = vshrl.u32 %v2124, 7
        %v2126 = vadd.s32 %v2125, 72
        %2127 = vset.pattern.permute.xlu0 %v2126
        %2128 = vperm.xlu0 %2127, %v2069
        %v2129 = vpop.permute.xlu0 %2128
        %v2130 = vlaneseq
        %v2131 = vshrl.u32 %v2130, 7
        %v2132 = vadd.s32 %v2131, 80
        %2133 = vset.pattern.permute.xlu0 %v2132
        %2134 = vperm.xlu0 %2133, %v2069
        %v2135 = vpop.permute.xlu0 %2134
        %v2136 = vlaneseq
        %v2137 = vshrl.u32 %v2136, 7
        %v2138 = vadd.s32 %v2137, 88
        %2139 = vset.pattern.permute.xlu0 %v2138
        %2140 = vperm.xlu0 %2139, %v2069
        %v2141 = vpop.permute.xlu0 %2140
        %v2142 = vlaneseq
        %v2143 = vshrl.u32 %v2142, 7
        %v2144 = vadd.s32 %v2143, 96
        %2145 = vset.pattern.permute.xlu0 %v2144
        %2146 = vperm.xlu0 %2145, %v2069
        %v2147 = vpop.permute.xlu0 %2146
        %v2148 = vlaneseq
        %v2149 = vshrl.u32 %v2148, 7
        %v2150 = vadd.s32 %v2149, 104
        %2151 = vset.pattern.permute.xlu0 %v2150
        %2152 = vperm.xlu0 %2151, %v2069
        %v2153 = vpop.permute.xlu0 %2152
        %v2154 = vlaneseq
        %v2155 = vshrl.u32 %v2154, 7
        %v2156 = vadd.s32 %v2155, 112
        %2157 = vset.pattern.permute.xlu0 %v2156
        %2158 = vperm.xlu0 %2157, %v2069
        %v2159 = vpop.permute.xlu0 %2158
        %v2160 = vlaneseq
        %v2161 = vshrl.u32 %v2160, 7
        %v2162 = vadd.s32 %v2161, 120
        %2163 = vset.pattern.permute.xlu0 %v2162
        %2164 = vperm.xlu0 %2163, %v2069
        %v2165 = vpop.permute.xlu0 %2164
        %v2166 = vperm.slane %v1940, 1
        %v2167 = vlaneseq
        %v2168 = vshrl.u32 %v2167, 7
        %2170 = vset.pattern.permute.xlu0 %v2168
        %2171 = vperm.xlu0 %2170, %v2166
        %v2172 = vpop.permute.xlu0 %2171
        %v2173 = vlaneseq
        %v2174 = vshrl.u32 %v2173, 7
        %v2175 = vadd.s32 %v2174, 8
        %2176 = vset.pattern.permute.xlu0 %v2175
        %2177 = vperm.xlu0 %2176, %v2166
        %v2178 = vpop.permute.xlu0 %2177
        %v2179 = vlaneseq
        %v2180 = vshrl.u32 %v2179, 7
        %v2181 = vadd.s32 %v2180, 16
        %2182 = vset.pattern.permute.xlu0 %v2181
        %2183 = vperm.xlu0 %2182, %v2166
        %v2184 = vpop.permute.xlu0 %2183
        %v2185 = vlaneseq
        %v2186 = vshrl.u32 %v2185, 7
        %v2187 = vadd.s32 %v2186, 24
        %2188 = vset.pattern.permute.xlu0 %v2187
        %2189 = vperm.xlu0 %2188, %v2166
        %v2190 = vpop.permute.xlu0 %2189
        %v2191 = vlaneseq
        %v2192 = vshrl.u32 %v2191, 7
        %v2193 = vadd.s32 %v2192, 32
        %2194 = vset.pattern.permute.xlu0 %v2193
        %2195 = vperm.xlu0 %2194, %v2166
        %v2196 = vpop.permute.xlu0 %2195
        %v2197 = vlaneseq
        %v2198 = vshrl.u32 %v2197, 7
        %v2199 = vadd.s32 %v2198, 40
        %2200 = vset.pattern.permute.xlu0 %v2199
        %2201 = vperm.xlu0 %2200, %v2166
        %v2202 = vpop.permute.xlu0 %2201
        %v2203 = vlaneseq
        %v2204 = vshrl.u32 %v2203, 7
        %v2205 = vadd.s32 %v2204, 48
        %2206 = vset.pattern.permute.xlu0 %v2205
        %2207 = vperm.xlu0 %2206, %v2166
        %v2208 = vpop.permute.xlu0 %2207
        %v2209 = vlaneseq
        %v2210 = vshrl.u32 %v2209, 7
        %v2211 = vadd.s32 %v2210, 56
        %2212 = vset.pattern.permute.xlu0 %v2211
        %2213 = vperm.xlu0 %2212, %v2166
        %v2214 = vpop.permute.xlu0 %2213
        %v2215 = vlaneseq
        %v2216 = vshrl.u32 %v2215, 7
        %v2217 = vadd.s32 %v2216, 64
        %2218 = vset.pattern.permute.xlu0 %v2217
        %2219 = vperm.xlu0 %2218, %v2166
        %v2220 = vpop.permute.xlu0 %2219
        %v2221 = vlaneseq
        %v2222 = vshrl.u32 %v2221, 7
        %v2223 = vadd.s32 %v2222, 72
        %2224 = vset.pattern.permute.xlu0 %v2223
        %2225 = vperm.xlu0 %2224, %v2166
        %v2226 = vpop.permute.xlu0 %2225
        %v2227 = vlaneseq
        %v2228 = vshrl.u32 %v2227, 7
        %v2229 = vadd.s32 %v2228, 80
        %2230 = vset.pattern.permute.xlu0 %v2229
        %2231 = vperm.xlu0 %2230, %v2166
        %v2232 = vpop.permute.xlu0 %2231
        %v2233 = vlaneseq
        %v2234 = vshrl.u32 %v2233, 7
        %v2235 = vadd.s32 %v2234, 88
        %2236 = vset.pattern.permute.xlu0 %v2235
        %2237 = vperm.xlu0 %2236, %v2166
        %v2238 = vpop.permute.xlu0 %2237
        %v2239 = vlaneseq
        %v2240 = vshrl.u32 %v2239, 7
        %v2241 = vadd.s32 %v2240, 96
        %2242 = vset.pattern.permute.xlu0 %v2241
        %2243 = vperm.xlu0 %2242, %v2166
        %v2244 = vpop.permute.xlu0 %2243
        %v2245 = vlaneseq
        %v2246 = vshrl.u32 %v2245, 7
        %v2247 = vadd.s32 %v2246, 104
        %2248 = vset.pattern.permute.xlu0 %v2247
        %2249 = vperm.xlu0 %2248, %v2166
        %v2250 = vpop.permute.xlu0 %2249
        %v2251 = vlaneseq
        %v2252 = vshrl.u32 %v2251, 7
        %v2253 = vadd.s32 %v2252, 112
        %2254 = vset.pattern.permute.xlu0 %v2253
        %2255 = vperm.xlu0 %2254, %v2166
        %v2256 = vpop.permute.xlu0 %2255
        %v2257 = vlaneseq
        %v2258 = vshrl.u32 %v2257, 7
        %v2259 = vadd.s32 %v2258, 120
        %2260 = vset.pattern.permute.xlu0 %v2259
        %2261 = vperm.xlu0 %2260, %v2166
        %v2262 = vpop.permute.xlu0 %2261
        %v2263 = vperm.slane %v1940, 2
        %v2264 = vlaneseq
        %v2265 = vshrl.u32 %v2264, 7
        %2267 = vset.pattern.permute.xlu0 %v2265
        %2268 = vperm.xlu0 %2267, %v2263
        %v2269 = vpop.permute.xlu0 %2268
        %v2270 = vlaneseq
        %v2271 = vshrl.u32 %v2270, 7
        %v2272 = vadd.s32 %v2271, 8
        %2273 = vset.pattern.permute.xlu0 %v2272
        %2274 = vperm.xlu0 %2273, %v2263
        %v2275 = vpop.permute.xlu0 %2274
        %v2276 = vlaneseq
        %v2277 = vshrl.u32 %v2276, 7
        %v2278 = vadd.s32 %v2277, 16
        %2279 = vset.pattern.permute.xlu0 %v2278
        %2280 = vperm.xlu0 %2279, %v2263
        %v2281 = vpop.permute.xlu0 %2280
        %v2282 = vlaneseq
        %v2283 = vshrl.u32 %v2282, 7
        %v2284 = vadd.s32 %v2283, 24
        %2285 = vset.pattern.permute.xlu0 %v2284
        %2286 = vperm.xlu0 %2285, %v2263
        %v2287 = vpop.permute.xlu0 %2286
        %v2288 = vlaneseq
        %v2289 = vshrl.u32 %v2288, 7
        %v2290 = vadd.s32 %v2289, 32
        %2291 = vset.pattern.permute.xlu0 %v2290
        %2292 = vperm.xlu0 %2291, %v2263
        %v2293 = vpop.permute.xlu0 %2292
        %v2294 = vlaneseq
        %v2295 = vshrl.u32 %v2294, 7
        %v2296 = vadd.s32 %v2295, 40
        %2297 = vset.pattern.permute.xlu0 %v2296
        %2298 = vperm.xlu0 %2297, %v2263
        %v2299 = vpop.permute.xlu0 %2298
        %v2300 = vlaneseq
        %v2301 = vshrl.u32 %v2300, 7
        %v2302 = vadd.s32 %v2301, 48
        %2303 = vset.pattern.permute.xlu0 %v2302
        %2304 = vperm.xlu0 %2303, %v2263
        %v2305 = vpop.permute.xlu0 %2304
        %v2306 = vlaneseq
        %v2307 = vshrl.u32 %v2306, 7
        %v2308 = vadd.s32 %v2307, 56
        %2309 = vset.pattern.permute.xlu0 %v2308
        %2310 = vperm.xlu0 %2309, %v2263
        %v2311 = vpop.permute.xlu0 %2310
        %v2312 = vlaneseq
        %v2313 = vshrl.u32 %v2312, 7
        %v2314 = vadd.s32 %v2313, 64
        %2315 = vset.pattern.permute.xlu0 %v2314
        %2316 = vperm.xlu0 %2315, %v2263
        %v2317 = vpop.permute.xlu0 %2316
        %v2318 = vlaneseq
        %v2319 = vshrl.u32 %v2318, 7
        %v2320 = vadd.s32 %v2319, 72
        %2321 = vset.pattern.permute.xlu0 %v2320
        %2322 = vperm.xlu0 %2321, %v2263
        %v2323 = vpop.permute.xlu0 %2322
        %v2324 = vlaneseq
        %v2325 = vshrl.u32 %v2324, 7
        %v2326 = vadd.s32 %v2325, 80
        %2327 = vset.pattern.permute.xlu0 %v2326
        %2328 = vperm.xlu0 %2327, %v2263
        %v2329 = vpop.permute.xlu0 %2328
        %v2330 = vlaneseq
        %v2331 = vshrl.u32 %v2330, 7
        %v2332 = vadd.s32 %v2331, 88
        %2333 = vset.pattern.permute.xlu0 %v2332
        %2334 = vperm.xlu0 %2333, %v2263
        %v2335 = vpop.permute.xlu0 %2334
        %v2336 = vlaneseq
        %v2337 = vshrl.u32 %v2336, 7
        %v2338 = vadd.s32 %v2337, 96
        %2339 = vset.pattern.permute.xlu0 %v2338
        %2340 = vperm.xlu0 %2339, %v2263
        %v2341 = vpop.permute.xlu0 %2340
        %v2342 = vlaneseq
        %v2343 = vshrl.u32 %v2342, 7
        %v2344 = vadd.s32 %v2343, 104
        %2345 = vset.pattern.permute.xlu0 %v2344
        %2346 = vperm.xlu0 %2345, %v2263
        %v2347 = vpop.permute.xlu0 %2346
        %v2348 = vlaneseq
        %v2349 = vshrl.u32 %v2348, 7
        %v2350 = vadd.s32 %v2349, 112
        %2351 = vset.pattern.permute.xlu0 %v2350
        %2352 = vperm.xlu0 %2351, %v2263
        %v2353 = vpop.permute.xlu0 %2352
        %v2354 = vlaneseq
        %v2355 = vshrl.u32 %v2354, 7
        %v2356 = vadd.s32 %v2355, 120
        %2357 = vset.pattern.permute.xlu0 %v2356
        %2358 = vperm.xlu0 %2357, %v2263
        %v2359 = vpop.permute.xlu0 %2358
        %v2360 = vperm.slane %v1940, 3
        %v2361 = vlaneseq
        %v2362 = vshrl.u32 %v2361, 7
        %2364 = vset.pattern.permute.xlu0 %v2362
        %2365 = vperm.xlu0 %2364, %v2360
        %v2366 = vpop.permute.xlu0 %2365
        %v2367 = vlaneseq
        %v2368 = vshrl.u32 %v2367, 7
        %v2369 = vadd.s32 %v2368, 8
        %2370 = vset.pattern.permute.xlu0 %v2369
        %2371 = vperm.xlu0 %2370, %v2360
        %v2372 = vpop.permute.xlu0 %2371
        %v2373 = vlaneseq
        %v2374 = vshrl.u32 %v2373, 7
        %v2375 = vadd.s32 %v2374, 16
        %2376 = vset.pattern.permute.xlu0 %v2375
        %2377 = vperm.xlu0 %2376, %v2360
        %v2378 = vpop.permute.xlu0 %2377
        %v2379 = vlaneseq
        %v2380 = vshrl.u32 %v2379, 7
        %v2381 = vadd.s32 %v2380, 24
        %2382 = vset.pattern.permute.xlu0 %v2381
        %2383 = vperm.xlu0 %2382, %v2360
        %v2384 = vpop.permute.xlu0 %2383
        %v2385 = vlaneseq
        %v2386 = vshrl.u32 %v2385, 7
        %v2387 = vadd.s32 %v2386, 32
        %2388 = vset.pattern.permute.xlu0 %v2387
        %2389 = vperm.xlu0 %2388, %v2360
        %v2390 = vpop.permute.xlu0 %2389
        %v2391 = vlaneseq
        %v2392 = vshrl.u32 %v2391, 7
        %v2393 = vadd.s32 %v2392, 40
        %2394 = vset.pattern.permute.xlu0 %v2393
        %2395 = vperm.xlu0 %2394, %v2360
        %v2396 = vpop.permute.xlu0 %2395
        %v2397 = vlaneseq
        %v2398 = vshrl.u32 %v2397, 7
        %v2399 = vadd.s32 %v2398, 48
        %2400 = vset.pattern.permute.xlu0 %v2399
        %2401 = vperm.xlu0 %2400, %v2360
        %v2402 = vpop.permute.xlu0 %2401
        %v2403 = vlaneseq
        %v2404 = vshrl.u32 %v2403, 7
        %v2405 = vadd.s32 %v2404, 56
        %2406 = vset.pattern.permute.xlu0 %v2405
        %2407 = vperm.xlu0 %2406, %v2360
        %v2408 = vpop.permute.xlu0 %2407
        %v2409 = vlaneseq
        %v2410 = vshrl.u32 %v2409, 7
        %v2411 = vadd.s32 %v2410, 64
        %2412 = vset.pattern.permute.xlu0 %v2411
        %2413 = vperm.xlu0 %2412, %v2360
        %v2414 = vpop.permute.xlu0 %2413
        %v2415 = vlaneseq
        %v2416 = vshrl.u32 %v2415, 7
        %v2417 = vadd.s32 %v2416, 72
        %2418 = vset.pattern.permute.xlu0 %v2417
        %2419 = vperm.xlu0 %2418, %v2360
        %v2420 = vpop.permute.xlu0 %2419
        %v2421 = vlaneseq
        %v2422 = vshrl.u32 %v2421, 7
        %v2423 = vadd.s32 %v2422, 80
        %2424 = vset.pattern.permute.xlu0 %v2423
        %2425 = vperm.xlu0 %2424, %v2360
        %v2426 = vpop.permute.xlu0 %2425
        %v2427 = vlaneseq
        %v2428 = vshrl.u32 %v2427, 7
        %v2429 = vadd.s32 %v2428, 88
        %2430 = vset.pattern.permute.xlu0 %v2429
        %2431 = vperm.xlu0 %2430, %v2360
        %v2432 = vpop.permute.xlu0 %2431
        %v2433 = vlaneseq
        %v2434 = vshrl.u32 %v2433, 7
        %v2435 = vadd.s32 %v2434, 96
        %2436 = vset.pattern.permute.xlu0 %v2435
        %2437 = vperm.xlu0 %2436, %v2360
        %v2438 = vpop.permute.xlu0 %2437
        %v2439 = vlaneseq
        %v2440 = vshrl.u32 %v2439, 7
        %v2441 = vadd.s32 %v2440, 104
        %2442 = vset.pattern.permute.xlu0 %v2441
        %2443 = vperm.xlu0 %2442, %v2360
        %v2444 = vpop.permute.xlu0 %2443
        %v2445 = vlaneseq
        %v2446 = vshrl.u32 %v2445, 7
        %v2447 = vadd.s32 %v2446, 112
        %2448 = vset.pattern.permute.xlu0 %v2447
        %2449 = vperm.xlu0 %2448, %v2360
        %v2450 = vpop.permute.xlu0 %2449
        %v2451 = vlaneseq
        %v2452 = vshrl.u32 %v2451, 7
        %v2453 = vadd.s32 %v2452, 120
        %2454 = vset.pattern.permute.xlu0 %v2453
        %2455 = vperm.xlu0 %2454, %v2360
        %v2456 = vpop.permute.xlu0 %2455
        %v2457 = vperm.slane %v1940, 4
        %v2458 = vlaneseq
        %v2459 = vshrl.u32 %v2458, 7
        %2461 = vset.pattern.permute.xlu0 %v2459
        %2462 = vperm.xlu0 %2461, %v2457
        %v2463 = vpop.permute.xlu0 %2462
        %v2464 = vlaneseq
        %v2465 = vshrl.u32 %v2464, 7
        %v2466 = vadd.s32 %v2465, 8
        %2467 = vset.pattern.permute.xlu0 %v2466
        %2468 = vperm.xlu0 %2467, %v2457
        %v2469 = vpop.permute.xlu0 %2468
        %v2470 = vlaneseq
        %v2471 = vshrl.u32 %v2470, 7
        %v2472 = vadd.s32 %v2471, 16
        %2473 = vset.pattern.permute.xlu0 %v2472
        %2474 = vperm.xlu0 %2473, %v2457
        %v2475 = vpop.permute.xlu0 %2474
        %v2476 = vlaneseq
        %v2477 = vshrl.u32 %v2476, 7
        %v2478 = vadd.s32 %v2477, 24
        %2479 = vset.pattern.permute.xlu0 %v2478
        %2480 = vperm.xlu0 %2479, %v2457
        %v2481 = vpop.permute.xlu0 %2480
        %v2482 = vlaneseq
        %v2483 = vshrl.u32 %v2482, 7
        %v2484 = vadd.s32 %v2483, 32
        %2485 = vset.pattern.permute.xlu0 %v2484
        %2486 = vperm.xlu0 %2485, %v2457
        %v2487 = vpop.permute.xlu0 %2486
        %v2488 = vlaneseq
        %v2489 = vshrl.u32 %v2488, 7
        %v2490 = vadd.s32 %v2489, 40
        %2491 = vset.pattern.permute.xlu0 %v2490
        %2492 = vperm.xlu0 %2491, %v2457
        %v2493 = vpop.permute.xlu0 %2492
        %v2494 = vlaneseq
        %v2495 = vshrl.u32 %v2494, 7
        %v2496 = vadd.s32 %v2495, 48
        %2497 = vset.pattern.permute.xlu0 %v2496
        %2498 = vperm.xlu0 %2497, %v2457
        %v2499 = vpop.permute.xlu0 %2498
        %v2500 = vlaneseq
        %v2501 = vshrl.u32 %v2500, 7
        %v2502 = vadd.s32 %v2501, 56
        %2503 = vset.pattern.permute.xlu0 %v2502
        %2504 = vperm.xlu0 %2503, %v2457
        %v2505 = vpop.permute.xlu0 %2504
        %v2506 = vlaneseq
        %v2507 = vshrl.u32 %v2506, 7
        %v2508 = vadd.s32 %v2507, 64
        %2509 = vset.pattern.permute.xlu0 %v2508
        %2510 = vperm.xlu0 %2509, %v2457
        %v2511 = vpop.permute.xlu0 %2510
        %v2512 = vlaneseq
        %v2513 = vshrl.u32 %v2512, 7
        %v2514 = vadd.s32 %v2513, 72
        %2515 = vset.pattern.permute.xlu0 %v2514
        %2516 = vperm.xlu0 %2515, %v2457
        %v2517 = vpop.permute.xlu0 %2516
        %v2518 = vlaneseq
        %v2519 = vshrl.u32 %v2518, 7
        %v2520 = vadd.s32 %v2519, 80
        %2521 = vset.pattern.permute.xlu0 %v2520
        %2522 = vperm.xlu0 %2521, %v2457
        %v2523 = vpop.permute.xlu0 %2522
        %v2524 = vlaneseq
        %v2525 = vshrl.u32 %v2524, 7
        %v2526 = vadd.s32 %v2525, 88
        %2527 = vset.pattern.permute.xlu0 %v2526
        %2528 = vperm.xlu0 %2527, %v2457
        %v2529 = vpop.permute.xlu0 %2528
        %v2530 = vlaneseq
        %v2531 = vshrl.u32 %v2530, 7
        %v2532 = vadd.s32 %v2531, 96
        %2533 = vset.pattern.permute.xlu0 %v2532
        %2534 = vperm.xlu0 %2533, %v2457
        %v2535 = vpop.permute.xlu0 %2534
        %v2536 = vlaneseq
        %v2537 = vshrl.u32 %v2536, 7
        %v2538 = vadd.s32 %v2537, 104
        %2539 = vset.pattern.permute.xlu0 %v2538
        %2540 = vperm.xlu0 %2539, %v2457
        %v2541 = vpop.permute.xlu0 %2540
        %v2542 = vlaneseq
        %v2543 = vshrl.u32 %v2542, 7
        %v2544 = vadd.s32 %v2543, 112
        %2545 = vset.pattern.permute.xlu0 %v2544
        %2546 = vperm.xlu0 %2545, %v2457
        %v2547 = vpop.permute.xlu0 %2546
        %v2548 = vlaneseq
        %v2549 = vshrl.u32 %v2548, 7
        %v2550 = vadd.s32 %v2549, 120
        %2551 = vset.pattern.permute.xlu0 %v2550
        %2552 = vperm.xlu0 %2551, %v2457
        %v2553 = vpop.permute.xlu0 %2552
        %v2554 = vperm.slane %v1940, 5
        %v2555 = vlaneseq
        %v2556 = vshrl.u32 %v2555, 7
        %2558 = vset.pattern.permute.xlu0 %v2556
        %2559 = vperm.xlu0 %2558, %v2554
        %v2560 = vpop.permute.xlu0 %2559
        %v2561 = vlaneseq
        %v2562 = vshrl.u32 %v2561, 7
        %v2563 = vadd.s32 %v2562, 8
        %2564 = vset.pattern.permute.xlu0 %v2563
        %2565 = vperm.xlu0 %2564, %v2554
        %v2566 = vpop.permute.xlu0 %2565
        %v2567 = vlaneseq
        %v2568 = vshrl.u32 %v2567, 7
        %v2569 = vadd.s32 %v2568, 16
        %2570 = vset.pattern.permute.xlu0 %v2569
        %2571 = vperm.xlu0 %2570, %v2554
        %v2572 = vpop.permute.xlu0 %2571
        %v2573 = vlaneseq
        %v2574 = vshrl.u32 %v2573, 7
        %v2575 = vadd.s32 %v2574, 24
        %2576 = vset.pattern.permute.xlu0 %v2575
        %2577 = vperm.xlu0 %2576, %v2554
        %v2578 = vpop.permute.xlu0 %2577
        %v2579 = vlaneseq
        %v2580 = vshrl.u32 %v2579, 7
        %v2581 = vadd.s32 %v2580, 32
        %2582 = vset.pattern.permute.xlu0 %v2581
        %2583 = vperm.xlu0 %2582, %v2554
        %v2584 = vpop.permute.xlu0 %2583
        %v2585 = vlaneseq
        %v2586 = vshrl.u32 %v2585, 7
        %v2587 = vadd.s32 %v2586, 40
        %2588 = vset.pattern.permute.xlu0 %v2587
        %2589 = vperm.xlu0 %2588, %v2554
        %v2590 = vpop.permute.xlu0 %2589
        %v2591 = vlaneseq
        %v2592 = vshrl.u32 %v2591, 7
        %v2593 = vadd.s32 %v2592, 48
        %2594 = vset.pattern.permute.xlu0 %v2593
        %2595 = vperm.xlu0 %2594, %v2554
        %v2596 = vpop.permute.xlu0 %2595
        %v2597 = vlaneseq
        %v2598 = vshrl.u32 %v2597, 7
        %v2599 = vadd.s32 %v2598, 56
        %2600 = vset.pattern.permute.xlu0 %v2599
        %2601 = vperm.xlu0 %2600, %v2554
        %v2602 = vpop.permute.xlu0 %2601
        %v2603 = vlaneseq
        %v2604 = vshrl.u32 %v2603, 7
        %v2605 = vadd.s32 %v2604, 64
        %2606 = vset.pattern.permute.xlu0 %v2605
        %2607 = vperm.xlu0 %2606, %v2554
        %v2608 = vpop.permute.xlu0 %2607
        %v2609 = vlaneseq
        %v2610 = vshrl.u32 %v2609, 7
        %v2611 = vadd.s32 %v2610, 72
        %2612 = vset.pattern.permute.xlu0 %v2611
        %2613 = vperm.xlu0 %2612, %v2554
        %v2614 = vpop.permute.xlu0 %2613
        %v2615 = vlaneseq
        %v2616 = vshrl.u32 %v2615, 7
        %v2617 = vadd.s32 %v2616, 80
        %2618 = vset.pattern.permute.xlu0 %v2617
        %2619 = vperm.xlu0 %2618, %v2554
        %v2620 = vpop.permute.xlu0 %2619
        %v2621 = vlaneseq
        %v2622 = vshrl.u32 %v2621, 7
        %v2623 = vadd.s32 %v2622, 88
        %2624 = vset.pattern.permute.xlu0 %v2623
        %2625 = vperm.xlu0 %2624, %v2554
        %v2626 = vpop.permute.xlu0 %2625
        %v2627 = vlaneseq
        %v2628 = vshrl.u32 %v2627, 7
        %v2629 = vadd.s32 %v2628, 96
        %2630 = vset.pattern.permute.xlu0 %v2629
        %2631 = vperm.xlu0 %2630, %v2554
        %v2632 = vpop.permute.xlu0 %2631
        %v2633 = vlaneseq
        %v2634 = vshrl.u32 %v2633, 7
        %v2635 = vadd.s32 %v2634, 104
        %2636 = vset.pattern.permute.xlu0 %v2635
        %2637 = vperm.xlu0 %2636, %v2554
        %v2638 = vpop.permute.xlu0 %2637
        %v2639 = vlaneseq
        %v2640 = vshrl.u32 %v2639, 7
        %v2641 = vadd.s32 %v2640, 112
        %2642 = vset.pattern.permute.xlu0 %v2641
        %2643 = vperm.xlu0 %2642, %v2554
        %v2644 = vpop.permute.xlu0 %2643
        %v2645 = vlaneseq
        %v2646 = vshrl.u32 %v2645, 7
        %v2647 = vadd.s32 %v2646, 120
        %2648 = vset.pattern.permute.xlu0 %v2647
        %2649 = vperm.xlu0 %2648, %v2554
        %v2650 = vpop.permute.xlu0 %2649
        %v2651 = vperm.slane %v1940, 6
        %v2652 = vlaneseq
        %v2653 = vshrl.u32 %v2652, 7
        %2655 = vset.pattern.permute.xlu0 %v2653
        %2656 = vperm.xlu0 %2655, %v2651
        %v2657 = vpop.permute.xlu0 %2656
        %v2658 = vlaneseq
        %v2659 = vshrl.u32 %v2658, 7
        %v2660 = vadd.s32 %v2659, 8
        %2661 = vset.pattern.permute.xlu0 %v2660
        %2662 = vperm.xlu0 %2661, %v2651
        %v2663 = vpop.permute.xlu0 %2662
        %v2664 = vlaneseq
        %v2665 = vshrl.u32 %v2664, 7
        %v2666 = vadd.s32 %v2665, 16
        %2667 = vset.pattern.permute.xlu0 %v2666
        %2668 = vperm.xlu0 %2667, %v2651
        %v2669 = vpop.permute.xlu0 %2668
        %v2670 = vlaneseq
        %v2671 = vshrl.u32 %v2670, 7
        %v2672 = vadd.s32 %v2671, 24
        %2673 = vset.pattern.permute.xlu0 %v2672
        %2674 = vperm.xlu0 %2673, %v2651
        %v2675 = vpop.permute.xlu0 %2674
        %v2676 = vlaneseq
        %v2677 = vshrl.u32 %v2676, 7
        %v2678 = vadd.s32 %v2677, 32
        %2679 = vset.pattern.permute.xlu0 %v2678
        %2680 = vperm.xlu0 %2679, %v2651
        %v2681 = vpop.permute.xlu0 %2680
        %v2682 = vlaneseq
        %v2683 = vshrl.u32 %v2682, 7
        %v2684 = vadd.s32 %v2683, 40
        %2685 = vset.pattern.permute.xlu0 %v2684
        %2686 = vperm.xlu0 %2685, %v2651
        %v2687 = vpop.permute.xlu0 %2686
        %v2688 = vlaneseq
        %v2689 = vshrl.u32 %v2688, 7
        %v2690 = vadd.s32 %v2689, 48
        %2691 = vset.pattern.permute.xlu0 %v2690
        %2692 = vperm.xlu0 %2691, %v2651
        %v2693 = vpop.permute.xlu0 %2692
        %v2694 = vlaneseq
        %v2695 = vshrl.u32 %v2694, 7
        %v2696 = vadd.s32 %v2695, 56
        %2697 = vset.pattern.permute.xlu0 %v2696
        %2698 = vperm.xlu0 %2697, %v2651
        %v2699 = vpop.permute.xlu0 %2698
        %v2700 = vlaneseq
        %v2701 = vshrl.u32 %v2700, 7
        %v2702 = vadd.s32 %v2701, 64
        %2703 = vset.pattern.permute.xlu0 %v2702
        %2704 = vperm.xlu0 %2703, %v2651
        %v2705 = vpop.permute.xlu0 %2704
        %v2706 = vlaneseq
        %v2707 = vshrl.u32 %v2706, 7
        %v2708 = vadd.s32 %v2707, 72
        %2709 = vset.pattern.permute.xlu0 %v2708
        %2710 = vperm.xlu0 %2709, %v2651
        %v2711 = vpop.permute.xlu0 %2710
        %v2712 = vlaneseq
        %v2713 = vshrl.u32 %v2712, 7
        %v2714 = vadd.s32 %v2713, 80
        %2715 = vset.pattern.permute.xlu0 %v2714
        %2716 = vperm.xlu0 %2715, %v2651
        %v2717 = vpop.permute.xlu0 %2716
        %v2718 = vlaneseq
        %v2719 = vshrl.u32 %v2718, 7
        %v2720 = vadd.s32 %v2719, 88
        %2721 = vset.pattern.permute.xlu0 %v2720
        %2722 = vperm.xlu0 %2721, %v2651
        %v2723 = vpop.permute.xlu0 %2722
        %v2724 = vlaneseq
        %v2725 = vshrl.u32 %v2724, 7
        %v2726 = vadd.s32 %v2725, 96
        %2727 = vset.pattern.permute.xlu0 %v2726
        %2728 = vperm.xlu0 %2727, %v2651
        %v2729 = vpop.permute.xlu0 %2728
        %v2730 = vlaneseq
        %v2731 = vshrl.u32 %v2730, 7
        %v2732 = vadd.s32 %v2731, 104
        %2733 = vset.pattern.permute.xlu0 %v2732
        %2734 = vperm.xlu0 %2733, %v2651
        %v2735 = vpop.permute.xlu0 %2734
        %v2736 = vlaneseq
        %v2737 = vshrl.u32 %v2736, 7
        %v2738 = vadd.s32 %v2737, 112
        %2739 = vset.pattern.permute.xlu0 %v2738
        %2740 = vperm.xlu0 %2739, %v2651
        %v2741 = vpop.permute.xlu0 %2740
        %v2742 = vlaneseq
        %v2743 = vshrl.u32 %v2742, 7
        %v2744 = vadd.s32 %v2743, 120
        %2745 = vset.pattern.permute.xlu0 %v2744
        %2746 = vperm.xlu0 %2745, %v2651
        %v2747 = vpop.permute.xlu0 %2746
        %v2748 = vperm.slane %v1940, 7
        %v2749 = vlaneseq
        %v2750 = vshrl.u32 %v2749, 7
        %2752 = vset.pattern.permute.xlu0 %v2750
        %2753 = vperm.xlu0 %2752, %v2748
        %v2754 = vpop.permute.xlu0 %2753
        %v2755 = vlaneseq
        %v2756 = vshrl.u32 %v2755, 7
        %v2757 = vadd.s32 %v2756, 8
        %2758 = vset.pattern.permute.xlu0 %v2757
        %2759 = vperm.xlu0 %2758, %v2748
        %v2760 = vpop.permute.xlu0 %2759
        %v2761 = vlaneseq
        %v2762 = vshrl.u32 %v2761, 7
        %v2763 = vadd.s32 %v2762, 16
        %2764 = vset.pattern.permute.xlu0 %v2763
        %2765 = vperm.xlu0 %2764, %v2748
        %v2766 = vpop.permute.xlu0 %2765
        %v2767 = vlaneseq
        %v2768 = vshrl.u32 %v2767, 7
        %v2769 = vadd.s32 %v2768, 24
        %2770 = vset.pattern.permute.xlu0 %v2769
        %2771 = vperm.xlu0 %2770, %v2748
        %v2772 = vpop.permute.xlu0 %2771
        %v2773 = vlaneseq
        %v2774 = vshrl.u32 %v2773, 7
        %v2775 = vadd.s32 %v2774, 32
        %2776 = vset.pattern.permute.xlu0 %v2775
        %2777 = vperm.xlu0 %2776, %v2748
        %v2778 = vpop.permute.xlu0 %2777
        %v2779 = vlaneseq
        %v2780 = vshrl.u32 %v2779, 7
        %v2781 = vadd.s32 %v2780, 40
        %2782 = vset.pattern.permute.xlu0 %v2781
        %2783 = vperm.xlu0 %2782, %v2748
        %v2784 = vpop.permute.xlu0 %2783
        %v2785 = vlaneseq
        %v2786 = vshrl.u32 %v2785, 7
        %v2787 = vadd.s32 %v2786, 48
        %2788 = vset.pattern.permute.xlu0 %v2787
        %2789 = vperm.xlu0 %2788, %v2748
        %v2790 = vpop.permute.xlu0 %2789
        %v2791 = vlaneseq
        %v2792 = vshrl.u32 %v2791, 7
        %v2793 = vadd.s32 %v2792, 56
        %2794 = vset.pattern.permute.xlu0 %v2793
        %2795 = vperm.xlu0 %2794, %v2748
        %v2796 = vpop.permute.xlu0 %2795
        %v2797 = vlaneseq
        %v2798 = vshrl.u32 %v2797, 7
        %v2799 = vadd.s32 %v2798, 64
        %2800 = vset.pattern.permute.xlu0 %v2799
        %2801 = vperm.xlu0 %2800, %v2748
        %v2802 = vpop.permute.xlu0 %2801
        %v2803 = vlaneseq
        %v2804 = vshrl.u32 %v2803, 7
        %v2805 = vadd.s32 %v2804, 72
        %2806 = vset.pattern.permute.xlu0 %v2805
        %2807 = vperm.xlu0 %2806, %v2748
        %v2808 = vpop.permute.xlu0 %2807
        %v2809 = vlaneseq
        %v2810 = vshrl.u32 %v2809, 7
        %v2811 = vadd.s32 %v2810, 80
        %2812 = vset.pattern.permute.xlu0 %v2811
        %2813 = vperm.xlu0 %2812, %v2748
        %v2814 = vpop.permute.xlu0 %2813
        %v2815 = vlaneseq
        %v2816 = vshrl.u32 %v2815, 7
        %v2817 = vadd.s32 %v2816, 88
        %2818 = vset.pattern.permute.xlu0 %v2817
        %2819 = vperm.xlu0 %2818, %v2748
        %v2820 = vpop.permute.xlu0 %2819
        %v2821 = vlaneseq
        %v2822 = vshrl.u32 %v2821, 7
        %v2823 = vadd.s32 %v2822, 96
        %2824 = vset.pattern.permute.xlu0 %v2823
        %2825 = vperm.xlu0 %2824, %v2748
        %v2826 = vpop.permute.xlu0 %2825
        %v2827 = vlaneseq
        %v2828 = vshrl.u32 %v2827, 7
        %v2829 = vadd.s32 %v2828, 104
        %2830 = vset.pattern.permute.xlu0 %v2829
        %2831 = vperm.xlu0 %2830, %v2748
        %v2832 = vpop.permute.xlu0 %2831
        %v2833 = vlaneseq
        %v2834 = vshrl.u32 %v2833, 7
        %v2835 = vadd.s32 %v2834, 112
        %2836 = vset.pattern.permute.xlu0 %v2835
        %2837 = vperm.xlu0 %2836, %v2748
        %v2838 = vpop.permute.xlu0 %2837
        %v2839 = vlaneseq
        %v2840 = vshrl.u32 %v2839, 7
        %v2841 = vadd.s32 %v2840, 120
        %2842 = vset.pattern.permute.xlu0 %v2841
        %2843 = vperm.xlu0 %2842, %v2748
        %v2844 = vpop.permute.xlu0 %2843
        %v2845 = vmul.f32 %v1941, %v2075
        %v2846 = vmul.f32 %v1942, %v2081
        %v2847 = vmul.f32 %v1943, %v2087
        %v2848 = vmul.f32 %v1944, %v2093
        %v2849 = vmul.f32 %v1945, %v2099
        %v2850 = vmul.f32 %v1946, %v2105
        %v2851 = vmul.f32 %v1947, %v2111
        %v2852 = vmul.f32 %v1948, %v2117
        %v2853 = vmul.f32 %v1949, %v2123
        %v2854 = vmul.f32 %v1950, %v2129
        %v2855 = vmul.f32 %v1951, %v2135
        %v2856 = vmul.f32 %v1952, %v2141
        %v2857 = vmul.f32 %v1953, %v2147
        %v2858 = vmul.f32 %v1954, %v2153
        %v2859 = vmul.f32 %v1955, %v2159
        %v2860 = vmul.f32 %v1956, %v2165
        %v2861 = vmul.f32 %v1957, %v2172
        %v2862 = vmul.f32 %v1958, %v2178
        %v2863 = vmul.f32 %v1959, %v2184
        %v2864 = vmul.f32 %v1960, %v2190
        %v2865 = vmul.f32 %v1961, %v2196
        %v2866 = vmul.f32 %v1962, %v2202
        %v2867 = vmul.f32 %v1963, %v2208
        %v2868 = vmul.f32 %v1964, %v2214
        %v2869 = vmul.f32 %v1965, %v2220
        %v2870 = vmul.f32 %v1966, %v2226
        %v2871 = vmul.f32 %v1967, %v2232
        %v2872 = vmul.f32 %v1968, %v2238
        %v2873 = vmul.f32 %v1969, %v2244
        %v2874 = vmul.f32 %v1970, %v2250
        %v2875 = vmul.f32 %v1971, %v2256
        %v2876 = vmul.f32 %v1972, %v2262
        %v2877 = vmul.f32 %v1973, %v2269
        %v2878 = vmul.f32 %v1974, %v2275
        %v2879 = vmul.f32 %v1975, %v2281
        %v2880 = vmul.f32 %v1976, %v2287
        %v2881 = vmul.f32 %v1977, %v2293
        %v2882 = vmul.f32 %v1978, %v2299
        %v2883 = vmul.f32 %v1979, %v2305
        %v2884 = vmul.f32 %v1980, %v2311
        %v2885 = vmul.f32 %v1981, %v2317
        %v2886 = vmul.f32 %v1982, %v2323
        %v2887 = vmul.f32 %v1983, %v2329
        %v2888 = vmul.f32 %v1984, %v2335
        %v2889 = vmul.f32 %v1985, %v2341
        %v2890 = vmul.f32 %v1986, %v2347
        %v2891 = vmul.f32 %v1987, %v2353
        %v2892 = vmul.f32 %v1988, %v2359
        %v2893 = vmul.f32 %v1989, %v2366
        %v2894 = vmul.f32 %v1990, %v2372
        %v2895 = vmul.f32 %v1991, %v2378
        %v2896 = vmul.f32 %v1992, %v2384
        %v2897 = vmul.f32 %v1993, %v2390
        %v2898 = vmul.f32 %v1994, %v2396
        %v2899 = vmul.f32 %v1995, %v2402
        %v2900 = vmul.f32 %v1996, %v2408
        %v2901 = vmul.f32 %v1997, %v2414
        %v2902 = vmul.f32 %v1998, %v2420
        %v2903 = vmul.f32 %v1999, %v2426
        %v2904 = vmul.f32 %v2000, %v2432
        %v2905 = vmul.f32 %v2001, %v2438
        %v2906 = vmul.f32 %v2002, %v2444
        %v2907 = vmul.f32 %v2003, %v2450
        %v2908 = vmul.f32 %v2004, %v2456
        %v2909 = vmul.f32 %v2005, %v2463
        %v2910 = vmul.f32 %v2006, %v2469
        %v2911 = vmul.f32 %v2007, %v2475
        %v2912 = vmul.f32 %v2008, %v2481
        %v2913 = vmul.f32 %v2009, %v2487
        %v2914 = vmul.f32 %v2010, %v2493
        %v2915 = vmul.f32 %v2011, %v2499
        %v2916 = vmul.f32 %v2012, %v2505
        %v2917 = vmul.f32 %v2013, %v2511
        %v2918 = vmul.f32 %v2014, %v2517
        %v2919 = vmul.f32 %v2015, %v2523
        %v2920 = vmul.f32 %v2016, %v2529
        %v2921 = vmul.f32 %v2017, %v2535
        %v2922 = vmul.f32 %v2018, %v2541
        %v2923 = vmul.f32 %v2019, %v2547
        %v2924 = vmul.f32 %v2020, %v2553
        %v2925 = vmul.f32 %v2021, %v2560
        %v2926 = vmul.f32 %v2022, %v2566
        %v2927 = vmul.f32 %v2023, %v2572
        %v2928 = vmul.f32 %v2024, %v2578
        %v2929 = vmul.f32 %v2025, %v2584
        %v2930 = vmul.f32 %v2026, %v2590
        %v2931 = vmul.f32 %v2027, %v2596
        %v2932 = vmul.f32 %v2028, %v2602
        %v2933 = vmul.f32 %v2029, %v2608
        %v2934 = vmul.f32 %v2030, %v2614
        %v2935 = vmul.f32 %v2031, %v2620
        %v2936 = vmul.f32 %v2032, %v2626
        %v2937 = vmul.f32 %v2033, %v2632
        %v2938 = vmul.f32 %v2034, %v2638
        %v2939 = vmul.f32 %v2035, %v2644
        %v2940 = vmul.f32 %v2036, %v2650
        %v2941 = vmul.f32 %v2037, %v2657
        %v2942 = vmul.f32 %v2038, %v2663
        %v2943 = vmul.f32 %v2039, %v2669
        %v2944 = vmul.f32 %v2040, %v2675
        %v2945 = vmul.f32 %v2041, %v2681
        %v2946 = vmul.f32 %v2042, %v2687
        %v2947 = vmul.f32 %v2043, %v2693
        %v2948 = vmul.f32 %v2044, %v2699
        %v2949 = vmul.f32 %v2045, %v2705
        %v2950 = vmul.f32 %v2046, %v2711
        %v2951 = vmul.f32 %v2047, %v2717
        %v2952 = vmul.f32 %v2048, %v2723
        %v2953 = vmul.f32 %v2049, %v2729
        %v2954 = vmul.f32 %v2050, %v2735
        %v2955 = vmul.f32 %v2051, %v2741
        %v2956 = vmul.f32 %v2052, %v2747
        %v2957 = vmul.f32 %v2053, %v2754
        %v2958 = vmul.f32 %v2054, %v2760
        %v2959 = vmul.f32 %v2055, %v2766
        %v2960 = vmul.f32 %v2056, %v2772
        %v2961 = vmul.f32 %v2057, %v2778
        %v2962 = vmul.f32 %v2058, %v2784
        %v2963 = vmul.f32 %v2059, %v2790
        %v2964 = vmul.f32 %v2060, %v2796
        %v2965 = vmul.f32 %v2061, %v2802
        %v2966 = vmul.f32 %v2062, %v2808
        %v2967 = vmul.f32 %v2063, %v2814
        %v2968 = vmul.f32 %v2064, %v2820
        %v2969 = vmul.f32 %v2065, %v2826
        %v2970 = vmul.f32 %v2066, %v2832
        %v2971 = vmul.f32 %v2067, %v2838
        %v2972 = vmul.f32 %v2068, %v2844
        %v2973 = vsel %vm546, %v2845, 0.0
        %v2974 = vsel %vm546, %v2846, 0.0
        %v2975 = vadd.f32 %v2973, %v2974
        %v2976 = vsel %vm546, %v2847, 0.0
        %v2977 = vadd.f32 %v2975, %v2976
        %v2978 = vsel %vm546, %v2848, 0.0
        %v2979 = vadd.f32 %v2977, %v2978
        %v2980 = vsel %vm546, %v2849, 0.0
        %v2981 = vadd.f32 %v2979, %v2980
        %v2982 = vsel %vm546, %v2850, 0.0
        %v2983 = vadd.f32 %v2981, %v2982
        %v2984 = vsel %vm546, %v2851, 0.0
        %v2985 = vadd.f32 %v2983, %v2984
        %v2986 = vsel %vm546, %v2852, 0.0
        %v2987 = vadd.f32 %v2985, %v2986
        %v2988 = vsel %vm546, %v2853, 0.0
        %v2989 = vadd.f32 %v2987, %v2988
        %v2990 = vsel %vm546, %v2854, 0.0
        %v2991 = vadd.f32 %v2989, %v2990
        %v2992 = vsel %vm546, %v2855, 0.0
        %v2993 = vadd.f32 %v2991, %v2992
        %v2994 = vsel %vm546, %v2856, 0.0
        %v2995 = vadd.f32 %v2993, %v2994
        %v2996 = vsel %vm546, %v2857, 0.0
        %v2997 = vadd.f32 %v2995, %v2996
        %v2998 = vsel %vm546, %v2858, 0.0
        %v2999 = vadd.f32 %v2997, %v2998
        %v3000 = vsel %vm546, %v2859, 0.0
        %v3001 = vadd.f32 %v2999, %v3000
        %v3002 = vsel %vm546, %v2860, 0.0
        %v3003 = vadd.f32 %v3001, %v3002
        %v3004 = vrot.slane %v3003, 4
        %v3005 = vadd.f32 %v3003, %v3004
        %v3006 = vrot.slane %v3005, 2
        %v3007 = vadd.f32 %v3005, %v3006
        %v3008 = vrot.slane %v3007, 1
        %v3009 = vadd.f32 %v3007, %v3008
        %v3010 = vsel %vm546, %v2861, 0.0
        %v3011 = vsel %vm546, %v2862, 0.0
        %v3012 = vadd.f32 %v3010, %v3011
        %v3013 = vsel %vm546, %v2863, 0.0
        %v3014 = vadd.f32 %v3012, %v3013
        %v3015 = vsel %vm546, %v2864, 0.0
        %v3016 = vadd.f32 %v3014, %v3015
        %v3017 = vsel %vm546, %v2865, 0.0
        %v3018 = vadd.f32 %v3016, %v3017
        %v3019 = vsel %vm546, %v2866, 0.0
        %v3020 = vadd.f32 %v3018, %v3019
        %v3021 = vsel %vm546, %v2867, 0.0
        %v3022 = vadd.f32 %v3020, %v3021
        %v3023 = vsel %vm546, %v2868, 0.0
        %v3024 = vadd.f32 %v3022, %v3023
        %v3025 = vsel %vm546, %v2869, 0.0
        %v3026 = vadd.f32 %v3024, %v3025
        %v3027 = vsel %vm546, %v2870, 0.0
        %v3028 = vadd.f32 %v3026, %v3027
        %v3029 = vsel %vm546, %v2871, 0.0
        %v3030 = vadd.f32 %v3028, %v3029
        %v3031 = vsel %vm546, %v2872, 0.0
        %v3032 = vadd.f32 %v3030, %v3031
        %v3033 = vsel %vm546, %v2873, 0.0
        %v3034 = vadd.f32 %v3032, %v3033
        %v3035 = vsel %vm546, %v2874, 0.0
        %v3036 = vadd.f32 %v3034, %v3035
        %v3037 = vsel %vm546, %v2875, 0.0
        %v3038 = vadd.f32 %v3036, %v3037
        %v3039 = vsel %vm546, %v2876, 0.0
        %v3040 = vadd.f32 %v3038, %v3039
        %v3041 = vrot.slane %v3040, 4
        %v3042 = vadd.f32 %v3040, %v3041
        %v3043 = vrot.slane %v3042, 2
        %v3044 = vadd.f32 %v3042, %v3043
        %v3045 = vrot.slane %v3044, 1
        %v3046 = vadd.f32 %v3044, %v3045
        %v3047 = vsel %vm546, %v2877, 0.0
        %v3048 = vsel %vm546, %v2878, 0.0
        %v3049 = vadd.f32 %v3047, %v3048
        %v3050 = vsel %vm546, %v2879, 0.0
        %v3051 = vadd.f32 %v3049, %v3050
        %v3052 = vsel %vm546, %v2880, 0.0
        %v3053 = vadd.f32 %v3051, %v3052
        %v3054 = vsel %vm546, %v2881, 0.0
        %v3055 = vadd.f32 %v3053, %v3054
        %v3056 = vsel %vm546, %v2882, 0.0
        %v3057 = vadd.f32 %v3055, %v3056
        %v3058 = vsel %vm546, %v2883, 0.0
        %v3059 = vadd.f32 %v3057, %v3058
        %v3060 = vsel %vm546, %v2884, 0.0
        %v3061 = vadd.f32 %v3059, %v3060
        %v3062 = vsel %vm546, %v2885, 0.0
        %v3063 = vadd.f32 %v3061, %v3062
        %v3064 = vsel %vm546, %v2886, 0.0
        %v3065 = vadd.f32 %v3063, %v3064
        %v3066 = vsel %vm546, %v2887, 0.0
        %v3067 = vadd.f32 %v3065, %v3066
        %v3068 = vsel %vm546, %v2888, 0.0
        %v3069 = vadd.f32 %v3067, %v3068
        %v3070 = vsel %vm546, %v2889, 0.0
        %v3071 = vadd.f32 %v3069, %v3070
        %v3072 = vsel %vm546, %v2890, 0.0
        %v3073 = vadd.f32 %v3071, %v3072
        %v3074 = vsel %vm546, %v2891, 0.0
        %v3075 = vadd.f32 %v3073, %v3074
        %v3076 = vsel %vm546, %v2892, 0.0
        %v3077 = vadd.f32 %v3075, %v3076
        %v3078 = vrot.slane %v3077, 4
        %v3079 = vadd.f32 %v3077, %v3078
        %v3080 = vrot.slane %v3079, 2
        %v3081 = vadd.f32 %v3079, %v3080
        %v3082 = vrot.slane %v3081, 1
        %v3083 = vadd.f32 %v3081, %v3082
        %v3084 = vsel %vm546, %v2893, 0.0
        %v3085 = vsel %vm546, %v2894, 0.0
        %v3086 = vadd.f32 %v3084, %v3085
        %v3087 = vsel %vm546, %v2895, 0.0
        %v3088 = vadd.f32 %v3086, %v3087
        %v3089 = vsel %vm546, %v2896, 0.0
        %v3090 = vadd.f32 %v3088, %v3089
        %v3091 = vsel %vm546, %v2897, 0.0
        %v3092 = vadd.f32 %v3090, %v3091
        %v3093 = vsel %vm546, %v2898, 0.0
        %v3094 = vadd.f32 %v3092, %v3093
        %v3095 = vsel %vm546, %v2899, 0.0
        %v3096 = vadd.f32 %v3094, %v3095
        %v3097 = vsel %vm546, %v2900, 0.0
        %v3098 = vadd.f32 %v3096, %v3097
        %v3099 = vsel %vm546, %v2901, 0.0
        %v3100 = vadd.f32 %v3098, %v3099
        %v3101 = vsel %vm546, %v2902, 0.0
        %v3102 = vadd.f32 %v3100, %v3101
        %v3103 = vsel %vm546, %v2903, 0.0
        %v3104 = vadd.f32 %v3102, %v3103
        %v3105 = vsel %vm546, %v2904, 0.0
        %v3106 = vadd.f32 %v3104, %v3105
        %v3107 = vsel %vm546, %v2905, 0.0
        %v3108 = vadd.f32 %v3106, %v3107
        %v3109 = vsel %vm546, %v2906, 0.0
        %v3110 = vadd.f32 %v3108, %v3109
        %v3111 = vsel %vm546, %v2907, 0.0
        %v3112 = vadd.f32 %v3110, %v3111
        %v3113 = vsel %vm546, %v2908, 0.0
        %v3114 = vadd.f32 %v3112, %v3113
        %v3115 = vrot.slane %v3114, 4
        %v3116 = vadd.f32 %v3114, %v3115
        %v3117 = vrot.slane %v3116, 2
        %v3118 = vadd.f32 %v3116, %v3117
        %v3119 = vrot.slane %v3118, 1
        %v3120 = vadd.f32 %v3118, %v3119
        %v3121 = vsel %vm546, %v2909, 0.0
        %v3122 = vsel %vm546, %v2910, 0.0
        %v3123 = vadd.f32 %v3121, %v3122
        %v3124 = vsel %vm546, %v2911, 0.0
        %v3125 = vadd.f32 %v3123, %v3124
        %v3126 = vsel %vm546, %v2912, 0.0
        %v3127 = vadd.f32 %v3125, %v3126
        %v3128 = vsel %vm546, %v2913, 0.0
        %v3129 = vadd.f32 %v3127, %v3128
        %v3130 = vsel %vm546, %v2914, 0.0
        %v3131 = vadd.f32 %v3129, %v3130
        %v3132 = vsel %vm546, %v2915, 0.0
        %v3133 = vadd.f32 %v3131, %v3132
        %v3134 = vsel %vm546, %v2916, 0.0
        %v3135 = vadd.f32 %v3133, %v3134
        %v3136 = vsel %vm546, %v2917, 0.0
        %v3137 = vadd.f32 %v3135, %v3136
        %v3138 = vsel %vm546, %v2918, 0.0
        %v3139 = vadd.f32 %v3137, %v3138
        %v3140 = vsel %vm546, %v2919, 0.0
        %v3141 = vadd.f32 %v3139, %v3140
        %v3142 = vsel %vm546, %v2920, 0.0
        %v3143 = vadd.f32 %v3141, %v3142
        %v3144 = vsel %vm546, %v2921, 0.0
        %v3145 = vadd.f32 %v3143, %v3144
        %v3146 = vsel %vm546, %v2922, 0.0
        %v3147 = vadd.f32 %v3145, %v3146
        %v3148 = vsel %vm546, %v2923, 0.0
        %v3149 = vadd.f32 %v3147, %v3148
        %v3150 = vsel %vm546, %v2924, 0.0
        %v3151 = vadd.f32 %v3149, %v3150
        %v3152 = vrot.slane %v3151, 4
        %v3153 = vadd.f32 %v3151, %v3152
        %v3154 = vrot.slane %v3153, 2
        %v3155 = vadd.f32 %v3153, %v3154
        %v3156 = vrot.slane %v3155, 1
        %v3157 = vadd.f32 %v3155, %v3156
        %v3158 = vsel %vm546, %v2925, 0.0
        %v3159 = vsel %vm546, %v2926, 0.0
        %v3160 = vadd.f32 %v3158, %v3159
        %v3161 = vsel %vm546, %v2927, 0.0
        %v3162 = vadd.f32 %v3160, %v3161
        %v3163 = vsel %vm546, %v2928, 0.0
        %v3164 = vadd.f32 %v3162, %v3163
        %v3165 = vsel %vm546, %v2929, 0.0
        %v3166 = vadd.f32 %v3164, %v3165
        %v3167 = vsel %vm546, %v2930, 0.0
        %v3168 = vadd.f32 %v3166, %v3167
        %v3169 = vsel %vm546, %v2931, 0.0
        %v3170 = vadd.f32 %v3168, %v3169
        %v3171 = vsel %vm546, %v2932, 0.0
        %v3172 = vadd.f32 %v3170, %v3171
        %v3173 = vsel %vm546, %v2933, 0.0
        %v3174 = vadd.f32 %v3172, %v3173
        %v3175 = vsel %vm546, %v2934, 0.0
        %v3176 = vadd.f32 %v3174, %v3175
        %v3177 = vsel %vm546, %v2935, 0.0
        %v3178 = vadd.f32 %v3176, %v3177
        %v3179 = vsel %vm546, %v2936, 0.0
        %v3180 = vadd.f32 %v3178, %v3179
        %v3181 = vsel %vm546, %v2937, 0.0
        %v3182 = vadd.f32 %v3180, %v3181
        %v3183 = vsel %vm546, %v2938, 0.0
        %v3184 = vadd.f32 %v3182, %v3183
        %v3185 = vsel %vm546, %v2939, 0.0
        %v3186 = vadd.f32 %v3184, %v3185
        %v3187 = vsel %vm546, %v2940, 0.0
        %v3188 = vadd.f32 %v3186, %v3187
        %v3189 = vrot.slane %v3188, 4
        %v3190 = vadd.f32 %v3188, %v3189
        %v3191 = vrot.slane %v3190, 2
        %v3192 = vadd.f32 %v3190, %v3191
        %v3193 = vrot.slane %v3192, 1
        %v3194 = vadd.f32 %v3192, %v3193
        %v3195 = vsel %vm546, %v2941, 0.0
        %v3196 = vsel %vm546, %v2942, 0.0
        %v3197 = vadd.f32 %v3195, %v3196
        %v3198 = vsel %vm546, %v2943, 0.0
        %v3199 = vadd.f32 %v3197, %v3198
        %v3200 = vsel %vm546, %v2944, 0.0
        %v3201 = vadd.f32 %v3199, %v3200
        %v3202 = vsel %vm546, %v2945, 0.0
        %v3203 = vadd.f32 %v3201, %v3202
        %v3204 = vsel %vm546, %v2946, 0.0
        %v3205 = vadd.f32 %v3203, %v3204
        %v3206 = vsel %vm546, %v2947, 0.0
        %v3207 = vadd.f32 %v3205, %v3206
        %v3208 = vsel %vm546, %v2948, 0.0
        %v3209 = vadd.f32 %v3207, %v3208
        %v3210 = vsel %vm546, %v2949, 0.0
        %v3211 = vadd.f32 %v3209, %v3210
        %v3212 = vsel %vm546, %v2950, 0.0
        %v3213 = vadd.f32 %v3211, %v3212
        %v3214 = vsel %vm546, %v2951, 0.0
        %v3215 = vadd.f32 %v3213, %v3214
        %v3216 = vsel %vm546, %v2952, 0.0
        %v3217 = vadd.f32 %v3215, %v3216
        %v3218 = vsel %vm546, %v2953, 0.0
        %v3219 = vadd.f32 %v3217, %v3218
        %v3220 = vsel %vm546, %v2954, 0.0
        %v3221 = vadd.f32 %v3219, %v3220
        %v3222 = vsel %vm546, %v2955, 0.0
        %v3223 = vadd.f32 %v3221, %v3222
        %v3224 = vsel %vm546, %v2956, 0.0
        %v3225 = vadd.f32 %v3223, %v3224
        %v3226 = vrot.slane %v3225, 4
        %v3227 = vadd.f32 %v3225, %v3226
        %v3228 = vrot.slane %v3227, 2
        %v3229 = vadd.f32 %v3227, %v3228
        %v3230 = vrot.slane %v3229, 1
        %v3231 = vadd.f32 %v3229, %v3230
        %v3232 = vsel %vm546, %v2957, 0.0
        %v3233 = vsel %vm546, %v2958, 0.0
        %v3234 = vadd.f32 %v3232, %v3233
        %v3235 = vsel %vm546, %v2959, 0.0
        %v3236 = vadd.f32 %v3234, %v3235
        %v3237 = vsel %vm546, %v2960, 0.0
        %v3238 = vadd.f32 %v3236, %v3237
        %v3239 = vsel %vm546, %v2961, 0.0
        %v3240 = vadd.f32 %v3238, %v3239
        %v3241 = vsel %vm546, %v2962, 0.0
        %v3242 = vadd.f32 %v3240, %v3241
        %v3243 = vsel %vm546, %v2963, 0.0
        %v3244 = vadd.f32 %v3242, %v3243
        %v3245 = vsel %vm546, %v2964, 0.0
        %v3246 = vadd.f32 %v3244, %v3245
        %v3247 = vsel %vm546, %v2965, 0.0
        %v3248 = vadd.f32 %v3246, %v3247
        %v3249 = vsel %vm546, %v2966, 0.0
        %v3250 = vadd.f32 %v3248, %v3249
        %v3251 = vsel %vm546, %v2967, 0.0
        %v3252 = vadd.f32 %v3250, %v3251
        %v3253 = vsel %vm546, %v2968, 0.0
        %v3254 = vadd.f32 %v3252, %v3253
        %v3255 = vsel %vm546, %v2969, 0.0
        %v3256 = vadd.f32 %v3254, %v3255
        %v3257 = vsel %vm546, %v2970, 0.0
        %v3258 = vadd.f32 %v3256, %v3257
        %v3259 = vsel %vm546, %v2971, 0.0
        %v3260 = vadd.f32 %v3258, %v3259
        %v3261 = vsel %vm546, %v2972, 0.0
        %v3262 = vadd.f32 %v3260, %v3261
        %v3263 = vrot.slane %v3262, 4
        %v3264 = vadd.f32 %v3262, %v3263
        %v3265 = vrot.slane %v3264, 2
        %v3266 = vadd.f32 %v3264, %v3265
        %v3267 = vrot.slane %v3266, 1
        %v3268 = vadd.f32 %v3266, %v3267
        %v3269 = vld [vmem:[%s10] sm:$0x1]
        %v3270 = vld [vmem:[%s522] sm:$0xff]
        %v3271 = vld [vmem:[%s7] sm:$0xff]
        %v3272 = vld [vmem:[%s7 + $0x8] sm:$0xff]
        %v3273 = vld [vmem:[%s7 + $0x10] sm:$0xff]
        %v3274 = vld [vmem:[%s7 + $0x18] sm:$0xff]
        %v3276 = vsel %vm546, %v3270, 0
        %3278 = vmatpush.msra.mxu0 0.0
        %3279 = vmatpush.msra.mxu0 0.0
        %3280 = vmatpush.msra.mxu0 0.0
        %3281 = vmatpush.msra.mxu0 0.0
        %3282 = vmatpush.msra.mxu0 0.0
        %3283 = vmatpush.msra.mxu0 0.0
        %3284 = vmatpush.msra.mxu0 0.0
        %3285 = vmatpush.msra.mxu0 0.0
        %3286 = vmatpush.msra.mxu0 0.0
        %3287 = vmatpush.msra.mxu0 0.0
        %3288 = vmatpush.msra.mxu0 0.0
        %3289 = vmatpush.msra.mxu0 0.0
        %3290 = vmatpush.msra.mxu0 %v3274
        %3291 = vmatpush.msra.mxu0 %v3273
        %3292 = vmatpush.msra.mxu0 %v3272
        %3293 = vmatpush.msra.mxu0 %v3271
        %3294 = vmatmul.f32.gmra.mxu0 %v3276
        %v3295 = vpop.f32.mrf.mxu0
        %v3296 = vadd.f32 0.0, %v3295
        %3297 = vdwg.mxu0
        %v3299 = vperm.slane %v3269, 0
        %v3301 = vadd.f32 %v3299, %v3296
        %v3302 = vld [vmem:[%s8] sm:$0xff]
        %v3303 = vld [vmem:[%s8 + $0x8] sm:$0xff]
        %v3304 = vld [vmem:[%s8 + $0x10] sm:$0xff]
        %v3305 = vld [vmem:[%s8 + $0x18] sm:$0xff]
        %v3314 = vsel %vm1903, %v3046, %v3009
        %v3315 = vsel %vm1905, %v3083, %v3314
        %v3316 = vsel %vm1907, %v3120, %v3315
        %v3317 = vsel %vm1909, %v3157, %v3316
        %v3318 = vsel %vm1911, %v3194, %v3317
        %v3319 = vsel %vm1913, %v3231, %v3318
        %v3320 = vsel %vm1915, %v3268, %v3319
        %v3321 = vsel %vm546, %v3320, 0
        %3323 = vmatpush.msra.mxu0 0.0
        %3324 = vmatpush.msra.mxu0 0.0
        %3325 = vmatpush.msra.mxu0 0.0
        %3326 = vmatpush.msra.mxu0 0.0
        %3327 = vmatpush.msra.mxu0 0.0
        %3328 = vmatpush.msra.mxu0 0.0
        %3329 = vmatpush.msra.mxu0 0.0
        %3330 = vmatpush.msra.mxu0 0.0
        %3331 = vmatpush.msra.mxu0 0.0
        %3332 = vmatpush.msra.mxu0 0.0
        %3333 = vmatpush.msra.mxu0 0.0
        %3334 = vmatpush.msra.mxu0 0.0
        %3335 = vmatpush.msra.mxu0 %v3305
        %3336 = vmatpush.msra.mxu0 %v3304
        %3337 = vmatpush.msra.mxu0 %v3303
        %3338 = vmatpush.msra.mxu0 %v3302
        %3339 = vmatmul.f32.gmra.mxu0 %v3321
        %v3340 = vpop.f32.mrf.mxu0
        %v3341 = vadd.f32 0.0, %v3340
        %3342 = vdwg.mxu0
        %v3343 = vadd.f32 %v3301, %v3341
        %v3344 = vld [vmem:[%s9] sm:$0xff]
        %v3345 = vld [vmem:[%s9 + $0x8] sm:$0xff]
        %v3346 = vld [vmem:[%s9 + $0x10] sm:$0xff]
        %v3347 = vld [vmem:[%s9 + $0x18] sm:$0xff]
        %3348 = vmatpush.msra.mxu0 0.0
        %3349 = vmatpush.msra.mxu0 0.0
        %3350 = vmatpush.msra.mxu0 0.0
        %3351 = vmatpush.msra.mxu0 0.0
        %3352 = vmatpush.msra.mxu0 0.0
        %3353 = vmatpush.msra.mxu0 0.0
        %3354 = vmatpush.msra.mxu0 0.0
        %3355 = vmatpush.msra.mxu0 0.0
        %3356 = vmatpush.msra.mxu0 0.0
        %3357 = vmatpush.msra.mxu0 0.0
        %3358 = vmatpush.msra.mxu0 0.0
        %3359 = vmatpush.msra.mxu0 0.0
        %3360 = vmatpush.msra.mxu0 %v3347
        %3361 = vmatpush.msra.mxu0 %v3346
        %3362 = vmatpush.msra.mxu0 %v3345
        %3363 = vmatpush.msra.mxu0 %v3344
        %3364 = vmatmul.f32.gmra.mxu0 %v548
        %v3365 = vpop.f32.mrf.mxu0
        %v3366 = vadd.f32 0.0, %v3365
        %3367 = vdwg.mxu0
        %v3368 = vadd.f32 %v3343, %v3366
        %v3369 = vxor.u32 %v3368, 2147483648
        %v3370 = vmul.f32 %v3369, 1.442695
        %v3371 = vpow.pop %v3370
        %v3372 = vadd.f32 %v3371, 1.0
        %v3373 = vrcp.pop %v3372
        %v3374 = vmul.f32 %v3372, %v3373
        %v3375 = vsub.f32 1.0, %v3374
        %v3376 = vmul.f32 %v3373, %v3375
        %v3377 = vadd.f32 %v3373, %v3376
        %vm3378 = vweird.f32 %v3372
        %vm3379 = vweird.f32 %v3373
        %vm3380 = vmor %vm3378, %vm3379
        %v3381 = vsel %vm3380, %v3373, %v3377
        %v3382 = vand.u32 2147483647, %v3372
        %vm3383 = vcmp.eq.f32.partialorder %v3382, 8.507059e+37
        %v3384 = vand.u32 %v3372, 2147483648
        %v3385 = vor.u32 1.1754944e-38, %v3384
        %v3386 = vsel %vm3383, %v3385, %v3381
        %v3387 = vmul.f32 1.0, %v3386
        %v3388 = vtanh.pop %v3368
        %3390 = vrot.lane.b32.xlu0 %v541, 32
        %v3391 = vpop.permute.xlu0 %3390
        %v3393 = vmul.f32 %v3387, %v3391
        %3395 = vrot.lane.b32.xlu0 %v3388, 64
        %v3396 = vpop.permute.xlu0 %3395
        %v3398 = vmul.f32 %v3387, %v3396
        %3400 = vrot.lane.b32.xlu0 %v3398, 32
        %v3401 = vpop.permute.xlu0 %3400
        %v3403 = vadd.f32 %v3393, %v3401
        %v3404 = vtanh.pop %v3403
        %3406 = vrot.lane.b32.xlu0 %v3404, 64
        %v3407 = vpop.permute.xlu0 %3406
        %v3409 = vmul.f32 %v3387, %v3407
        %3411 = vrot.lane.b32.xlu0 %v3409, 32
        %v3412 = vpop.permute.xlu0 %3411
        %3414 = vst.msk [vmem:[#allocation2] sm:$0xff] %vm546, %v3412
        %3416 = vrot.lane.b32.xlu0 %v3403, 96
        %v3417 = vpop.permute.xlu0 %3416
        %3419 = vst.msk [vmem:[#allocation3] sm:$0xff] %vm546, %v3417
        %3420 = vst.msk [vmem:[%s494] sm:$0xff] %vm546, %v3412
        %3421 = vst [vmem:[%s501] sm:$0xff] %v1940
        %s3422 = sand.u32 %s310, 1
        %s3423 = scalar_lea.sflag [#allocation5], %s3422
        %s3424 = sand.u32 %s310, 1
        %s3425 = smul.addr %s3424, 8
        %s3426 = scalar_lea.vmem [#allocation4], %s3425
        %s3427 = sand.u32 %s338, 1
        %s3428 = scalar_lea.sflag [#allocation7], %s3427
        %s3429 = sand.u32 %s338, 1
        %s3430 = smul.addr %s3429, 8
        %s3431 = scalar_lea.vmem [#allocation6], %s3430
        // Predicated region
        $region69: #{tpu_custom_call.1} parent=63 // pred_check
          %p3432 = pneg %p320
        $region70: #{tpu_custom_call.1} parent=63 // pred_check_branch
          %3434 = sbr.rel (%p3432) target = $region72
        $region71: #{tpu_custom_call.1} parent=63 // pred_region
          %3436 = vsyncadd %s3423, 0
          %s3437 = sadd.s32 %s34, %s35
          %s3438 = smul.addr %s3437, 8
          %s3439 = scalar_lea.hbm %s11, %s3438
          %s3441 = sshll.u32 %s3426, 4
          %s3442 = int_to_ptr.vmem [resolvable:$true] %s3441
          %s3443 = sshll.u32 %s3439, 4
          %s3444 = int_to_ptr.hbm [resolvable:$true] %s3443
          %3446 = dma.vmem_to_hbm [thread:$0]  %s3442, 128, %s3444, %s3423
        $region72: #{tpu_custom_call.1} parent=63 // pred_fallthru
          _
        // Predicated region
        $region73: #{tpu_custom_call.1} parent=63 // pred_check
          %p3447 = pneg %p348
        $region74: #{tpu_custom_call.1} parent=63 // pred_check_branch
          %3449 = sbr.rel (%p3447) target = $region76
        $region75: #{tpu_custom_call.1} parent=63 // pred_region
          %3451 = vsyncadd %s3428, 0
          %s3452 = sadd.s32 %s34, %s35
          %s3453 = smul.addr %s3452, 8
          %s3454 = scalar_lea.hbm %s12, %s3453
          %s3456 = sshll.u32 %s3431, 4
          %s3457 = int_to_ptr.vmem [resolvable:$true] %s3456
          %s3458 = sshll.u32 %s3454, 4
          %s3459 = int_to_ptr.hbm [resolvable:$true] %s3458
          %3461 = dma.vmem_to_hbm [thread:$0]  %s3457, 128, %s3459, %s3428
        $region76: #{tpu_custom_call.1} parent=63 // pred_fallthru
          _
      $region64: #{tpu_custom_call.1} parent=5 // pred_fallthru
        _
      %p3462 = scmp.le.s32.totalorder 2, %s25
      // Predicated region
      $region77: #{tpu_custom_call.1} parent=5 // pred_check
        %p3463 = pneg %p3462
      $region78: #{tpu_custom_call.1} parent=5 // pred_check_branch
        %3465 = sbr.rel (%p3463) target = $region80
      $region79: #{tpu_custom_call.1} parent=5 // pred_region
        %s3466 = ssub.s32 %s25, 2
        // Predicated region
        $region81: #{tpu_custom_call.1} parent=79 // pred_check
          %p3467 = pneg %p326
        $region82: #{tpu_custom_call.1} parent=79 // pred_check_branch
          %3469 = sbr.rel (%p3467) target = $region84
        $region83: #{tpu_custom_call.1} parent=79 // pred_region
          %s3470 = sand.u32 %s311, 1
          %s3471 = scalar_lea.sflag [#allocation5], %s3470
          %s3472 = sand.u32 %s311, 1
          %s3473 = smul.addr %s3472, 8
          %s3474 = scalar_lea.vmem [#allocation4], %s3473
          %3476 = dma.done %s3471, 128
        $region84: #{tpu_custom_call.1} parent=79 // pred_fallthru
          _
        // Predicated region
        $region85: #{tpu_custom_call.1} parent=79 // pred_check
          %p3477 = pneg %p354
        $region86: #{tpu_custom_call.1} parent=79 // pred_check_branch
          %3479 = sbr.rel (%p3477) target = $region88
        $region87: #{tpu_custom_call.1} parent=79 // pred_region
          %s3480 = sand.u32 %s339, 1
          %s3481 = scalar_lea.sflag [#allocation7], %s3480
          %s3482 = sand.u32 %s339, 1
          %s3483 = smul.addr %s3482, 8
          %s3484 = scalar_lea.vmem [#allocation6], %s3483
          %3486 = dma.done %s3481, 128
        $region88: #{tpu_custom_call.1} parent=79 // pred_fallthru
          _
      $region80: #{tpu_custom_call.1} parent=5 // pred_fallthru
        _
    $region6: #{tpu_custom_call.1} parent=1 // loop_footer
      %s29 = sadd.s32 1, %s25
    $region7: #{tpu_custom_call.1} parent=1 // loop_footer_branch
      %24 = sbr.rel target = $region3
    $region8: #{tpu_custom_call.1} parent=1 // loop_exit
      _
    %3487 = vsyncpa [#allocation5], 1
    %s3488 = scalar_lea.sflag [#allocation5], 1
    %3489 = vsyncpa %s3488, 1
    %3490 = vsyncpa [#allocation7], 1
    %s3491 = scalar_lea.sflag [#allocation7], 1
    %3492 = vsyncpa %s3491, 1

</llo_original>
